<compile_context>
chip_gen: v5e
topology: v5e:2x2
jax: 0.10.0
libtpu: 0.0.40
codegen_flags: <defaults>
</compile_context>

<pallas_src>
import jax
import jax.numpy as jnp
from jax.experimental import pallas as pl
from jax.experimental.pallas import tpu as pltpu


# --------------------------------------------------------------------------- #
# Kernels
# --------------------------------------------------------------------------- #

def _ffn_resident_kernel(x_ref, w1_ref, b1_ref, w2_ref, b2_ref, o_ref):
    # x_ref: (tm, C) x.dtype; w1_ref: (C, H) bf16 (VMEM-resident);
    # b1_ref: (1, H) f32; w2_ref: (H, C) bf16 (resident); b2_ref: (1, C) f32.
    x = x_ref[...].astype(w1_ref.dtype)                     # in-kernel cast
    h = jnp.dot(x, w1_ref[...], preferred_element_type=jnp.float32)
    h = jnp.maximum(h + b1_ref[...], 0.0)                   # bias + ReLU in f32
    y = jnp.dot(h.astype(w2_ref.dtype), w2_ref[...],
                preferred_element_type=jnp.float32)
    # Dropout(p=0.2) == identity at inference time.
    o_ref[...] = (y + b2_ref[...]).astype(o_ref.dtype)


def _ffn_htiled_kernel(x_ref, w1_ref, b1_ref, w2_ref, b2_ref, o_ref, acc_ref):
    # Fallback for large C: H is tiled along grid axis 1 ("arbitrary"),
    # acc_ref (tm, C) f32 is resident across it.
    k = pl.program_id(1)

    @pl.when(k == 0)
    def _():
        acc_ref[...] = jnp.zeros_like(acc_ref)

    x = x_ref[...].astype(w1_ref.dtype)                     # in-kernel cast
    h = jnp.dot(x, w1_ref[...], preferred_element_type=jnp.float32)
    h = jnp.maximum(h + b1_ref[...], 0.0)
    acc_ref[...] += jnp.dot(h.astype(w2_ref.dtype), w2_ref[...],
                            preferred_element_type=jnp.float32)

    @pl.when(k == pl.num_programs(1) - 1)
    def _():
        # Dropout(p=0.2) == identity at inference time.
        o_ref[...] = (acc_ref[...] + b2_ref[...]).astype(o_ref.dtype)


# --------------------------------------------------------------------------- #
# Sizing helpers
# --------------------------------------------------------------------------- #

def _round_up(x, m):
    return ((x + m - 1) // m) * m


def _vmem_budget_bytes():
    """Generation-aware usable-VMEM budget (leave headroom for the pipeline)."""
    cap = 64 * 1024 * 1024
    try:
        info = pltpu.get_tpu_info()
        cap = int(getattr(info, "vmem_capacity_bytes", cap))
    except Exception:
        pass
    # ~62.5% of physical: 40 MiB on a 64 MiB chip (v7x), 80 MiB on 128 MiB chips.
    return min(cap * 5 // 8, 96 * 1024 * 1024)


def _pick_h_tile(H, target):
    """Largest divisor of H that is a multiple of 128 and <= target; else H."""
    best = None
    d = 128
    cap = min(target, H)
    while d <= cap:
        if H % d == 0:
            best = d
        d += 128
    return best if best is not None else H


# --------------------------------------------------------------------------- #
# Wrapper
# --------------------------------------------------------------------------- #

def feed_forward(x, w1, b1, w2, b2, *, tm=None, th=None,
                 compute_dtype=jnp.bfloat16, out_dtype=None,
                 weights_resident=None):
    """x: (B, T, C); w1: (C, 4C); b1: (1, 4C); w2: (4C, C); b2: (1, C).

    Weights may (and should) be pre-cast to `compute_dtype` by the caller; the
    astype below is then a no-op. Matmuls run in `compute_dtype` with f32
    accumulation. Returns (B, T, C) in `out_dtype` (default x.dtype).
    """
    B, T, C = x.shape
    H = w1.shape[1]
    M = B * T
    out_dtype = out_dtype or x.dtype
    budget = _vmem_budget_bytes()
    big_vmem = budget >= 64 * 1024 * 1024          # 128 MiB-class chip

    x_item = jnp.dtype(x.dtype).itemsize
    o_item = jnp.dtype(out_dtype).itemsize
    w_item = jnp.dtype(compute_dtype).itemsize

    # ---- row tile ----------------------------------------------------------
    if tm is None:
        tm = 512 if big_vmem else 256
    tm = max(8, min(tm, _round_up(M, 8)))
    if M > 8:
        # Guarantee >= 2 row tiles so both TensorCores get work on v7x.
        tm = min(tm, max(8, _round_up(-(-M // 2), 8)))
    n_row_tiles = pl.cdiv(M, tm)

    # ---- resident-weights feasibility --------------------------------------
    w_bytes = 2 * C * H * w_item                   # W1 + W2 in compute_dtype
    resident_vmem = (2 * w_bytes                   # (conservative: double-buffered)
                     + 2 * tm * C * x_item         # x tiles
                     + 2 * tm * C * o_item         # out tiles
                     + tm * H * 6                  # f32 h + bf16 cast temp
                     + 2 * (H + C) * 4)            # biases
    if weights_resident is None:
        weights_resident = resident_vmem <= budget

    # ---- operands (weights cast once here if caller didn't pre-cast) -------
    x2d = x.reshape(M, C)                          # no wrapper-side dtype cast of x
    w1c = w1.astype(compute_dtype)
    w2c = w2.astype(compute_dtype)
    b1f = b1.reshape(1, H).astype(jnp.float32)
    b2f = b2.reshape(1, C).astype(jnp.float32)

    compiler_kwargs = dict(vmem_limit_bytes=int(budget))
    flops = 4 * M * C * H                          # two matmuls: 2*M*C*H each

    if weights_resident:
        cost = pl.CostEstimate(
            flops=flops, transcendentals=0,
            bytes_accessed=(M * C * x_item + w_bytes + (H + C) * 4
                            + M * C * o_item))
        out2d = pl.pallas_call(
            _ffn_resident_kernel,
            out_shape=jax.ShapeDtypeStruct((M, C), out_dtype),
            grid_spec=pltpu.PrefetchScalarGridSpec(
                num_scalar_prefetch=0,
                grid=(n_row_tiles,),
                in_specs=[
                    pl.BlockSpec((tm, C), lambda i: (i, 0)),   # x row tile
                    pl.BlockSpec((C, H), lambda i: (0, 0)),    # W1 resident
                    pl.BlockSpec((1, H), lambda i: (0, 0)),    # b1 resident
                    pl.BlockSpec((H, C), lambda i: (0, 0)),    # W2 resident
                    pl.BlockSpec((1, C), lambda i: (0, 0)),    # b2 resident
                ],
                out_specs=pl.BlockSpec((tm, C), lambda i: (i, 0)),
            ),
            compiler_params=pltpu.CompilerParams(
                dimension_semantics=("parallel",), **compiler_kwargs),
            cost_estimate=cost,
        )(x2d, w1c, b1f, w2c, b2f)
    else:
        if th is None:
            th = 512 if big_vmem else 256
        th = _pick_h_tile(H, max(128, min(th, H)))
        cost = pl.CostEstimate(
            flops=flops, transcendentals=0,
            bytes_accessed=(M * C * x_item
                            + n_row_tiles * w_bytes       # weights re-streamed per row tile
                            + (H + C) * 4
                            + M * C * o_item))
        out2d = pl.pallas_call(
            _ffn_htiled_kernel,
            out_shape=jax.ShapeDtypeStruct((M, C), out_dtype),
            grid_spec=pltpu.PrefetchScalarGridSpec(
                num_scalar_prefetch=0,
                grid=(n_row_tiles, H // th),
                in_specs=[
                    pl.BlockSpec((tm, C), lambda i, k: (i, 0)),   # x row tile
                    pl.BlockSpec((C, th), lambda i, k: (0, k)),   # W1 column chunk
                    pl.BlockSpec((1, th), lambda i, k: (0, k)),   # b1 chunk
                    pl.BlockSpec((th, C), lambda i, k: (k, 0)),   # W2 row chunk
                    pl.BlockSpec((1, C), lambda i, k: (0, 0)),    # b2
                ],
                out_specs=pl.BlockSpec((tm, C), lambda i, k: (i, 0)),
                scratch_shapes=[pltpu.VMEM((tm, C), jnp.float32)],
            ),
            compiler_params=pltpu.CompilerParams(
                dimension_semantics=("parallel", "arbitrary"), **compiler_kwargs),
            cost_estimate=cost,
        )(x2d, w1c, b1f, w2c, b2f)

    return out2d.reshape(B, T, C)


# --------------------------------------------------------------------------- #
# Init + reference + test
# --------------------------------------------------------------------------- #

def init_params(key, n_embed):
    """Deterministic init mimicking torch.nn.Linear (uniform +/- 1/sqrt(fan_in))."""
    hidden = 4 * n_embed
    k1, k2, k3, k4 = jax.random.split(key, 4)
    bound1 = 1.0 / (n_embed ** 0.5)
    bound2 = 1.0 / (hidden ** 0.5)
    w1 = jax.random.uniform(k1, (n_embed, hidden), jnp.float32, -bound1, bound1)
    b1 = jax.random.uniform(k2, (1, hidden), jnp.float32, -bound1, bound1)
    w2 = jax.random.uniform(k3, (hidden, n_embed), jnp.float32, -bound2, bound2)
    b2 = jax.random.uniform(k4, (1, n_embed), jnp.float32, -bound2, bound2)
    return w1, b1, w2, b2


def _ref_ffn(x, w1, b1, w2, b2):
    """Plain-JAX reference with the same bf16-matmul / f32-accumulate numerics."""
    x2 = x.reshape(-1, x.shape[-1]).astype(jnp.bfloat16)
    h = jnp.dot(x2, w1.astype(jnp.bfloat16), preferred_element_type=jnp.float32)
    h = jnp.maximum(h + b1.astype(jnp.float32), 0.0)
    y = jnp.dot(h.astype(jnp.bfloat16), w2.astype(jnp.bfloat16),
                preferred_element_type=jnp.float32) + b2.astype(jnp.float32)
    return y.reshape(x.shape).astype(x.dtype)


if __name__ == "__main__":
    # Module spec uses n_embed = 384; small batch/seq.
    B, T, n_embed = 2, 8, 384
    key = jax.random.PRNGKey(0)
    kx, kp = jax.random.split(key)
    x = jax.random.normal(kx, (B, T, n_embed), jnp.float32)
    w1, b1, w2, b2 = init_params(kp, n_embed)

    # Pre-cast / cache the weights in bf16 once (wrapper astype becomes a no-op).
    w1_bf16 = w1.astype(jnp.bfloat16)
    w2_bf16 = w2.astype(jnp.bfloat16)

    # 1) Primary path: weights VMEM-resident, single parallel row axis.
    out = feed_forward(x, w1_bf16, b1, w2_bf16, b2)
    out = jax.block_until_ready(out)
    assert out.shape == (B, T, n_embed)
    ref = _ref_ffn(x, w1, b1, w2, b2)
    assert jnp.allclose(out, ref, atol=1e-2, rtol=1e-2), \
        float(jnp.max(jnp.abs(out - ref)))

    # 2) Fallback H-tiled path: forced (as if weights didn't fit VMEM), with
    #    partial row tiles (M = 40) and a multi-step H reduction (th=128 -> 12 steps).
    x2 = jax.random.normal(jax.random.PRNGKey(1), (2, 20, n_embed), jnp.float32)
    out2 = jax.block_until_ready(
        feed_forward(x2, w1_bf16, b1, w2_bf16, b2,
                     tm=16, th=128, weights_resident=False))
    ref2 = _ref_ffn(x2, w1, b1, w2, b2)
    assert jnp.allclose(out2, ref2, atol=1e-2, rtol=1e-2), \
        float(jnp.max(jnp.abs(out2 - ref2)))

    print("KERNEL_OK")
</pallas_src>

<mosaic_0001>
module attributes {stable_mosaic.version = 11 : i64} {
  func.func @_ffn_resident_kernel(%arg0: i32, %arg1: memref<8x384xf32, #tpu.memory_space<vmem>>, %arg2: memref<384x1536xbf16, #tpu.memory_space<vmem>>, %arg3: memref<1x1536xf32, #tpu.memory_space<vmem>>, %arg4: memref<1536x384xbf16, #tpu.memory_space<vmem>>, %arg5: memref<1x384xf32, #tpu.memory_space<vmem>>, %arg6: memref<8x384xf32, #tpu.memory_space<vmem>>) attributes {dimension_semantics = [#tpu.dimension_semantics<parallel>], iteration_bounds = array<i64: 2>, scalar_prefetch = 0 : i64, scratch_operands = 0 : i64, tpu.core_type = #tpu.core_type<tc>, window_params = [{transform_indices = @transform_0, window_bounds = array<i64: 8, 384>}, {pipeline_mode = #tpu.pipeline_mode<synchronous>, transform_indices = @transform_1, window_bounds = array<i64: 384, 1536>}, {pipeline_mode = #tpu.pipeline_mode<synchronous>, transform_indices = @transform_2, window_bounds = array<i64: 1, 1536>}, {pipeline_mode = #tpu.pipeline_mode<synchronous>, transform_indices = @transform_3, window_bounds = array<i64: 1536, 384>}, {pipeline_mode = #tpu.pipeline_mode<synchronous>, transform_indices = @transform_4, window_bounds = array<i64: 1, 384>}, {transform_indices = @transform_5, window_bounds = array<i64: 8, 384>}]} {
    %c0 = arith.constant 0 : index
    %c0_0 = arith.constant 0 : index
    %0 = vector.load %arg1[%c0, %c0_0] : memref<8x384xf32, #tpu.memory_space<vmem>>, vector<8x384xf32>
    %1 = arith.truncf %0 : vector<8x384xf32> to vector<8x384xbf16>
    %c0_1 = arith.constant 0 : index
    %c0_2 = arith.constant 0 : index
    %2 = vector.load %arg2[%c0_1, %c0_2] : memref<384x1536xbf16, #tpu.memory_space<vmem>>, vector<384x1536xbf16>
    %cst = arith.constant dense<0.000000e+00> : vector<8x1536xf32>
    %3 = tpu.matmul %1, %2, %cst {dimension_numbers = #tpu.dot_dimension_numbers<[1], [0], [0], [1], [0, 0, 1, 1], [], []>} : vector<8x384xbf16>, vector<384x1536xbf16>, vector<8x1536xf32> -> vector<8x1536xf32>
    %c0_3 = arith.constant 0 : index
    %c0_4 = arith.constant 0 : index
    %4 = vector.load %arg3[%c0_3, %c0_4] : memref<1x1536xf32, #tpu.memory_space<vmem>>, vector<1x1536xf32>
    %5 = vector.broadcast %4 : vector<1x1536xf32> to vector<8x1536xf32>
    %6 = arith.addf %3, %5 : vector<8x1536xf32>
    %cst_5 = arith.constant 0.000000e+00 : f32
    %7 = vector.broadcast %cst_5 : f32 to vector<8x1536xf32>
    %8 = arith.maximumf %6, %7 : vector<8x1536xf32>
    %9 = arith.truncf %8 : vector<8x1536xf32> to vector<8x1536xbf16>
    %c0_6 = arith.constant 0 : index
    %c0_7 = arith.constant 0 : index
    %10 = vector.load %arg4[%c0_6, %c0_7] : memref<1536x384xbf16, #tpu.memory_space<vmem>>, vector<1536x384xbf16>
    %cst_8 = arith.constant dense<0.000000e+00> : vector<8x384xf32>
    %11 = tpu.matmul %9, %10, %cst_8 {dimension_numbers = #tpu.dot_dimension_numbers<[1], [0], [0], [1], [0, 0, 1, 1], [], []>} : vector<8x1536xbf16>, vector<1536x384xbf16>, vector<8x384xf32> -> vector<8x384xf32>
    %c0_9 = arith.constant 0 : index
    %c0_10 = arith.constant 0 : index
    %12 = vector.load %arg5[%c0_9, %c0_10] : memref<1x384xf32, #tpu.memory_space<vmem>>, vector<1x384xf32>
    %13 = vector.broadcast %12 : vector<1x384xf32> to vector<8x384xf32>
    %14 = arith.addf %11, %13 : vector<8x384xf32>
    %c0_11 = arith.constant 0 : index
    %c0_12 = arith.constant 0 : index
    %15 = vector.load %arg6[%c0_11, %c0_12] : memref<8x384xf32, #tpu.memory_space<vmem>>, vector<8x384xf32>
    tpu.vector_store %arg6[%c0_11, %c0_12], %14 {strides = array<i32>} : memref<8x384xf32, #tpu.memory_space<vmem>>, vector<8x384xf32>,
    return
  }
  func.func @transform_0(%arg0: i32) -> (i32, i32) {
    %c0_i32 = arith.constant 0 : i32
    %c0_i32_0 = arith.constant 0 : i32
    return %arg0, %c0_i32 : i32, i32
  }
  func.func @transform_1(%arg0: i32) -> (i32, i32) {
    %c0_i32 = arith.constant 0 : i32
    %c0_i32_0 = arith.constant 0 : i32
    %c0_i32_1 = arith.constant 0 : i32
    return %c0_i32, %c0_i32_0 : i32, i32
  }
  func.func @transform_2(%arg0: i32) -> (i32, i32) {
    %c0_i32 = arith.constant 0 : i32
    %c0_i32_0 = arith.constant 0 : i32
    %c0_i32_1 = arith.constant 0 : i32
    return %c0_i32, %c0_i32_0 : i32, i32
  }
  func.func @transform_3(%arg0: i32) -> (i32, i32) {
    %c0_i32 = arith.constant 0 : i32
    %c0_i32_0 = arith.constant 0 : i32
    %c0_i32_1 = arith.constant 0 : i32
    return %c0_i32, %c0_i32_0 : i32, i32
  }
  func.func @transform_4(%arg0: i32) -> (i32, i32) {
    %c0_i32 = arith.constant 0 : i32
    %c0_i32_0 = arith.constant 0 : i32
    %c0_i32_1 = arith.constant 0 : i32
    return %c0_i32, %c0_i32_0 : i32, i32
  }
  func.func @transform_5(%arg0: i32) -> (i32, i32) {
    %c0_i32 = arith.constant 0 : i32
    %c0_i32_0 = arith.constant 0 : i32
    return %arg0, %c0_i32 : i32, i32
  }
}

</mosaic_0001>

<llo_original>
// kernel: tpu_custom_call.1
$region0: #{tpu_custom_call.1}
  #allocation0 [shape = 'u32[]', space=smem, size = 0x4, offset = 0x4, fixed_abs, tag = 'smem constant byte address 0x4 - core index']
  #allocation1 [shape = 'u32[72,128]{1,0:T(1,128)}', space=vmem, size = 0x9000, scoped, tag = 'internal scratch']
  %s0 = inlined_call_operand.hbm [shape: f32[16,384], index: 0, kind: input, shape index: {}]
  %s1 = inlined_call_operand.hbm [shape: bf16[384,1536], index: 1, kind: input, shape index: {}]
  %s2 = inlined_call_operand.hbm [shape: f32[1,1536], index: 2, kind: input, shape index: {}]
  %s3 = inlined_call_operand.hbm [shape: bf16[1536,384], index: 3, kind: input, shape index: {}]
  %s4 = inlined_call_operand.hbm [shape: f32[1,384], index: 4, kind: input, shape index: {}]
  %s5 = inlined_call_operand.hbm [shape: f32[16,384], index: 5, kind: output, shape index: {}]
  %s6 = sld [smem:[#allocation0]]
  $region73: #{tpu_custom_call.1} parent=0
    _
  %s8 = ssub.s32 1, %s6
  %s9 = scalar_select 0, %s8, %s6
  $region1: #{tpu_custom_call.1} parent=0
    #allocation2 [shape = 'u8[24576]{0}', space=vmem, size = 0x6000, scoped, tag = 'input window, operand 0']
    #allocation3 [shape = 's32[2]{0}', space=sflag, size = 0x8, scoped, tag = 'scoped memory for tpu_custom_call.1']
    #allocation4 [shape = 's32[2]{0}', space=sflag, size = 0x8, scoped, tag = 'scoped memory for tpu_custom_call.1']
    #allocation5 [shape = 'u8[1179648]{0}', space=vmem, size = 0x120000, scoped, tag = 'input window, operand 1, single buffered']
    #allocation6 [shape = 's32[1]{0}', space=sflag, size = 0x4, scoped, tag = 'scoped memory for tpu_custom_call.1']
    #allocation7 [shape = 'u8[6144]{0}', space=vmem, size = 0x1800, scoped, tag = 'input window, operand 2, single buffered']
    #allocation8 [shape = 'u8[1179648]{0}', space=vmem, size = 0x120000, scoped, tag = 'input window, operand 3, single buffered']
    #allocation9 [shape = 's32[1]{0}', space=sflag, size = 0x4, scoped, tag = 'scoped memory for tpu_custom_call.1']
    #allocation10 [shape = 'u8[1536]{0}', space=vmem, size = 0x800, scoped, tag = 'input window, operand 4, single buffered']
    #allocation11 [shape = 'u8[24576]{0}', space=vmem, size = 0x6000, scoped, tag = 'output window, operand 0']
    %10 = vsyncpa [#allocation3], 0
    %s11 = scalar_lea.sflag [#allocation3], 1
    %12 = vsyncpa %s11, 0
    %13 = vsyncpa [#allocation6], 0
    %14 = vsyncpa [#allocation9], 0
    %15 = vsyncpa [#allocation4], 0
    %s16 = scalar_lea.sflag [#allocation4], 1
    %17 = vsyncpa %s16, 0
    loop: start=0, step=1, limit=4
    $region2: #{tpu_custom_call.1} parent=1 // loop_pre_header
      _
    $region3: #{tpu_custom_call.1} parent=1 // loop_header
      %s19 = sphi 0, %s23
      %p20 = scmp.ge.s32.totalorder %s19, 4
      %s29 = sphi 0, %s31
      %s32 = sphi 0, %s29
      %s33 = sphi 0, %s32
      %s49 = sphi 0, %s33
      %s53 = sphi 0, %s53
      %s55 = sphi 0, %s53
      %s56 = sphi 0, %s55
      %s70 = sphi 0, %s56
      %s74 = sphi 0, %s74
      %s76 = sphi 0, %s74
      %s77 = sphi 0, %s76
      %s91 = sphi 0, %s77
      %s95 = sphi 0, %s95
      %s97 = sphi 0, %s95
      %s98 = sphi 0, %s97
      %s112 = sphi 0, %s98
      %s116 = sphi 0, %s116
      %s118 = sphi 0, %s116
      %s119 = sphi 0, %s118
      %s133 = sphi 0, %s119
      %s139 = sphi 0, %s141
      %s142 = sphi 0, %s139
      %s143 = sphi 0, %s142
      %s159 = sphi 0, %s143
    $region4: #{tpu_custom_call.1} parent=1 // loop_header_branch
      %22 = sbr.rel (%p20) target = $region8
    $region5: #{tpu_custom_call.1} parent=1 // loop_body
      %s24 = ssub.s32 %s19, 1
      %s25 = ssub.s32 %s19, 2
      %s26 = sadd.s32 %s19, 1
      %s27 = ssub.s32 %s19, %s26
      %p28 = scmp.eq.s32.totalorder %s27, 0
      %s30 = sadd.s32 %s29, 1
      %s31 = scalar_select %p28, %s29, %s30
      %p34 = pneg %p28
      %p35 = scmp.eq.s32.totalorder %s19, 1
      %p36 = por %p34, %p35
      %p37 = scmp.ne.s32.totalorder %s29, %s32
      %p38 = scmp.eq.s32.totalorder %s19, 0
      %p39 = por %p37, %p38
      %p40 = scmp.ne.s32.totalorder %s29, %s32
      %p41 = scmp.eq.s32.totalorder %s24, 1
      %p42 = por %p40, %p41
      %p43 = scmp.ne.s32.totalorder %s32, %s33
      %p44 = scmp.eq.s32.totalorder %s24, 0
      %p45 = por %p43, %p44
      %p46 = scmp.ne.s32.totalorder %s32, %s33
      %p47 = scmp.eq.s32.totalorder %s25, 1
      %p48 = por %p46, %p47
      %p50 = scmp.ne.s32.totalorder %s33, %s49
      %p51 = scmp.eq.s32.totalorder %s25, 0
      %p52 = por %p50, %p51
      %s54 = sadd.s32 %s53, 1
      %p57 = scmp.eq.s32.totalorder %s19, 1
      %p58 = scmp.ne.s32.totalorder %s53, %s55
      %p59 = scmp.eq.s32.totalorder %s19, 0
      %p60 = por %p58, %p59
      %p61 = scmp.ne.s32.totalorder %s53, %s55
      %p62 = scmp.eq.s32.totalorder %s24, 1
      %p63 = por %p61, %p62
      %p64 = scmp.ne.s32.totalorder %s55, %s56
      %p65 = scmp.eq.s32.totalorder %s24, 0
      %p66 = por %p64, %p65
      %p67 = scmp.ne.s32.totalorder %s55, %s56
      %p68 = scmp.eq.s32.totalorder %s25, 1
      %p69 = por %p67, %p68
      %p71 = scmp.ne.s32.totalorder %s56, %s70
      %p72 = scmp.eq.s32.totalorder %s25, 0
      %p73 = por %p71, %p72
      %s75 = sadd.s32 %s74, 1
      %p78 = scmp.eq.s32.totalorder %s19, 1
      %p79 = scmp.ne.s32.totalorder %s74, %s76
      %p80 = scmp.eq.s32.totalorder %s19, 0
      %p81 = por %p79, %p80
      %p82 = scmp.ne.s32.totalorder %s74, %s76
      %p83 = scmp.eq.s32.totalorder %s24, 1
      %p84 = por %p82, %p83
      %p85 = scmp.ne.s32.totalorder %s76, %s77
      %p86 = scmp.eq.s32.totalorder %s24, 0
      %p87 = por %p85, %p86
      %p88 = scmp.ne.s32.totalorder %s76, %s77
      %p89 = scmp.eq.s32.totalorder %s25, 1
      %p90 = por %p88, %p89
      %p92 = scmp.ne.s32.totalorder %s77, %s91
      %p93 = scmp.eq.s32.totalorder %s25, 0
      %p94 = por %p92, %p93
      %s96 = sadd.s32 %s95, 1
      %p99 = scmp.eq.s32.totalorder %s19, 1
      %p100 = scmp.ne.s32.totalorder %s95, %s97
      %p101 = scmp.eq.s32.totalorder %s19, 0
      %p102 = por %p100, %p101
      %p103 = scmp.ne.s32.totalorder %s95, %s97
      %p104 = scmp.eq.s32.totalorder %s24, 1
      %p105 = por %p103, %p104
      %p106 = scmp.ne.s32.totalorder %s97, %s98
      %p107 = scmp.eq.s32.totalorder %s24, 0
      %p108 = por %p106, %p107
      %p109 = scmp.ne.s32.totalorder %s97, %s98
      %p110 = scmp.eq.s32.totalorder %s25, 1
      %p111 = por %p109, %p110
      %p113 = scmp.ne.s32.totalorder %s98, %s112
      %p114 = scmp.eq.s32.totalorder %s25, 0
      %p115 = por %p113, %p114
      %s117 = sadd.s32 %s116, 1
      %p120 = scmp.eq.s32.totalorder %s19, 1
      %p121 = scmp.ne.s32.totalorder %s116, %s118
      %p122 = scmp.eq.s32.totalorder %s19, 0
      %p123 = por %p121, %p122
      %p124 = scmp.ne.s32.totalorder %s116, %s118
      %p125 = scmp.eq.s32.totalorder %s24, 1
      %p126 = por %p124, %p125
      %p127 = scmp.ne.s32.totalorder %s118, %s119
      %p128 = scmp.eq.s32.totalorder %s24, 0
      %p129 = por %p127, %p128
      %p130 = scmp.ne.s32.totalorder %s118, %s119
      %p131 = scmp.eq.s32.totalorder %s25, 1
      %p132 = por %p130, %p131
      %p134 = scmp.ne.s32.totalorder %s119, %s133
      %p135 = scmp.eq.s32.totalorder %s25, 0
      %p136 = por %p134, %p135
      %s137 = ssub.s32 %s19, %s26
      %p138 = scmp.eq.s32.totalorder %s137, 0
      %s140 = sadd.s32 %s139, 1
      %s141 = scalar_select %p138, %s139, %s140
      %p144 = pneg %p138
      %p145 = scmp.eq.s32.totalorder %s19, 1
      %p146 = por %p144, %p145
      %p147 = scmp.ne.s32.totalorder %s139, %s142
      %p148 = scmp.eq.s32.totalorder %s19, 0
      %p149 = por %p147, %p148
      %p150 = scmp.ne.s32.totalorder %s139, %s142
      %p151 = scmp.eq.s32.totalorder %s24, 1
      %p152 = por %p150, %p151
      %p153 = scmp.ne.s32.totalorder %s142, %s143
      %p154 = scmp.eq.s32.totalorder %s24, 0
      %p155 = por %p153, %p154
      %p156 = scmp.ne.s32.totalorder %s142, %s143
      %p157 = scmp.eq.s32.totalorder %s25, 1
      %p158 = por %p156, %p157
      %p160 = scmp.ne.s32.totalorder %s143, %s159
      %p161 = scmp.eq.s32.totalorder %s25, 0
      %p162 = por %p160, %p161
      %p163 = scmp.le.s32.totalorder 1, %s19
      %p164 = scmp.lt.s32.totalorder %s19, 3
      %p165 = pnand %p163, %p164
      %p166 = pneg %p165
      // Predicated region
      $region9: #{tpu_custom_call.1} parent=5 // pred_check
        _
      $region10: #{tpu_custom_call.1} parent=5 // pred_check_branch
        %168 = sbr.rel (%p165) target = $region12
      $region11: #{tpu_custom_call.1} parent=5 // pred_region
        %s169 = ssub.s32 %s19, 1
        // Predicated region
        $region13: #{tpu_custom_call.1} parent=11 // pred_check
          %p170 = pneg %p66
        $region14: #{tpu_custom_call.1} parent=11 // pred_check_branch
          %172 = sbr.rel (%p170) target = $region16
        $region15: #{tpu_custom_call.1} parent=11 // pred_region
          %174 = vsyncadd [#allocation6], 0
          %s175 = sshll.u32 %s1, 4
          %s176 = int_to_ptr.hbm [resolvable:$true] %s175
          %s177 = sshll.u32 [#allocation5], 4
          %s178 = int_to_ptr.vmem [resolvable:$true] %s177
          %183 = dma.hbm_to_vmem [thread:$0]  %s176, 36864, %s178, [#allocation6], 768, 768, 48
        $region16: #{tpu_custom_call.1} parent=11 // pred_fallthru
          _
        // Predicated region
        $region17: #{tpu_custom_call.1} parent=11 // pred_check
          %p184 = pneg %p87
        $region18: #{tpu_custom_call.1} parent=11 // pred_check_branch
          %186 = sbr.rel (%p184) target = $region20
        $region19: #{tpu_custom_call.1} parent=11 // pred_region
          %188 = vsyncadd [#allocation6], 0
          %s190 = sshll.u32 %s2, 4
          %s191 = int_to_ptr.hbm [resolvable:$true] %s190
          %s192 = sshll.u32 [#allocation7], 4
          %s193 = int_to_ptr.vmem [resolvable:$true] %s192
          %195 = dma.hbm_to_vmem [thread:$0]  %s191, 192, %s193, [#allocation6]
        $region20: #{tpu_custom_call.1} parent=11 // pred_fallthru
          _
        // Predicated region
        $region21: #{tpu_custom_call.1} parent=11 // pred_check
          %p196 = pneg %p108
        $region22: #{tpu_custom_call.1} parent=11 // pred_check_branch
          %198 = sbr.rel (%p196) target = $region24
        $region23: #{tpu_custom_call.1} parent=11 // pred_region
          %200 = vsyncadd [#allocation9], 0
          %s201 = sshll.u32 %s3, 4
          %s202 = int_to_ptr.hbm [resolvable:$true] %s201
          %s203 = sshll.u32 [#allocation8], 4
          %s204 = int_to_ptr.vmem [resolvable:$true] %s203
          %209 = dma.hbm_to_vmem [thread:$0]  %s202, 36864, %s204, [#allocation9], 192, 192, 12
        $region24: #{tpu_custom_call.1} parent=11 // pred_fallthru
          _
        // Predicated region
        $region25: #{tpu_custom_call.1} parent=11 // pred_check
          %p210 = pneg %p129
        $region26: #{tpu_custom_call.1} parent=11 // pred_check_branch
          %212 = sbr.rel (%p210) target = $region28
        $region27: #{tpu_custom_call.1} parent=11 // pred_region
          %214 = vsyncadd [#allocation9], 0
          %s216 = sshll.u32 %s4, 4
          %s217 = int_to_ptr.hbm [resolvable:$true] %s216
          %s218 = sshll.u32 [#allocation10], 4
          %s219 = int_to_ptr.vmem [resolvable:$true] %s218
          %221 = dma.hbm_to_vmem [thread:$0]  %s217, 48, %s219, [#allocation9]
        $region28: #{tpu_custom_call.1} parent=11 // pred_fallthru
          _
      $region12: #{tpu_custom_call.1} parent=5 // pred_fallthru
        _
      %p222 = scmp.lt.s32.totalorder %s19, 2
      // Predicated region
      $region29: #{tpu_custom_call.1} parent=5 // pred_check
        %p223 = pneg %p222
      $region30: #{tpu_custom_call.1} parent=5 // pred_check_branch
        %225 = sbr.rel (%p223) target = $region32
      $region31: #{tpu_custom_call.1} parent=5 // pred_region
        // Predicated region
        $region33: #{tpu_custom_call.1} parent=31 // pred_check
          %p226 = pneg %p39
        $region34: #{tpu_custom_call.1} parent=31 // pred_check_branch
          %228 = sbr.rel (%p226) target = $region36
        $region35: #{tpu_custom_call.1} parent=31 // pred_region
          %s229 = sand.u32 %s29, 1
          %s230 = scalar_lea.sflag [#allocation3], %s229
          %s231 = sand.u32 %s29, 1
          %s232 = smul.addr %s231, 24
          %s233 = scalar_lea.vmem [#allocation2], %s232
          %235 = vsyncadd %s230, 0
          %s236 = smul.addr %s19, 3
          %s237 = smul.addr %s236, 8
          %s238 = scalar_lea.hbm %s0, %s237
          %s240 = sshll.u32 %s238, 4
          %s241 = int_to_ptr.hbm [resolvable:$true] %s240
          %s242 = sshll.u32 %s233, 4
          %s243 = int_to_ptr.vmem [resolvable:$true] %s242
          %245 = dma.hbm_to_vmem [thread:$0]  %s241, 384, %s243, %s230
        $region36: #{tpu_custom_call.1} parent=31 // pred_fallthru
          _
      $region32: #{tpu_custom_call.1} parent=5 // pred_fallthru
        _
      %p246 = scmp.le.s32.totalorder 1, %s19
      %p247 = scmp.lt.s32.totalorder %s19, 3
      %p248 = pnand %p246, %p247
      %p249 = pneg %p248
      // Predicated region
      $region37: #{tpu_custom_call.1} parent=5 // pred_check
        _
      $region38: #{tpu_custom_call.1} parent=5 // pred_check_branch
        %251 = sbr.rel (%p248) target = $region40
      $region39: #{tpu_custom_call.1} parent=5 // pred_region
        %s252 = ssub.s32 %s19, 1
        %s253 = sand.u32 %s32, 1
        %s254 = scalar_lea.sflag [#allocation3], %s253
        %s255 = sand.u32 %s32, 1
        %s256 = smul.addr %s255, 24
        %s257 = scalar_lea.vmem [#allocation2], %s256
        // Predicated region
        $region41: #{tpu_custom_call.1} parent=39 // pred_check
          %p258 = pneg %p45
        $region42: #{tpu_custom_call.1} parent=39 // pred_check_branch
          %260 = sbr.rel (%p258) target = $region44
        $region43: #{tpu_custom_call.1} parent=39 // pred_region
          %262 = dma.done %s254, 384
        $region44: #{tpu_custom_call.1} parent=39 // pred_fallthru
          _
        // Predicated region
        $region45: #{tpu_custom_call.1} parent=39 // pred_check
          %p263 = pneg %p66
        $region46: #{tpu_custom_call.1} parent=39 // pred_check_branch
          %265 = sbr.rel (%p263) target = $region48
        $region47: #{tpu_custom_call.1} parent=39 // pred_region
          %267 = dma.done [#allocation6], 36864
        $region48: #{tpu_custom_call.1} parent=39 // pred_fallthru
          _
        // Predicated region
        $region49: #{tpu_custom_call.1} parent=39 // pred_check
          %p268 = pneg %p87
        $region50: #{tpu_custom_call.1} parent=39 // pred_check_branch
          %270 = sbr.rel (%p268) target = $region52
        $region51: #{tpu_custom_call.1} parent=39 // pred_region
          %272 = dma.done [#allocation6], 192
        $region52: #{tpu_custom_call.1} parent=39 // pred_fallthru
          _
        // Predicated region
        $region53: #{tpu_custom_call.1} parent=39 // pred_check
          %p273 = pneg %p108
        $region54: #{tpu_custom_call.1} parent=39 // pred_check_branch
          %275 = sbr.rel (%p273) target = $region56
        $region55: #{tpu_custom_call.1} parent=39 // pred_region
          %277 = dma.done [#allocation9], 36864
        $region56: #{tpu_custom_call.1} parent=39 // pred_fallthru
          _
        // Predicated region
        $region57: #{tpu_custom_call.1} parent=39 // pred_check
          %p278 = pneg %p129
        $region58: #{tpu_custom_call.1} parent=39 // pred_check_branch
          %280 = sbr.rel (%p278) target = $region60
        $region59: #{tpu_custom_call.1} parent=39 // pred_region
          %282 = dma.done [#allocation9], 48
        $region60: #{tpu_custom_call.1} parent=39 // pred_fallthru
          _
        %s283 = sand.u32 %s32, 1
        %s284 = scalar_lea.sflag [#allocation3], %s283
        %s285 = sand.u32 %s32, 1
        %s286 = smul.addr %s285, 24
        %s287 = scalar_lea.vmem [#allocation2], %s286
        %p288 = pneg %p45
        %p289 = pneg %p42
        %p290 = pneg %p66
        %p291 = pneg %p63
        %p292 = pneg %p87
        %p293 = pneg %p84
        %p294 = pneg %p108
        %p295 = pneg %p105
        %p296 = pneg %p129
        %p297 = pneg %p126
        %p298 = pneg %p155
        %p299 = pneg %p152
        %s300 = sand.u32 %s142, 1
        %s301 = scalar_lea.sflag [#allocation4], %s300
        %s302 = sand.u32 %s142, 1
        %s303 = smul.addr %s302, 24
        %s304 = scalar_lea.vmem [#allocation11], %s303
        %v305 = vld [vmem:[%s257] sm:$0xff]
        %v306 = vld [vmem:[%s257 + $0x8] sm:$0xff]
        %v307 = vld [vmem:[%s257 + $0x10] sm:$0xff]
        %v308 = vpack.c.bf16 %v305, %v305
        %v309 = vpack.c.bf16 %v306, %v306
        %v310 = vpack.c.bf16 %v307, %v307
        %v311 = vld [vmem:[#allocation5] sm:$0xff]
        %v312 = vld [vmem:[#allocation5 + $0x8] sm:$0xff]
        %v313 = vld [vmem:[#allocation5 + $0x10] sm:$0xff]
        %v314 = vld [vmem:[#allocation5 + $0x18] sm:$0xff]
        %v315 = vld [vmem:[#allocation5 + $0x20] sm:$0xff]
        %v316 = vld [vmem:[#allocation5 + $0x28] sm:$0xff]
        %v317 = vld [vmem:[#allocation5 + $0x30] sm:$0xff]
        %v318 = vld [vmem:[#allocation5 + $0x38] sm:$0xff]
        %v319 = vld [vmem:[#allocation5 + $0x40] sm:$0xff]
        %v320 = vld [vmem:[#allocation5 + $0x48] sm:$0xff]
        %v321 = vld [vmem:[#allocation5 + $0x50] sm:$0xff]
        %v322 = vld [vmem:[#allocation5 + $0x58] sm:$0xff]
        %v323 = vld [vmem:[#allocation5 + $0x60] sm:$0xff]
        %v324 = vld [vmem:[#allocation5 + $0x68] sm:$0xff]
        %v325 = vld [vmem:[#allocation5 + $0x70] sm:$0xff]
        %v326 = vld [vmem:[#allocation5 + $0x78] sm:$0xff]
        %v327 = vld [vmem:[#allocation5 + $0x80] sm:$0xff]
        %v328 = vld [vmem:[#allocation5 + $0x88] sm:$0xff]
        %v329 = vld [vmem:[#allocation5 + $0x90] sm:$0xff]
        %v330 = vld [vmem:[#allocation5 + $0x98] sm:$0xff]
        %v331 = vld [vmem:[#allocation5 + $0xa0] sm:$0xff]
        %v332 = vld [vmem:[#allocation5 + $0xa8] sm:$0xff]
        %v333 = vld [vmem:[#allocation5 + $0xb0] sm:$0xff]
        %v334 = vld [vmem:[#allocation5 + $0xb8] sm:$0xff]
        %v335 = vld [vmem:[#allocation5 + $0xc0] sm:$0xff]
        %v336 = vld [vmem:[#allocation5 + $0xc8] sm:$0xff]
        %v337 = vld [vmem:[#allocation5 + $0xd0] sm:$0xff]
        %v338 = vld [vmem:[#allocation5 + $0xd8] sm:$0xff]
        %v339 = vld [vmem:[#allocation5 + $0xe0] sm:$0xff]
        %v340 = vld [vmem:[#allocation5 + $0xe8] sm:$0xff]
        %v341 = vld [vmem:[#allocation5 + $0xf0] sm:$0xff]
        %v342 = vld [vmem:[#allocation5 + $0xf8] sm:$0xff]
        %v343 = vld [vmem:[#allocation5 + $0x100] sm:$0xff]
        %v344 = vld [vmem:[#allocation5 + $0x108] sm:$0xff]
        %v345 = vld [vmem:[#allocation5 + $0x110] sm:$0xff]
        %v346 = vld [vmem:[#allocation5 + $0x118] sm:$0xff]
        %v347 = vld [vmem:[#allocation5 + $0x120] sm:$0xff]
        %v348 = vld [vmem:[#allocation5 + $0x128] sm:$0xff]
        %v349 = vld [vmem:[#allocation5 + $0x130] sm:$0xff]
        %v350 = vld [vmem:[#allocation5 + $0x138] sm:$0xff]
        %v351 = vld [vmem:[#allocation5 + $0x140] sm:$0xff]
        %v352 = vld [vmem:[#allocation5 + $0x148] sm:$0xff]
        %v353 = vld [vmem:[#allocation5 + $0x150] sm:$0xff]
        %v354 = vld [vmem:[#allocation5 + $0x158] sm:$0xff]
        %v355 = vld [vmem:[#allocation5 + $0x160] sm:$0xff]
        %v356 = vld [vmem:[#allocation5 + $0x168] sm:$0xff]
        %v357 = vld [vmem:[#allocation5 + $0x170] sm:$0xff]
        %v358 = vld [vmem:[#allocation5 + $0x178] sm:$0xff]
        %v359 = vld [vmem:[#allocation5 + $0x180] sm:$0xff]
        %v360 = vld [vmem:[#allocation5 + $0x188] sm:$0xff]
        %v361 = vld [vmem:[#allocation5 + $0x190] sm:$0xff]
        %v362 = vld [vmem:[#allocation5 + $0x198] sm:$0xff]
        %v363 = vld [vmem:[#allocation5 + $0x1a0] sm:$0xff]
        %v364 = vld [vmem:[#allocation5 + $0x1a8] sm:$0xff]
        %v365 = vld [vmem:[#allocation5 + $0x1b0] sm:$0xff]
        %v366 = vld [vmem:[#allocation5 + $0x1b8] sm:$0xff]
        %v367 = vld [vmem:[#allocation5 + $0x1c0] sm:$0xff]
        %v368 = vld [vmem:[#allocation5 + $0x1c8] sm:$0xff]
        %v369 = vld [vmem:[#allocation5 + $0x1d0] sm:$0xff]
        %v370 = vld [vmem:[#allocation5 + $0x1d8] sm:$0xff]
        %v371 = vld [vmem:[#allocation5 + $0x1e0] sm:$0xff]
        %v372 = vld [vmem:[#allocation5 + $0x1e8] sm:$0xff]
        %v373 = vld [vmem:[#allocation5 + $0x1f0] sm:$0xff]
        %v374 = vld [vmem:[#allocation5 + $0x1f8] sm:$0xff]
        %v375 = vld [vmem:[#allocation5 + $0x200] sm:$0xff]
        %v376 = vld [vmem:[#allocation5 + $0x208] sm:$0xff]
        %v377 = vld [vmem:[#allocation5 + $0x210] sm:$0xff]
        %v378 = vld [vmem:[#allocation5 + $0x218] sm:$0xff]
        %v379 = vld [vmem:[#allocation5 + $0x220] sm:$0xff]
        %v380 = vld [vmem:[#allocation5 + $0x228] sm:$0xff]
        %v381 = vld [vmem:[#allocation5 + $0x230] sm:$0xff]
        %v382 = vld [vmem:[#allocation5 + $0x238] sm:$0xff]
        %v383 = vld [vmem:[#allocation5 + $0x240] sm:$0xff]
        %v384 = vld [vmem:[#allocation5 + $0x248] sm:$0xff]
        %v385 = vld [vmem:[#allocation5 + $0x250] sm:$0xff]
        %v386 = vld [vmem:[#allocation5 + $0x258] sm:$0xff]
        %v387 = vld [vmem:[#allocation5 + $0x260] sm:$0xff]
        %v388 = vld [vmem:[#allocation5 + $0x268] sm:$0xff]
        %v389 = vld [vmem:[#allocation5 + $0x270] sm:$0xff]
        %v390 = vld [vmem:[#allocation5 + $0x278] sm:$0xff]
        %v391 = vld [vmem:[#allocation5 + $0x280] sm:$0xff]
        %v392 = vld [vmem:[#allocation5 + $0x288] sm:$0xff]
        %v393 = vld [vmem:[#allocation5 + $0x290] sm:$0xff]
        %v394 = vld [vmem:[#allocation5 + $0x298] sm:$0xff]
        %v395 = vld [vmem:[#allocation5 + $0x2a0] sm:$0xff]
        %v396 = vld [vmem:[#allocation5 + $0x2a8] sm:$0xff]
        %v397 = vld [vmem:[#allocation5 + $0x2b0] sm:$0xff]
        %v398 = vld [vmem:[#allocation5 + $0x2b8] sm:$0xff]
        %v399 = vld [vmem:[#allocation5 + $0x2c0] sm:$0xff]
        %v400 = vld [vmem:[#allocation5 + $0x2c8] sm:$0xff]
        %v401 = vld [vmem:[#allocation5 + $0x2d0] sm:$0xff]
        %v402 = vld [vmem:[#allocation5 + $0x2d8] sm:$0xff]
        %v403 = vld [vmem:[#allocation5 + $0x2e0] sm:$0xff]
        %v404 = vld [vmem:[#allocation5 + $0x2e8] sm:$0xff]
        %v405 = vld [vmem:[#allocation5 + $0x2f0] sm:$0xff]
        %v406 = vld [vmem:[#allocation5 + $0x2f8] sm:$0xff]
        %v407 = vld [vmem:[#allocation5 + $0x300] sm:$0xff]
        %v408 = vld [vmem:[#allocation5 + $0x308] sm:$0xff]
        %v409 = vld [vmem:[#allocation5 + $0x310] sm:$0xff]
        %v410 = vld [vmem:[#allocation5 + $0x318] sm:$0xff]
        %v411 = vld [vmem:[#allocation5 + $0x320] sm:$0xff]
        %v412 = vld [vmem:[#allocation5 + $0x328] sm:$0xff]
        %v413 = vld [vmem:[#allocation5 + $0x330] sm:$0xff]
        %v414 = vld [vmem:[#allocation5 + $0x338] sm:$0xff]
        %v415 = vld [vmem:[#allocation5 + $0x340] sm:$0xff]
        %v416 = vld [vmem:[#allocation5 + $0x348] sm:$0xff]
        %v417 = vld [vmem:[#allocation5 + $0x350] sm:$0xff]
        %v418 = vld [vmem:[#allocation5 + $0x358] sm:$0xff]
        %v419 = vld [vmem:[#allocation5 + $0x360] sm:$0xff]
        %v420 = vld [vmem:[#allocation5 + $0x368] sm:$0xff]
        %v421 = vld [vmem:[#allocation5 + $0x370] sm:$0xff]
        %v422 = vld [vmem:[#allocation5 + $0x378] sm:$0xff]
        %v423 = vld [vmem:[#allocation5 + $0x380] sm:$0xff]
        %v424 = vld [vmem:[#allocation5 + $0x388] sm:$0xff]
        %v425 = vld [vmem:[#allocation5 + $0x390] sm:$0xff]
        %v426 = vld [vmem:[#allocation5 + $0x398] sm:$0xff]
        %v427 = vld [vmem:[#allocation5 + $0x3a0] sm:$0xff]
        %v428 = vld [vmem:[#allocation5 + $0x3a8] sm:$0xff]
        %v429 = vld [vmem:[#allocation5 + $0x3b0] sm:$0xff]
        %v430 = vld [vmem:[#allocation5 + $0x3b8] sm:$0xff]
        %v431 = vld [vmem:[#allocation5 + $0x3c0] sm:$0xff]
        %v432 = vld [vmem:[#allocation5 + $0x3c8] sm:$0xff]
        %v433 = vld [vmem:[#allocation5 + $0x3d0] sm:$0xff]
        %v434 = vld [vmem:[#allocation5 + $0x3d8] sm:$0xff]
        %v435 = vld [vmem:[#allocation5 + $0x3e0] sm:$0xff]
        %v436 = vld [vmem:[#allocation5 + $0x3e8] sm:$0xff]
        %v437 = vld [vmem:[#allocation5 + $0x3f0] sm:$0xff]
        %v438 = vld [vmem:[#allocation5 + $0x3f8] sm:$0xff]
        %v439 = vld [vmem:[#allocation5 + $0x400] sm:$0xff]
        %v440 = vld [vmem:[#allocation5 + $0x408] sm:$0xff]
        %v441 = vld [vmem:[#allocation5 + $0x410] sm:$0xff]
        %v442 = vld [vmem:[#allocation5 + $0x418] sm:$0xff]
        %v443 = vld [vmem:[#allocation5 + $0x420] sm:$0xff]
        %v444 = vld [vmem:[#allocation5 + $0x428] sm:$0xff]
        %v445 = vld [vmem:[#allocation5 + $0x430] sm:$0xff]
        %v446 = vld [vmem:[#allocation5 + $0x438] sm:$0xff]
        %v447 = vld [vmem:[#allocation5 + $0x440] sm:$0xff]
        %v448 = vld [vmem:[#allocation5 + $0x448] sm:$0xff]
        %v449 = vld [vmem:[#allocation5 + $0x450] sm:$0xff]
        %v450 = vld [vmem:[#allocation5 + $0x458] sm:$0xff]
        %v451 = vld [vmem:[#allocation5 + $0x460] sm:$0xff]
        %v452 = vld [vmem:[#allocation5 + $0x468] sm:$0xff]
        %v453 = vld [vmem:[#allocation5 + $0x470] sm:$0xff]
        %v454 = vld [vmem:[#allocation5 + $0x478] sm:$0xff]
        %v455 = vld [vmem:[#allocation5 + $0x480] sm:$0xff]
        %v456 = vld [vmem:[#allocation5 + $0x488] sm:$0xff]
        %v457 = vld [vmem:[#allocation5 + $0x490] sm:$0xff]
        %v458 = vld [vmem:[#allocation5 + $0x498] sm:$0xff]
        %v459 = vld [vmem:[#allocation5 + $0x4a0] sm:$0xff]
        %v460 = vld [vmem:[#allocation5 + $0x4a8] sm:$0xff]
        %v461 = vld [vmem:[#allocation5 + $0x4b0] sm:$0xff]
        %v462 = vld [vmem:[#allocation5 + $0x4b8] sm:$0xff]
        %v463 = vld [vmem:[#allocation5 + $0x4c0] sm:$0xff]
        %v464 = vld [vmem:[#allocation5 + $0x4c8] sm:$0xff]
        %v465 = vld [vmem:[#allocation5 + $0x4d0] sm:$0xff]
        %v466 = vld [vmem:[#allocation5 + $0x4d8] sm:$0xff]
        %v467 = vld [vmem:[#allocation5 + $0x4e0] sm:$0xff]
        %v468 = vld [vmem:[#allocation5 + $0x4e8] sm:$0xff]
        %v469 = vld [vmem:[#allocation5 + $0x4f0] sm:$0xff]
        %v470 = vld [vmem:[#allocation5 + $0x4f8] sm:$0xff]
        %v471 = vld [vmem:[#allocation5 + $0x500] sm:$0xff]
        %v472 = vld [vmem:[#allocation5 + $0x508] sm:$0xff]
        %v473 = vld [vmem:[#allocation5 + $0x510] sm:$0xff]
        %v474 = vld [vmem:[#allocation5 + $0x518] sm:$0xff]
        %v475 = vld [vmem:[#allocation5 + $0x520] sm:$0xff]
        %v476 = vld [vmem:[#allocation5 + $0x528] sm:$0xff]
        %v477 = vld [vmem:[#allocation5 + $0x530] sm:$0xff]
        %v478 = vld [vmem:[#allocation5 + $0x538] sm:$0xff]
        %v479 = vld [vmem:[#allocation5 + $0x540] sm:$0xff]
        %v480 = vld [vmem:[#allocation5 + $0x548] sm:$0xff]
        %v481 = vld [vmem:[#allocation5 + $0x550] sm:$0xff]
        %v482 = vld [vmem:[#allocation5 + $0x558] sm:$0xff]
        %v483 = vld [vmem:[#allocation5 + $0x560] sm:$0xff]
        %v484 = vld [vmem:[#allocation5 + $0x568] sm:$0xff]
        %v485 = vld [vmem:[#allocation5 + $0x570] sm:$0xff]
        %v486 = vld [vmem:[#allocation5 + $0x578] sm:$0xff]
        %v487 = vld [vmem:[#allocation5 + $0x580] sm:$0xff]
        %v488 = vld [vmem:[#allocation5 + $0x588] sm:$0xff]
        %v489 = vld [vmem:[#allocation5 + $0x590] sm:$0xff]
        %v490 = vld [vmem:[#allocation5 + $0x598] sm:$0xff]
        %v491 = vld [vmem:[#allocation5 + $0x5a0] sm:$0xff]
        %v492 = vld [vmem:[#allocation5 + $0x5a8] sm:$0xff]
        %v493 = vld [vmem:[#allocation5 + $0x5b0] sm:$0xff]
        %v494 = vld [vmem:[#allocation5 + $0x5b8] sm:$0xff]
        %v495 = vld [vmem:[#allocation5 + $0x5c0] sm:$0xff]
        %v496 = vld [vmem:[#allocation5 + $0x5c8] sm:$0xff]
        %v497 = vld [vmem:[#allocation5 + $0x5d0] sm:$0xff]
        %v498 = vld [vmem:[#allocation5 + $0x5d8] sm:$0xff]
        %v499 = vld [vmem:[#allocation5 + $0x5e0] sm:$0xff]
        %v500 = vld [vmem:[#allocation5 + $0x5e8] sm:$0xff]
        %v501 = vld [vmem:[#allocation5 + $0x5f0] sm:$0xff]
        %v502 = vld [vmem:[#allocation5 + $0x5f8] sm:$0xff]
        %v503 = vld [vmem:[#allocation5 + $0x600] sm:$0xff]
        %v504 = vld [vmem:[#allocation5 + $0x608] sm:$0xff]
        %v505 = vld [vmem:[#allocation5 + $0x610] sm:$0xff]
        %v506 = vld [vmem:[#allocation5 + $0x618] sm:$0xff]
        %v507 = vld [vmem:[#allocation5 + $0x620] sm:$0xff]
        %v508 = vld [vmem:[#allocation5 + $0x628] sm:$0xff]
        %v509 = vld [vmem:[#allocation5 + $0x630] sm:$0xff]
        %v510 = vld [vmem:[#allocation5 + $0x638] sm:$0xff]
        %v511 = vld [vmem:[#allocation5 + $0x640] sm:$0xff]
        %v512 = vld [vmem:[#allocation5 + $0x648] sm:$0xff]
        %v513 = vld [vmem:[#allocation5 + $0x650] sm:$0xff]
        %v514 = vld [vmem:[#allocation5 + $0x658] sm:$0xff]
        %v515 = vld [vmem:[#allocation5 + $0x660] sm:$0xff]
        %v516 = vld [vmem:[#allocation5 + $0x668] sm:$0xff]
        %v517 = vld [vmem:[#allocation5 + $0x670] sm:$0xff]
        %v518 = vld [vmem:[#allocation5 + $0x678] sm:$0xff]
        %v519 = vld [vmem:[#allocation5 + $0x680] sm:$0xff]
        %v520 = vld [vmem:[#allocation5 + $0x688] sm:$0xff]
        %v521 = vld [vmem:[#allocation5 + $0x690] sm:$0xff]
        %v522 = vld [vmem:[#allocation5 + $0x698] sm:$0xff]
        %v523 = vld [vmem:[#allocation5 + $0x6a0] sm:$0xff]
        %v524 = vld [vmem:[#allocation5 + $0x6a8] sm:$0xff]
        %v525 = vld [vmem:[#allocation5 + $0x6b0] sm:$0xff]
        %v526 = vld [vmem:[#allocation5 + $0x6b8] sm:$0xff]
        %v527 = vld [vmem:[#allocation5 + $0x6c0] sm:$0xff]
        %v528 = vld [vmem:[#allocation5 + $0x6c8] sm:$0xff]
        %v529 = vld [vmem:[#allocation5 + $0x6d0] sm:$0xff]
        %v530 = vld [vmem:[#allocation5 + $0x6d8] sm:$0xff]
        %v531 = vld [vmem:[#allocation5 + $0x6e0] sm:$0xff]
        %v532 = vld [vmem:[#allocation5 + $0x6e8] sm:$0xff]
        %v533 = vld [vmem:[#allocation5 + $0x6f0] sm:$0xff]
        %v534 = vld [vmem:[#allocation5 + $0x6f8] sm:$0xff]
        %v535 = vld [vmem:[#allocation5 + $0x700] sm:$0xff]
        %v536 = vld [vmem:[#allocation5 + $0x708] sm:$0xff]
        %v537 = vld [vmem:[#allocation5 + $0x710] sm:$0xff]
        %v538 = vld [vmem:[#allocation5 + $0x718] sm:$0xff]
        %v539 = vld [vmem:[#allocation5 + $0x720] sm:$0xff]
        %v540 = vld [vmem:[#allocation5 + $0x728] sm:$0xff]
        %v541 = vld [vmem:[#allocation5 + $0x730] sm:$0xff]
        %v542 = vld [vmem:[#allocation5 + $0x738] sm:$0xff]
        %v543 = vld [vmem:[#allocation5 + $0x740] sm:$0xff]
        %v544 = vld [vmem:[#allocation5 + $0x748] sm:$0xff]
        %v545 = vld [vmem:[#allocation5 + $0x750] sm:$0xff]
        %v546 = vld [vmem:[#allocation5 + $0x758] sm:$0xff]
        %v547 = vld [vmem:[#allocation5 + $0x760] sm:$0xff]
        %v548 = vld [vmem:[#allocation5 + $0x768] sm:$0xff]
        %v549 = vld [vmem:[#allocation5 + $0x770] sm:$0xff]
        %v550 = vld [vmem:[#allocation5 + $0x778] sm:$0xff]
        %v551 = vld [vmem:[#allocation5 + $0x780] sm:$0xff]
        %v552 = vld [vmem:[#allocation5 + $0x788] sm:$0xff]
        %v553 = vld [vmem:[#allocation5 + $0x790] sm:$0xff]
        %v554 = vld [vmem:[#allocation5 + $0x798] sm:$0xff]
        %v555 = vld [vmem:[#allocation5 + $0x7a0] sm:$0xff]
        %v556 = vld [vmem:[#allocation5 + $0x7a8] sm:$0xff]
        %v557 = vld [vmem:[#allocation5 + $0x7b0] sm:$0xff]
        %v558 = vld [vmem:[#allocation5 + $0x7b8] sm:$0xff]
        %v559 = vld [vmem:[#allocation5 + $0x7c0] sm:$0xff]
        %v560 = vld [vmem:[#allocation5 + $0x7c8] sm:$0xff]
        %v561 = vld [vmem:[#allocation5 + $0x7d0] sm:$0xff]
        %v562 = vld [vmem:[#allocation5 + $0x7d8] sm:$0xff]
        %v563 = vld [vmem:[#allocation5 + $0x7e0] sm:$0xff]
        %v564 = vld [vmem:[#allocation5 + $0x7e8] sm:$0xff]
        %v565 = vld [vmem:[#allocation5 + $0x7f0] sm:$0xff]
        %v566 = vld [vmem:[#allocation5 + $0x7f8] sm:$0xff]
        %v567 = vld [vmem:[#allocation5 + $0x800] sm:$0xff]
        %v568 = vld [vmem:[#allocation5 + $0x808] sm:$0xff]
        %v569 = vld [vmem:[#allocation5 + $0x810] sm:$0xff]
        %v570 = vld [vmem:[#allocation5 + $0x818] sm:$0xff]
        %v571 = vld [vmem:[#allocation5 + $0x820] sm:$0xff]
        %v572 = vld [vmem:[#allocation5 + $0x828] sm:$0xff]
        %v573 = vld [vmem:[#allocation5 + $0x830] sm:$0xff]
        %v574 = vld [vmem:[#allocation5 + $0x838] sm:$0xff]
        %v575 = vld [vmem:[#allocation5 + $0x840] sm:$0xff]
        %v576 = vld [vmem:[#allocation5 + $0x848] sm:$0xff]
        %v577 = vld [vmem:[#allocation5 + $0x850] sm:$0xff]
        %v578 = vld [vmem:[#allocation5 + $0x858] sm:$0xff]
        %v579 = vld [vmem:[#allocation5 + $0x860] sm:$0xff]
        %v580 = vld [vmem:[#allocation5 + $0x868] sm:$0xff]
        %v581 = vld [vmem:[#allocation5 + $0x870] sm:$0xff]
        %v582 = vld [vmem:[#allocation5 + $0x878] sm:$0xff]
        %v583 = vld [vmem:[#allocation5 + $0x880] sm:$0xff]
        %v584 = vld [vmem:[#allocation5 + $0x888] sm:$0xff]
        %v585 = vld [vmem:[#allocation5 + $0x890] sm:$0xff]
        %v586 = vld [vmem:[#allocation5 + $0x898] sm:$0xff]
        %v587 = vld [vmem:[#allocation5 + $0x8a0] sm:$0xff]
        %v588 = vld [vmem:[#allocation5 + $0x8a8] sm:$0xff]
        %v589 = vld [vmem:[#allocation5 + $0x8b0] sm:$0xff]
        %v590 = vld [vmem:[#allocation5 + $0x8b8] sm:$0xff]
        %v591 = vld [vmem:[#allocation5 + $0x8c0] sm:$0xff]
        %v592 = vld [vmem:[#allocation5 + $0x8c8] sm:$0xff]
        %v593 = vld [vmem:[#allocation5 + $0x8d0] sm:$0xff]
        %v594 = vld [vmem:[#allocation5 + $0x8d8] sm:$0xff]
        %v595 = vld [vmem:[#allocation5 + $0x8e0] sm:$0xff]
        %v596 = vld [vmem:[#allocation5 + $0x8e8] sm:$0xff]
        %v597 = vld [vmem:[#allocation5 + $0x8f0] sm:$0xff]
        %v598 = vld [vmem:[#allocation5 + $0x8f8] sm:$0xff]
        %v599 = vld [vmem:[#allocation7] sm:$0xff]
        %v600 = vld [vmem:[#allocation7 + $0x8] sm:$0xf]
        %v603 = vperm.slane %v599, 0
        %v604 = vperm.slane %v599, 1
        %v605 = vperm.slane %v599, 2
        %v606 = vperm.slane %v599, 3
        %v607 = vperm.slane %v599, 4
        %v608 = vperm.slane %v599, 5
        %v609 = vperm.slane %v599, 6
        %v610 = vperm.slane %v599, 7
        %v611 = vperm.slane %v600, 0
        %v612 = vperm.slane %v600, 1
        %v613 = vperm.slane %v600, 2
        %v614 = vperm.slane %v600, 3
        %v915 = vunpack.c.l.b16 %v311
        %v916 = vunpack.c.h.b16 %v311
        %v917 = vunpack.c.l.b16 %v312
        %v918 = vunpack.c.h.b16 %v312
        %v919 = vunpack.c.l.b16 %v313
        %v920 = vunpack.c.h.b16 %v313
        %v921 = vunpack.c.l.b16 %v314
        %v922 = vunpack.c.h.b16 %v314
        %v923 = vunpack.c.l.b16 %v315
        %v924 = vunpack.c.h.b16 %v315
        %v925 = vunpack.c.l.b16 %v316
        %v926 = vunpack.c.h.b16 %v316
        %v927 = vunpack.c.l.b16 %v317
        %v928 = vunpack.c.h.b16 %v317
        %v929 = vunpack.c.l.b16 %v318
        %v930 = vunpack.c.h.b16 %v318
        %v931 = vunpack.c.l.b16 %v319
        %v932 = vunpack.c.h.b16 %v319
        %v933 = vunpack.c.l.b16 %v320
        %v934 = vunpack.c.h.b16 %v320
        %v935 = vunpack.c.l.b16 %v321
        %v936 = vunpack.c.h.b16 %v321
        %v937 = vunpack.c.l.b16 %v322
        %v938 = vunpack.c.h.b16 %v322
        %v939 = vunpack.c.l.b16 %v323
        %v940 = vunpack.c.h.b16 %v323
        %v941 = vunpack.c.l.b16 %v324
        %v942 = vunpack.c.h.b16 %v324
        %v943 = vunpack.c.l.b16 %v325
        %v944 = vunpack.c.h.b16 %v325
        %v945 = vunpack.c.l.b16 %v326
        %v946 = vunpack.c.h.b16 %v326
        %v947 = vunpack.c.l.b16 %v327
        %v948 = vunpack.c.h.b16 %v327
        %v949 = vunpack.c.l.b16 %v328
        %v950 = vunpack.c.h.b16 %v328
        %v951 = vunpack.c.l.b16 %v329
        %v952 = vunpack.c.h.b16 %v329
        %v953 = vunpack.c.l.b16 %v330
        %v954 = vunpack.c.h.b16 %v330
        %v955 = vunpack.c.l.b16 %v331
        %v956 = vunpack.c.h.b16 %v331
        %v957 = vunpack.c.l.b16 %v332
        %v958 = vunpack.c.h.b16 %v332
        %v959 = vunpack.c.l.b16 %v333
        %v960 = vunpack.c.h.b16 %v333
        %v961 = vunpack.c.l.b16 %v334
        %v962 = vunpack.c.h.b16 %v334
        %v963 = vunpack.c.l.b16 %v335
        %v964 = vunpack.c.h.b16 %v335
        %v965 = vunpack.c.l.b16 %v336
        %v966 = vunpack.c.h.b16 %v336
        %v967 = vunpack.c.l.b16 %v337
        %v968 = vunpack.c.h.b16 %v337
        %v969 = vunpack.c.l.b16 %v338
        %v970 = vunpack.c.h.b16 %v338
        %v971 = vunpack.c.l.b16 %v339
        %v972 = vunpack.c.h.b16 %v339
        %v973 = vunpack.c.l.b16 %v340
        %v974 = vunpack.c.h.b16 %v340
        %v975 = vunpack.c.l.b16 %v341
        %v976 = vunpack.c.h.b16 %v341
        %v977 = vunpack.c.l.b16 %v342
        %v978 = vunpack.c.h.b16 %v342
        %v979 = vunpack.c.l.b16 %v343
        %v980 = vunpack.c.h.b16 %v343
        %v981 = vunpack.c.l.b16 %v344
        %v982 = vunpack.c.h.b16 %v344
        %v983 = vunpack.c.l.b16 %v345
        %v984 = vunpack.c.h.b16 %v345
        %v985 = vunpack.c.l.b16 %v346
        %v986 = vunpack.c.h.b16 %v346
        %v987 = vunpack.c.l.b16 %v347
        %v988 = vunpack.c.h.b16 %v347
        %v989 = vunpack.c.l.b16 %v348
        %v990 = vunpack.c.h.b16 %v348
        %v991 = vunpack.c.l.b16 %v349
        %v992 = vunpack.c.h.b16 %v349
        %v993 = vunpack.c.l.b16 %v350
        %v994 = vunpack.c.h.b16 %v350
        %v995 = vunpack.c.l.b16 %v351
        %v996 = vunpack.c.h.b16 %v351
        %v997 = vunpack.c.l.b16 %v352
        %v998 = vunpack.c.h.b16 %v352
        %v999 = vunpack.c.l.b16 %v353
        %v1000 = vunpack.c.h.b16 %v353
        %v1001 = vunpack.c.l.b16 %v354
        %v1002 = vunpack.c.h.b16 %v354
        %v1003 = vunpack.c.l.b16 %v355
        %v1004 = vunpack.c.h.b16 %v355
        %v1005 = vunpack.c.l.b16 %v356
        %v1006 = vunpack.c.h.b16 %v356
        %v1007 = vunpack.c.l.b16 %v357
        %v1008 = vunpack.c.h.b16 %v357
        %v1009 = vunpack.c.l.b16 %v358
        %v1010 = vunpack.c.h.b16 %v358
        %v1011 = vunpack.c.l.b16 %v359
        %v1012 = vunpack.c.h.b16 %v359
        %v1013 = vunpack.c.l.b16 %v360
        %v1014 = vunpack.c.h.b16 %v360
        %v1015 = vunpack.c.l.b16 %v361
        %v1016 = vunpack.c.h.b16 %v361
        %v1017 = vunpack.c.l.b16 %v362
        %v1018 = vunpack.c.h.b16 %v362
        %v1019 = vunpack.c.l.b16 %v363
        %v1020 = vunpack.c.h.b16 %v363
        %v1021 = vunpack.c.l.b16 %v364
        %v1022 = vunpack.c.h.b16 %v364
        %v1023 = vunpack.c.l.b16 %v365
        %v1024 = vunpack.c.h.b16 %v365
        %v1025 = vunpack.c.l.b16 %v366
        %v1026 = vunpack.c.h.b16 %v366
        %v1027 = vunpack.c.l.b16 %v367
        %v1028 = vunpack.c.h.b16 %v367
        %v1029 = vunpack.c.l.b16 %v368
        %v1030 = vunpack.c.h.b16 %v368
        %v1031 = vunpack.c.l.b16 %v369
        %v1032 = vunpack.c.h.b16 %v369
        %v1033 = vunpack.c.l.b16 %v370
        %v1034 = vunpack.c.h.b16 %v370
        %v1035 = vunpack.c.l.b16 %v371
        %v1036 = vunpack.c.h.b16 %v371
        %v1037 = vunpack.c.l.b16 %v372
        %v1038 = vunpack.c.h.b16 %v372
        %v1039 = vunpack.c.l.b16 %v373
        %v1040 = vunpack.c.h.b16 %v373
        %v1041 = vunpack.c.l.b16 %v374
        %v1042 = vunpack.c.h.b16 %v374
        %v1043 = vunpack.c.l.b16 %v375
        %v1044 = vunpack.c.h.b16 %v375
        %v1045 = vunpack.c.l.b16 %v376
        %v1046 = vunpack.c.h.b16 %v376
        %v1047 = vunpack.c.l.b16 %v377
        %v1048 = vunpack.c.h.b16 %v377
        %v1049 = vunpack.c.l.b16 %v378
        %v1050 = vunpack.c.h.b16 %v378
        %v1051 = vunpack.c.l.b16 %v379
        %v1052 = vunpack.c.h.b16 %v379
        %v1053 = vunpack.c.l.b16 %v380
        %v1054 = vunpack.c.h.b16 %v380
        %v1055 = vunpack.c.l.b16 %v381
        %v1056 = vunpack.c.h.b16 %v381
        %v1057 = vunpack.c.l.b16 %v382
        %v1058 = vunpack.c.h.b16 %v382
        %v1059 = vunpack.c.l.b16 %v383
        %v1060 = vunpack.c.h.b16 %v383
        %v1061 = vunpack.c.l.b16 %v384
        %v1062 = vunpack.c.h.b16 %v384
        %v1063 = vunpack.c.l.b16 %v385
        %v1064 = vunpack.c.h.b16 %v385
        %v1065 = vunpack.c.l.b16 %v386
        %v1066 = vunpack.c.h.b16 %v386
        %v1067 = vunpack.c.l.b16 %v387
        %v1068 = vunpack.c.h.b16 %v387
        %v1069 = vunpack.c.l.b16 %v388
        %v1070 = vunpack.c.h.b16 %v388
        %v1071 = vunpack.c.l.b16 %v389
        %v1072 = vunpack.c.h.b16 %v389
        %v1073 = vunpack.c.l.b16 %v390
        %v1074 = vunpack.c.h.b16 %v390
        %v1075 = vunpack.c.l.b16 %v391
        %v1076 = vunpack.c.h.b16 %v391
        %v1077 = vunpack.c.l.b16 %v392
        %v1078 = vunpack.c.h.b16 %v392
        %v1079 = vunpack.c.l.b16 %v393
        %v1080 = vunpack.c.h.b16 %v393
        %v1081 = vunpack.c.l.b16 %v394
        %v1082 = vunpack.c.h.b16 %v394
        %v1083 = vunpack.c.l.b16 %v395
        %v1084 = vunpack.c.h.b16 %v395
        %v1085 = vunpack.c.l.b16 %v396
        %v1086 = vunpack.c.h.b16 %v396
        %v1087 = vunpack.c.l.b16 %v397
        %v1088 = vunpack.c.h.b16 %v397
        %v1089 = vunpack.c.l.b16 %v398
        %v1090 = vunpack.c.h.b16 %v398
        %v1091 = vunpack.c.l.b16 %v399
        %v1092 = vunpack.c.h.b16 %v399
        %v1093 = vunpack.c.l.b16 %v400
        %v1094 = vunpack.c.h.b16 %v400
        %v1095 = vunpack.c.l.b16 %v401
        %v1096 = vunpack.c.h.b16 %v401
        %v1097 = vunpack.c.l.b16 %v402
        %v1098 = vunpack.c.h.b16 %v402
        %v1099 = vunpack.c.l.b16 %v403
        %v1100 = vunpack.c.h.b16 %v403
        %v1101 = vunpack.c.l.b16 %v404
        %v1102 = vunpack.c.h.b16 %v404
        %v1103 = vunpack.c.l.b16 %v405
        %v1104 = vunpack.c.h.b16 %v405
        %v1105 = vunpack.c.l.b16 %v406
        %v1106 = vunpack.c.h.b16 %v406
        %v1107 = vunpack.c.l.b16 %v407
        %v1108 = vunpack.c.h.b16 %v407
        %v1109 = vunpack.c.l.b16 %v408
        %v1110 = vunpack.c.h.b16 %v408
        %v1111 = vunpack.c.l.b16 %v409
        %v1112 = vunpack.c.h.b16 %v409
        %v1113 = vunpack.c.l.b16 %v410
        %v1114 = vunpack.c.h.b16 %v410
        %v1115 = vunpack.c.l.b16 %v411
        %v1116 = vunpack.c.h.b16 %v411
        %v1117 = vunpack.c.l.b16 %v412
        %v1118 = vunpack.c.h.b16 %v412
        %v1119 = vunpack.c.l.b16 %v413
        %v1120 = vunpack.c.h.b16 %v413
        %v1121 = vunpack.c.l.b16 %v414
        %v1122 = vunpack.c.h.b16 %v414
        %v1123 = vunpack.c.l.b16 %v415
        %v1124 = vunpack.c.h.b16 %v415
        %v1125 = vunpack.c.l.b16 %v416
        %v1126 = vunpack.c.h.b16 %v416
        %v1127 = vunpack.c.l.b16 %v417
        %v1128 = vunpack.c.h.b16 %v417
        %v1129 = vunpack.c.l.b16 %v418
        %v1130 = vunpack.c.h.b16 %v418
        %v1131 = vunpack.c.l.b16 %v419
        %v1132 = vunpack.c.h.b16 %v419
        %v1133 = vunpack.c.l.b16 %v420
        %v1134 = vunpack.c.h.b16 %v420
        %v1135 = vunpack.c.l.b16 %v421
        %v1136 = vunpack.c.h.b16 %v421
        %v1137 = vunpack.c.l.b16 %v422
        %v1138 = vunpack.c.h.b16 %v422
        %v1139 = vunpack.c.l.b16 %v423
        %v1140 = vunpack.c.h.b16 %v423
        %v1141 = vunpack.c.l.b16 %v424
        %v1142 = vunpack.c.h.b16 %v424
        %v1143 = vunpack.c.l.b16 %v425
        %v1144 = vunpack.c.h.b16 %v425
        %v1145 = vunpack.c.l.b16 %v426
        %v1146 = vunpack.c.h.b16 %v426
        %v1147 = vunpack.c.l.b16 %v427
        %v1148 = vunpack.c.h.b16 %v427
        %v1149 = vunpack.c.l.b16 %v428
        %v1150 = vunpack.c.h.b16 %v428
        %v1151 = vunpack.c.l.b16 %v429
        %v1152 = vunpack.c.h.b16 %v429
        %v1153 = vunpack.c.l.b16 %v430
        %v1154 = vunpack.c.h.b16 %v430
        %v1155 = vunpack.c.l.b16 %v431
        %v1156 = vunpack.c.h.b16 %v431
        %v1157 = vunpack.c.l.b16 %v432
        %v1158 = vunpack.c.h.b16 %v432
        %v1159 = vunpack.c.l.b16 %v433
        %v1160 = vunpack.c.h.b16 %v433
        %v1161 = vunpack.c.l.b16 %v434
        %v1162 = vunpack.c.h.b16 %v434
        %v1163 = vunpack.c.l.b16 %v435
        %v1164 = vunpack.c.h.b16 %v435
        %v1165 = vunpack.c.l.b16 %v436
        %v1166 = vunpack.c.h.b16 %v436
        %v1167 = vunpack.c.l.b16 %v437
        %v1168 = vunpack.c.h.b16 %v437
        %v1169 = vunpack.c.l.b16 %v438
        %v1170 = vunpack.c.h.b16 %v438
        %v1171 = vunpack.c.l.b16 %v439
        %v1172 = vunpack.c.h.b16 %v439
        %v1173 = vunpack.c.l.b16 %v440
        %v1174 = vunpack.c.h.b16 %v440
        %v1175 = vunpack.c.l.b16 %v441
        %v1176 = vunpack.c.h.b16 %v441
        %v1177 = vunpack.c.l.b16 %v442
        %v1178 = vunpack.c.h.b16 %v442
        %v1179 = vunpack.c.l.b16 %v443
        %v1180 = vunpack.c.h.b16 %v443
        %v1181 = vunpack.c.l.b16 %v444
        %v1182 = vunpack.c.h.b16 %v444
        %v1183 = vunpack.c.l.b16 %v445
        %v1184 = vunpack.c.h.b16 %v445
        %v1185 = vunpack.c.l.b16 %v446
        %v1186 = vunpack.c.h.b16 %v446
        %v1187 = vunpack.c.l.b16 %v447
        %v1188 = vunpack.c.h.b16 %v447
        %v1189 = vunpack.c.l.b16 %v448
        %v1190 = vunpack.c.h.b16 %v448
        %v1191 = vunpack.c.l.b16 %v449
        %v1192 = vunpack.c.h.b16 %v449
        %v1193 = vunpack.c.l.b16 %v450
        %v1194 = vunpack.c.h.b16 %v450
        %v1195 = vunpack.c.l.b16 %v451
        %v1196 = vunpack.c.h.b16 %v451
        %v1197 = vunpack.c.l.b16 %v452
        %v1198 = vunpack.c.h.b16 %v452
        %v1199 = vunpack.c.l.b16 %v453
        %v1200 = vunpack.c.h.b16 %v453
        %v1201 = vunpack.c.l.b16 %v454
        %v1202 = vunpack.c.h.b16 %v454
        %v1203 = vunpack.c.l.b16 %v455
        %v1204 = vunpack.c.h.b16 %v455
        %v1205 = vunpack.c.l.b16 %v456
        %v1206 = vunpack.c.h.b16 %v456
        %v1207 = vunpack.c.l.b16 %v457
        %v1208 = vunpack.c.h.b16 %v457
        %v1209 = vunpack.c.l.b16 %v458
        %v1210 = vunpack.c.h.b16 %v458
        %v1211 = vunpack.c.l.b16 %v459
        %v1212 = vunpack.c.h.b16 %v459
        %v1213 = vunpack.c.l.b16 %v460
        %v1214 = vunpack.c.h.b16 %v460
        %v1215 = vunpack.c.l.b16 %v461
        %v1216 = vunpack.c.h.b16 %v461
        %v1217 = vunpack.c.l.b16 %v462
        %v1218 = vunpack.c.h.b16 %v462
        %v1219 = vunpack.c.l.b16 %v463
        %v1220 = vunpack.c.h.b16 %v463
        %v1221 = vunpack.c.l.b16 %v464
        %v1222 = vunpack.c.h.b16 %v464
        %v1223 = vunpack.c.l.b16 %v465
        %v1224 = vunpack.c.h.b16 %v465
        %v1225 = vunpack.c.l.b16 %v466
        %v1226 = vunpack.c.h.b16 %v466
        %v1227 = vunpack.c.l.b16 %v467
        %v1228 = vunpack.c.h.b16 %v467
        %v1229 = vunpack.c.l.b16 %v468
        %v1230 = vunpack.c.h.b16 %v468
        %v1231 = vunpack.c.l.b16 %v469
        %v1232 = vunpack.c.h.b16 %v469
        %v1233 = vunpack.c.l.b16 %v470
        %v1234 = vunpack.c.h.b16 %v470
        %v1235 = vunpack.c.l.b16 %v471
        %v1236 = vunpack.c.h.b16 %v471
        %v1237 = vunpack.c.l.b16 %v472
        %v1238 = vunpack.c.h.b16 %v472
        %v1239 = vunpack.c.l.b16 %v473
        %v1240 = vunpack.c.h.b16 %v473
        %v1241 = vunpack.c.l.b16 %v474
        %v1242 = vunpack.c.h.b16 %v474
        %v1243 = vunpack.c.l.b16 %v475
        %v1244 = vunpack.c.h.b16 %v475
        %v1245 = vunpack.c.l.b16 %v476
        %v1246 = vunpack.c.h.b16 %v476
        %v1247 = vunpack.c.l.b16 %v477
        %v1248 = vunpack.c.h.b16 %v477
        %v1249 = vunpack.c.l.b16 %v478
        %v1250 = vunpack.c.h.b16 %v478
        %v1251 = vunpack.c.l.b16 %v479
        %v1252 = vunpack.c.h.b16 %v479
        %v1253 = vunpack.c.l.b16 %v480
        %v1254 = vunpack.c.h.b16 %v480
        %v1255 = vunpack.c.l.b16 %v481
        %v1256 = vunpack.c.h.b16 %v481
        %v1257 = vunpack.c.l.b16 %v482
        %v1258 = vunpack.c.h.b16 %v482
        %v1259 = vunpack.c.l.b16 %v483
        %v1260 = vunpack.c.h.b16 %v483
        %v1261 = vunpack.c.l.b16 %v484
        %v1262 = vunpack.c.h.b16 %v484
        %v1263 = vunpack.c.l.b16 %v485
        %v1264 = vunpack.c.h.b16 %v485
        %v1265 = vunpack.c.l.b16 %v486
        %v1266 = vunpack.c.h.b16 %v486
        %v1267 = vunpack.c.l.b16 %v487
        %v1268 = vunpack.c.h.b16 %v487
        %v1269 = vunpack.c.l.b16 %v488
        %v1270 = vunpack.c.h.b16 %v488
        %v1271 = vunpack.c.l.b16 %v489
        %v1272 = vunpack.c.h.b16 %v489
        %v1273 = vunpack.c.l.b16 %v490
        %v1274 = vunpack.c.h.b16 %v490
        %v1275 = vunpack.c.l.b16 %v491
        %v1276 = vunpack.c.h.b16 %v491
        %v1277 = vunpack.c.l.b16 %v492
        %v1278 = vunpack.c.h.b16 %v492
        %v1279 = vunpack.c.l.b16 %v493
        %v1280 = vunpack.c.h.b16 %v493
        %v1281 = vunpack.c.l.b16 %v494
        %v1282 = vunpack.c.h.b16 %v494
        %v1283 = vunpack.c.l.b16 %v495
        %v1284 = vunpack.c.h.b16 %v495
        %v1285 = vunpack.c.l.b16 %v496
        %v1286 = vunpack.c.h.b16 %v496
        %v1287 = vunpack.c.l.b16 %v497
        %v1288 = vunpack.c.h.b16 %v497
        %v1289 = vunpack.c.l.b16 %v498
        %v1290 = vunpack.c.h.b16 %v498
        %v1291 = vunpack.c.l.b16 %v499
        %v1292 = vunpack.c.h.b16 %v499
        %v1293 = vunpack.c.l.b16 %v500
        %v1294 = vunpack.c.h.b16 %v500
        %v1295 = vunpack.c.l.b16 %v501
        %v1296 = vunpack.c.h.b16 %v501
        %v1297 = vunpack.c.l.b16 %v502
        %v1298 = vunpack.c.h.b16 %v502
        %v1299 = vunpack.c.l.b16 %v503
        %v1300 = vunpack.c.h.b16 %v503
        %v1301 = vunpack.c.l.b16 %v504
        %v1302 = vunpack.c.h.b16 %v504
        %v1303 = vunpack.c.l.b16 %v505
        %v1304 = vunpack.c.h.b16 %v505
        %v1305 = vunpack.c.l.b16 %v506
        %v1306 = vunpack.c.h.b16 %v506
        %v1307 = vunpack.c.l.b16 %v507
        %v1308 = vunpack.c.h.b16 %v507
        %v1309 = vunpack.c.l.b16 %v508
        %v1310 = vunpack.c.h.b16 %v508
        %v1311 = vunpack.c.l.b16 %v509
        %v1312 = vunpack.c.h.b16 %v509
        %v1313 = vunpack.c.l.b16 %v510
        %v1314 = vunpack.c.h.b16 %v510
        %v1315 = vunpack.c.l.b16 %v511
        %v1316 = vunpack.c.h.b16 %v511
        %v1317 = vunpack.c.l.b16 %v512
        %v1318 = vunpack.c.h.b16 %v512
        %v1319 = vunpack.c.l.b16 %v513
        %v1320 = vunpack.c.h.b16 %v513
        %v1321 = vunpack.c.l.b16 %v514
        %v1322 = vunpack.c.h.b16 %v514
        %v1323 = vunpack.c.l.b16 %v515
        %v1324 = vunpack.c.h.b16 %v515
        %v1325 = vunpack.c.l.b16 %v516
        %v1326 = vunpack.c.h.b16 %v516
        %v1327 = vunpack.c.l.b16 %v517
        %v1328 = vunpack.c.h.b16 %v517
        %v1329 = vunpack.c.l.b16 %v518
        %v1330 = vunpack.c.h.b16 %v518
        %v1331 = vunpack.c.l.b16 %v519
        %v1332 = vunpack.c.h.b16 %v519
        %v1333 = vunpack.c.l.b16 %v520
        %v1334 = vunpack.c.h.b16 %v520
        %v1335 = vunpack.c.l.b16 %v521
        %v1336 = vunpack.c.h.b16 %v521
        %v1337 = vunpack.c.l.b16 %v522
        %v1338 = vunpack.c.h.b16 %v522
        %v1339 = vunpack.c.l.b16 %v523
        %v1340 = vunpack.c.h.b16 %v523
        %v1341 = vunpack.c.l.b16 %v524
        %v1342 = vunpack.c.h.b16 %v524
        %v1343 = vunpack.c.l.b16 %v525
        %v1344 = vunpack.c.h.b16 %v525
        %v1345 = vunpack.c.l.b16 %v526
        %v1346 = vunpack.c.h.b16 %v526
        %v1347 = vunpack.c.l.b16 %v527
        %v1348 = vunpack.c.h.b16 %v527
        %v1349 = vunpack.c.l.b16 %v528
        %v1350 = vunpack.c.h.b16 %v528
        %v1351 = vunpack.c.l.b16 %v529
        %v1352 = vunpack.c.h.b16 %v529
        %v1353 = vunpack.c.l.b16 %v530
        %v1354 = vunpack.c.h.b16 %v530
        %v1355 = vunpack.c.l.b16 %v531
        %v1356 = vunpack.c.h.b16 %v531
        %v1357 = vunpack.c.l.b16 %v532
        %v1358 = vunpack.c.h.b16 %v532
        %v1359 = vunpack.c.l.b16 %v533
        %v1360 = vunpack.c.h.b16 %v533
        %v1361 = vunpack.c.l.b16 %v534
        %v1362 = vunpack.c.h.b16 %v534
        %v1363 = vunpack.c.l.b16 %v535
        %v1364 = vunpack.c.h.b16 %v535
        %v1365 = vunpack.c.l.b16 %v536
        %v1366 = vunpack.c.h.b16 %v536
        %v1367 = vunpack.c.l.b16 %v537
        %v1368 = vunpack.c.h.b16 %v537
        %v1369 = vunpack.c.l.b16 %v538
        %v1370 = vunpack.c.h.b16 %v538
        %v1371 = vunpack.c.l.b16 %v539
        %v1372 = vunpack.c.h.b16 %v539
        %v1373 = vunpack.c.l.b16 %v540
        %v1374 = vunpack.c.h.b16 %v540
        %v1375 = vunpack.c.l.b16 %v541
        %v1376 = vunpack.c.h.b16 %v541
        %v1377 = vunpack.c.l.b16 %v542
        %v1378 = vunpack.c.h.b16 %v542
        %v1379 = vunpack.c.l.b16 %v543
        %v1380 = vunpack.c.h.b16 %v543
        %v1381 = vunpack.c.l.b16 %v544
        %v1382 = vunpack.c.h.b16 %v544
        %v1383 = vunpack.c.l.b16 %v545
        %v1384 = vunpack.c.h.b16 %v545
        %v1385 = vunpack.c.l.b16 %v546
        %v1386 = vunpack.c.h.b16 %v546
        %v1387 = vunpack.c.l.b16 %v547
        %v1388 = vunpack.c.h.b16 %v547
        %v1389 = vunpack.c.l.b16 %v548
        %v1390 = vunpack.c.h.b16 %v548
        %v1391 = vunpack.c.l.b16 %v549
        %v1392 = vunpack.c.h.b16 %v549
        %v1393 = vunpack.c.l.b16 %v550
        %v1394 = vunpack.c.h.b16 %v550
        %v1395 = vunpack.c.l.b16 %v551
        %v1396 = vunpack.c.h.b16 %v551
        %v1397 = vunpack.c.l.b16 %v552
        %v1398 = vunpack.c.h.b16 %v552
        %v1399 = vunpack.c.l.b16 %v553
        %v1400 = vunpack.c.h.b16 %v553
        %v1401 = vunpack.c.l.b16 %v554
        %v1402 = vunpack.c.h.b16 %v554
        %v1403 = vunpack.c.l.b16 %v555
        %v1404 = vunpack.c.h.b16 %v555
        %v1405 = vunpack.c.l.b16 %v556
        %v1406 = vunpack.c.h.b16 %v556
        %v1407 = vunpack.c.l.b16 %v557
        %v1408 = vunpack.c.h.b16 %v557
        %v1409 = vunpack.c.l.b16 %v558
        %v1410 = vunpack.c.h.b16 %v558
        %v1411 = vunpack.c.l.b16 %v559
        %v1412 = vunpack.c.h.b16 %v559
        %v1413 = vunpack.c.l.b16 %v560
        %v1414 = vunpack.c.h.b16 %v560
        %v1415 = vunpack.c.l.b16 %v561
        %v1416 = vunpack.c.h.b16 %v561
        %v1417 = vunpack.c.l.b16 %v562
        %v1418 = vunpack.c.h.b16 %v562
        %v1419 = vunpack.c.l.b16 %v563
        %v1420 = vunpack.c.h.b16 %v563
        %v1421 = vunpack.c.l.b16 %v564
        %v1422 = vunpack.c.h.b16 %v564
        %v1423 = vunpack.c.l.b16 %v565
        %v1424 = vunpack.c.h.b16 %v565
        %v1425 = vunpack.c.l.b16 %v566
        %v1426 = vunpack.c.h.b16 %v566
        %v1427 = vunpack.c.l.b16 %v567
        %v1428 = vunpack.c.h.b16 %v567
        %v1429 = vunpack.c.l.b16 %v568
        %v1430 = vunpack.c.h.b16 %v568
        %v1431 = vunpack.c.l.b16 %v569
        %v1432 = vunpack.c.h.b16 %v569
        %v1433 = vunpack.c.l.b16 %v570
        %v1434 = vunpack.c.h.b16 %v570
        %v1435 = vunpack.c.l.b16 %v571
        %v1436 = vunpack.c.h.b16 %v571
        %v1437 = vunpack.c.l.b16 %v572
        %v1438 = vunpack.c.h.b16 %v572
        %v1439 = vunpack.c.l.b16 %v573
        %v1440 = vunpack.c.h.b16 %v573
        %v1441 = vunpack.c.l.b16 %v574
        %v1442 = vunpack.c.h.b16 %v574
        %v1443 = vunpack.c.l.b16 %v575
        %v1444 = vunpack.c.h.b16 %v575
        %v1445 = vunpack.c.l.b16 %v576
        %v1446 = vunpack.c.h.b16 %v576
        %v1447 = vunpack.c.l.b16 %v577
        %v1448 = vunpack.c.h.b16 %v577
        %v1449 = vunpack.c.l.b16 %v578
        %v1450 = vunpack.c.h.b16 %v578
        %v1451 = vunpack.c.l.b16 %v579
        %v1452 = vunpack.c.h.b16 %v579
        %v1453 = vunpack.c.l.b16 %v580
        %v1454 = vunpack.c.h.b16 %v580
        %v1455 = vunpack.c.l.b16 %v581
        %v1456 = vunpack.c.h.b16 %v581
        %v1457 = vunpack.c.l.b16 %v582
        %v1458 = vunpack.c.h.b16 %v582
        %v1459 = vunpack.c.l.b16 %v583
        %v1460 = vunpack.c.h.b16 %v583
        %v1461 = vunpack.c.l.b16 %v584
        %v1462 = vunpack.c.h.b16 %v584
        %v1463 = vunpack.c.l.b16 %v585
        %v1464 = vunpack.c.h.b16 %v585
        %v1465 = vunpack.c.l.b16 %v586
        %v1466 = vunpack.c.h.b16 %v586
        %v1467 = vunpack.c.l.b16 %v587
        %v1468 = vunpack.c.h.b16 %v587
        %v1469 = vunpack.c.l.b16 %v588
        %v1470 = vunpack.c.h.b16 %v588
        %v1471 = vunpack.c.l.b16 %v589
        %v1472 = vunpack.c.h.b16 %v589
        %v1473 = vunpack.c.l.b16 %v590
        %v1474 = vunpack.c.h.b16 %v590
        %v1475 = vunpack.c.l.b16 %v591
        %v1476 = vunpack.c.h.b16 %v591
        %v1477 = vunpack.c.l.b16 %v592
        %v1478 = vunpack.c.h.b16 %v592
        %v1479 = vunpack.c.l.b16 %v593
        %v1480 = vunpack.c.h.b16 %v593
        %v1481 = vunpack.c.l.b16 %v594
        %v1482 = vunpack.c.h.b16 %v594
        %v1483 = vunpack.c.l.b16 %v595
        %v1484 = vunpack.c.h.b16 %v595
        %v1485 = vunpack.c.l.b16 %v596
        %v1486 = vunpack.c.h.b16 %v596
        %v1487 = vunpack.c.l.b16 %v597
        %v1488 = vunpack.c.h.b16 %v597
        %v1489 = vunpack.c.l.b16 %v598
        %v1490 = vunpack.c.h.b16 %v598
        %v1491 = vpack.c.b16 %v927, %v915
        %v1492 = vpack.c.b16 %v928, %v916
        %v1493 = vpack.c.b16 %v929, %v917
        %v1494 = vpack.c.b16 %v930, %v918
        %v1495 = vpack.c.b16 %v931, %v919
        %v1496 = vpack.c.b16 %v932, %v920
        %v1497 = vpack.c.b16 %v933, %v921
        %v1498 = vpack.c.b16 %v934, %v922
        %v1499 = vpack.c.b16 %v935, %v923
        %v1500 = vpack.c.b16 %v936, %v924
        %v1501 = vpack.c.b16 %v937, %v925
        %v1502 = vpack.c.b16 %v938, %v926
        %v1503 = vpack.c.b16 %v951, %v939
        %v1504 = vpack.c.b16 %v952, %v940
        %v1505 = vpack.c.b16 %v953, %v941
        %v1506 = vpack.c.b16 %v954, %v942
        %v1507 = vpack.c.b16 %v955, %v943
        %v1508 = vpack.c.b16 %v956, %v944
        %v1509 = vpack.c.b16 %v957, %v945
        %v1510 = vpack.c.b16 %v958, %v946
        %v1511 = vpack.c.b16 %v959, %v947
        %v1512 = vpack.c.b16 %v960, %v948
        %v1513 = vpack.c.b16 %v961, %v949
        %v1514 = vpack.c.b16 %v962, %v950
        %v1515 = vpack.c.b16 %v975, %v963
        %v1516 = vpack.c.b16 %v976, %v964
        %v1517 = vpack.c.b16 %v977, %v965
        %v1518 = vpack.c.b16 %v978, %v966
        %v1519 = vpack.c.b16 %v979, %v967
        %v1520 = vpack.c.b16 %v980, %v968
        %v1521 = vpack.c.b16 %v981, %v969
        %v1522 = vpack.c.b16 %v982, %v970
        %v1523 = vpack.c.b16 %v983, %v971
        %v1524 = vpack.c.b16 %v984, %v972
        %v1525 = vpack.c.b16 %v985, %v973
        %v1526 = vpack.c.b16 %v986, %v974
        %v1527 = vpack.c.b16 %v999, %v987
        %v1528 = vpack.c.b16 %v1000, %v988
        %v1529 = vpack.c.b16 %v1001, %v989
        %v1530 = vpack.c.b16 %v1002, %v990
        %v1531 = vpack.c.b16 %v1003, %v991
        %v1532 = vpack.c.b16 %v1004, %v992
        %v1533 = vpack.c.b16 %v1005, %v993
        %v1534 = vpack.c.b16 %v1006, %v994
        %v1535 = vpack.c.b16 %v1007, %v995
        %v1536 = vpack.c.b16 %v1008, %v996
        %v1537 = vpack.c.b16 %v1009, %v997
        %v1538 = vpack.c.b16 %v1010, %v998
        %v1539 = vpack.c.b16 %v1023, %v1011
        %v1540 = vpack.c.b16 %v1024, %v1012
        %v1541 = vpack.c.b16 %v1025, %v1013
        %v1542 = vpack.c.b16 %v1026, %v1014
        %v1543 = vpack.c.b16 %v1027, %v1015
        %v1544 = vpack.c.b16 %v1028, %v1016
        %v1545 = vpack.c.b16 %v1029, %v1017
        %v1546 = vpack.c.b16 %v1030, %v1018
        %v1547 = vpack.c.b16 %v1031, %v1019
        %v1548 = vpack.c.b16 %v1032, %v1020
        %v1549 = vpack.c.b16 %v1033, %v1021
        %v1550 = vpack.c.b16 %v1034, %v1022
        %v1551 = vpack.c.b16 %v1047, %v1035
        %v1552 = vpack.c.b16 %v1048, %v1036
        %v1553 = vpack.c.b16 %v1049, %v1037
        %v1554 = vpack.c.b16 %v1050, %v1038
        %v1555 = vpack.c.b16 %v1051, %v1039
        %v1556 = vpack.c.b16 %v1052, %v1040
        %v1557 = vpack.c.b16 %v1053, %v1041
        %v1558 = vpack.c.b16 %v1054, %v1042
        %v1559 = vpack.c.b16 %v1055, %v1043
        %v1560 = vpack.c.b16 %v1056, %v1044
        %v1561 = vpack.c.b16 %v1057, %v1045
        %v1562 = vpack.c.b16 %v1058, %v1046
        %v1563 = vpack.c.b16 %v1071, %v1059
        %v1564 = vpack.c.b16 %v1072, %v1060
        %v1565 = vpack.c.b16 %v1073, %v1061
        %v1566 = vpack.c.b16 %v1074, %v1062
        %v1567 = vpack.c.b16 %v1075, %v1063
        %v1568 = vpack.c.b16 %v1076, %v1064
        %v1569 = vpack.c.b16 %v1077, %v1065
        %v1570 = vpack.c.b16 %v1078, %v1066
        %v1571 = vpack.c.b16 %v1079, %v1067
        %v1572 = vpack.c.b16 %v1080, %v1068
        %v1573 = vpack.c.b16 %v1081, %v1069
        %v1574 = vpack.c.b16 %v1082, %v1070
        %v1575 = vpack.c.b16 %v1095, %v1083
        %v1576 = vpack.c.b16 %v1096, %v1084
        %v1577 = vpack.c.b16 %v1097, %v1085
        %v1578 = vpack.c.b16 %v1098, %v1086
        %v1579 = vpack.c.b16 %v1099, %v1087
        %v1580 = vpack.c.b16 %v1100, %v1088
        %v1581 = vpack.c.b16 %v1101, %v1089
        %v1582 = vpack.c.b16 %v1102, %v1090
        %v1583 = vpack.c.b16 %v1103, %v1091
        %v1584 = vpack.c.b16 %v1104, %v1092
        %v1585 = vpack.c.b16 %v1105, %v1093
        %v1586 = vpack.c.b16 %v1106, %v1094
        %v1587 = vpack.c.b16 %v1119, %v1107
        %v1588 = vpack.c.b16 %v1120, %v1108
        %v1589 = vpack.c.b16 %v1121, %v1109
        %v1590 = vpack.c.b16 %v1122, %v1110
        %v1591 = vpack.c.b16 %v1123, %v1111
        %v1592 = vpack.c.b16 %v1124, %v1112
        %v1593 = vpack.c.b16 %v1125, %v1113
        %v1594 = vpack.c.b16 %v1126, %v1114
        %v1595 = vpack.c.b16 %v1127, %v1115
        %v1596 = vpack.c.b16 %v1128, %v1116
        %v1597 = vpack.c.b16 %v1129, %v1117
        %v1598 = vpack.c.b16 %v1130, %v1118
        %v1599 = vpack.c.b16 %v1143, %v1131
        %v1600 = vpack.c.b16 %v1144, %v1132
        %v1601 = vpack.c.b16 %v1145, %v1133
        %v1602 = vpack.c.b16 %v1146, %v1134
        %v1603 = vpack.c.b16 %v1147, %v1135
        %v1604 = vpack.c.b16 %v1148, %v1136
        %v1605 = vpack.c.b16 %v1149, %v1137
        %v1606 = vpack.c.b16 %v1150, %v1138
        %v1607 = vpack.c.b16 %v1151, %v1139
        %v1608 = vpack.c.b16 %v1152, %v1140
        %v1609 = vpack.c.b16 %v1153, %v1141
        %v1610 = vpack.c.b16 %v1154, %v1142
        %v1611 = vpack.c.b16 %v1167, %v1155
        %v1612 = vpack.c.b16 %v1168, %v1156
        %v1613 = vpack.c.b16 %v1169, %v1157
        %v1614 = vpack.c.b16 %v1170, %v1158
        %v1615 = vpack.c.b16 %v1171, %v1159
        %v1616 = vpack.c.b16 %v1172, %v1160
        %v1617 = vpack.c.b16 %v1173, %v1161
        %v1618 = vpack.c.b16 %v1174, %v1162
        %v1619 = vpack.c.b16 %v1175, %v1163
        %v1620 = vpack.c.b16 %v1176, %v1164
        %v1621 = vpack.c.b16 %v1177, %v1165
        %v1622 = vpack.c.b16 %v1178, %v1166
        %v1623 = vpack.c.b16 %v1191, %v1179
        %v1624 = vpack.c.b16 %v1192, %v1180
        %v1625 = vpack.c.b16 %v1193, %v1181
        %v1626 = vpack.c.b16 %v1194, %v1182
        %v1627 = vpack.c.b16 %v1195, %v1183
        %v1628 = vpack.c.b16 %v1196, %v1184
        %v1629 = vpack.c.b16 %v1197, %v1185
        %v1630 = vpack.c.b16 %v1198, %v1186
        %v1631 = vpack.c.b16 %v1199, %v1187
        %v1632 = vpack.c.b16 %v1200, %v1188
        %v1633 = vpack.c.b16 %v1201, %v1189
        %v1634 = vpack.c.b16 %v1202, %v1190
        %v1635 = vpack.c.b16 %v1215, %v1203
        %v1636 = vpack.c.b16 %v1216, %v1204
        %v1637 = vpack.c.b16 %v1217, %v1205
        %v1638 = vpack.c.b16 %v1218, %v1206
        %v1639 = vpack.c.b16 %v1219, %v1207
        %v1640 = vpack.c.b16 %v1220, %v1208
        %v1641 = vpack.c.b16 %v1221, %v1209
        %v1642 = vpack.c.b16 %v1222, %v1210
        %v1643 = vpack.c.b16 %v1223, %v1211
        %v1644 = vpack.c.b16 %v1224, %v1212
        %v1645 = vpack.c.b16 %v1225, %v1213
        %v1646 = vpack.c.b16 %v1226, %v1214
        %v1647 = vpack.c.b16 %v1239, %v1227
        %v1648 = vpack.c.b16 %v1240, %v1228
        %v1649 = vpack.c.b16 %v1241, %v1229
        %v1650 = vpack.c.b16 %v1242, %v1230
        %v1651 = vpack.c.b16 %v1243, %v1231
        %v1652 = vpack.c.b16 %v1244, %v1232
        %v1653 = vpack.c.b16 %v1245, %v1233
        %v1654 = vpack.c.b16 %v1246, %v1234
        %v1655 = vpack.c.b16 %v1247, %v1235
        %v1656 = vpack.c.b16 %v1248, %v1236
        %v1657 = vpack.c.b16 %v1249, %v1237
        %v1658 = vpack.c.b16 %v1250, %v1238
        %v1659 = vpack.c.b16 %v1263, %v1251
        %v1660 = vpack.c.b16 %v1264, %v1252
        %v1661 = vpack.c.b16 %v1265, %v1253
        %v1662 = vpack.c.b16 %v1266, %v1254
        %v1663 = vpack.c.b16 %v1267, %v1255
        %v1664 = vpack.c.b16 %v1268, %v1256
        %v1665 = vpack.c.b16 %v1269, %v1257
        %v1666 = vpack.c.b16 %v1270, %v1258
        %v1667 = vpack.c.b16 %v1271, %v1259
        %v1668 = vpack.c.b16 %v1272, %v1260
        %v1669 = vpack.c.b16 %v1273, %v1261
        %v1670 = vpack.c.b16 %v1274, %v1262
        %v1671 = vpack.c.b16 %v1287, %v1275
        %v1672 = vpack.c.b16 %v1288, %v1276
        %v1673 = vpack.c.b16 %v1289, %v1277
        %v1674 = vpack.c.b16 %v1290, %v1278
        %v1675 = vpack.c.b16 %v1291, %v1279
        %v1676 = vpack.c.b16 %v1292, %v1280
        %v1677 = vpack.c.b16 %v1293, %v1281
        %v1678 = vpack.c.b16 %v1294, %v1282
        %v1679 = vpack.c.b16 %v1295, %v1283
        %v1680 = vpack.c.b16 %v1296, %v1284
        %v1681 = vpack.c.b16 %v1297, %v1285
        %v1682 = vpack.c.b16 %v1298, %v1286
        %v1683 = vpack.c.b16 %v1311, %v1299
        %v1684 = vpack.c.b16 %v1312, %v1300
        %v1685 = vpack.c.b16 %v1313, %v1301
        %v1686 = vpack.c.b16 %v1314, %v1302
        %v1687 = vpack.c.b16 %v1315, %v1303
        %v1688 = vpack.c.b16 %v1316, %v1304
        %v1689 = vpack.c.b16 %v1317, %v1305
        %v1690 = vpack.c.b16 %v1318, %v1306
        %v1691 = vpack.c.b16 %v1319, %v1307
        %v1692 = vpack.c.b16 %v1320, %v1308
        %v1693 = vpack.c.b16 %v1321, %v1309
        %v1694 = vpack.c.b16 %v1322, %v1310
        %v1695 = vpack.c.b16 %v1335, %v1323
        %v1696 = vpack.c.b16 %v1336, %v1324
        %v1697 = vpack.c.b16 %v1337, %v1325
        %v1698 = vpack.c.b16 %v1338, %v1326
        %v1699 = vpack.c.b16 %v1339, %v1327
        %v1700 = vpack.c.b16 %v1340, %v1328
        %v1701 = vpack.c.b16 %v1341, %v1329
        %v1702 = vpack.c.b16 %v1342, %v1330
        %v1703 = vpack.c.b16 %v1343, %v1331
        %v1704 = vpack.c.b16 %v1344, %v1332
        %v1705 = vpack.c.b16 %v1345, %v1333
        %v1706 = vpack.c.b16 %v1346, %v1334
        %v1707 = vpack.c.b16 %v1359, %v1347
        %v1708 = vpack.c.b16 %v1360, %v1348
        %v1709 = vpack.c.b16 %v1361, %v1349
        %v1710 = vpack.c.b16 %v1362, %v1350
        %v1711 = vpack.c.b16 %v1363, %v1351
        %v1712 = vpack.c.b16 %v1364, %v1352
        %v1713 = vpack.c.b16 %v1365, %v1353
        %v1714 = vpack.c.b16 %v1366, %v1354
        %v1715 = vpack.c.b16 %v1367, %v1355
        %v1716 = vpack.c.b16 %v1368, %v1356
        %v1717 = vpack.c.b16 %v1369, %v1357
        %v1718 = vpack.c.b16 %v1370, %v1358
        %v1719 = vpack.c.b16 %v1383, %v1371
        %v1720 = vpack.c.b16 %v1384, %v1372
        %v1721 = vpack.c.b16 %v1385, %v1373
        %v1722 = vpack.c.b16 %v1386, %v1374
        %v1723 = vpack.c.b16 %v1387, %v1375
        %v1724 = vpack.c.b16 %v1388, %v1376
        %v1725 = vpack.c.b16 %v1389, %v1377
        %v1726 = vpack.c.b16 %v1390, %v1378
        %v1727 = vpack.c.b16 %v1391, %v1379
        %v1728 = vpack.c.b16 %v1392, %v1380
        %v1729 = vpack.c.b16 %v1393, %v1381
        %v1730 = vpack.c.b16 %v1394, %v1382
        %v1731 = vpack.c.b16 %v1407, %v1395
        %v1732 = vpack.c.b16 %v1408, %v1396
        %v1733 = vpack.c.b16 %v1409, %v1397
        %v1734 = vpack.c.b16 %v1410, %v1398
        %v1735 = vpack.c.b16 %v1411, %v1399
        %v1736 = vpack.c.b16 %v1412, %v1400
        %v1737 = vpack.c.b16 %v1413, %v1401
        %v1738 = vpack.c.b16 %v1414, %v1402
        %v1739 = vpack.c.b16 %v1415, %v1403
        %v1740 = vpack.c.b16 %v1416, %v1404
        %v1741 = vpack.c.b16 %v1417, %v1405
        %v1742 = vpack.c.b16 %v1418, %v1406
        %v1743 = vpack.c.b16 %v1431, %v1419
        %v1744 = vpack.c.b16 %v1432, %v1420
        %v1745 = vpack.c.b16 %v1433, %v1421
        %v1746 = vpack.c.b16 %v1434, %v1422
        %v1747 = vpack.c.b16 %v1435, %v1423
        %v1748 = vpack.c.b16 %v1436, %v1424
        %v1749 = vpack.c.b16 %v1437, %v1425
        %v1750 = vpack.c.b16 %v1438, %v1426
        %v1751 = vpack.c.b16 %v1439, %v1427
        %v1752 = vpack.c.b16 %v1440, %v1428
        %v1753 = vpack.c.b16 %v1441, %v1429
        %v1754 = vpack.c.b16 %v1442, %v1430
        %v1755 = vpack.c.b16 %v1455, %v1443
        %v1756 = vpack.c.b16 %v1456, %v1444
        %v1757 = vpack.c.b16 %v1457, %v1445
        %v1758 = vpack.c.b16 %v1458, %v1446
        %v1759 = vpack.c.b16 %v1459, %v1447
        %v1760 = vpack.c.b16 %v1460, %v1448
        %v1761 = vpack.c.b16 %v1461, %v1449
        %v1762 = vpack.c.b16 %v1462, %v1450
        %v1763 = vpack.c.b16 %v1463, %v1451
        %v1764 = vpack.c.b16 %v1464, %v1452
        %v1765 = vpack.c.b16 %v1465, %v1453
        %v1766 = vpack.c.b16 %v1466, %v1454
        %v1767 = vpack.c.b16 %v1479, %v1467
        %v1768 = vpack.c.b16 %v1480, %v1468
        %v1769 = vpack.c.b16 %v1481, %v1469
        %v1770 = vpack.c.b16 %v1482, %v1470
        %v1771 = vpack.c.b16 %v1483, %v1471
        %v1772 = vpack.c.b16 %v1484, %v1472
        %v1773 = vpack.c.b16 %v1485, %v1473
        %v1774 = vpack.c.b16 %v1486, %v1474
        %v1775 = vpack.c.b16 %v1487, %v1475
        %v1776 = vpack.c.b16 %v1488, %v1476
        %v1777 = vpack.c.b16 %v1489, %v1477
        %v1778 = vpack.c.b16 %v1490, %v1478
        %2067 = vmatpush.bf16.msra.mxu0 %v1575
        %2068 = vmatpush.bf16.msra.mxu0 %v1563
        %2069 = vmatpush.bf16.msra.mxu0 %v1551
        %2070 = vmatpush.bf16.msra.mxu0 %v1539
        %2071 = vmatpush.bf16.msra.mxu0 %v1527
        %2072 = vmatpush.bf16.msra.mxu0 %v1515
        %2073 = vmatpush.bf16.msra.mxu0 %v1503
        %2074 = vmatpush.bf16.msra.mxu0 %v1491
        %2075 = vmatmul.bf16.gmra.mxu0 %v308
        %v2076 = vpop.f32.mrf.mxu0
        %v2077 = vadd.f32 %v603, %v2076
        %v2078 = vpop.f32.mrf.mxu0
        %2079 = vdwg.mxu0
        %2080 = vmatpush.bf16.msra.mxu0 %v1671
        %2081 = vmatpush.bf16.msra.mxu0 %v1659
        %2082 = vmatpush.bf16.msra.mxu0 %v1647
        %2083 = vmatpush.bf16.msra.mxu0 %v1635
        %2084 = vmatpush.bf16.msra.mxu0 %v1623
        %2085 = vmatpush.bf16.msra.mxu0 %v1611
        %2086 = vmatpush.bf16.msra.mxu0 %v1599
        %2087 = vmatpush.bf16.msra.mxu0 %v1587
        %2088 = vmatmul.bf16.gmra.mxu0 %v309
        %v2089 = vpop.f32.mrf.mxu0
        %v2090 = vadd.f32 %v2077, %v2089
        %v2091 = vpop.f32.mrf.mxu0
        %2092 = vdwg.mxu0
        %2093 = vmatpush.bf16.msra.mxu0 %v1767
        %2094 = vmatpush.bf16.msra.mxu0 %v1755
        %2095 = vmatpush.bf16.msra.mxu0 %v1743
        %2096 = vmatpush.bf16.msra.mxu0 %v1731
        %2097 = vmatpush.bf16.msra.mxu0 %v1719
        %2098 = vmatpush.bf16.msra.mxu0 %v1707
        %2099 = vmatpush.bf16.msra.mxu0 %v1695
        %2100 = vmatpush.bf16.msra.mxu0 %v1683
        %2101 = vmatmul.bf16.gmra.mxu0 %v310
        %v2102 = vpop.f32.mrf.mxu0
        %v2103 = vadd.f32 %v2090, %v2102
        %v2104 = vpop.f32.mrf.mxu0
        %2105 = vdwg.mxu0
        %2106 = vmatpush.bf16.msra.mxu0 %v1576
        %2107 = vmatpush.bf16.msra.mxu0 %v1564
        %2108 = vmatpush.bf16.msra.mxu0 %v1552
        %2109 = vmatpush.bf16.msra.mxu0 %v1540
        %2110 = vmatpush.bf16.msra.mxu0 %v1528
        %2111 = vmatpush.bf16.msra.mxu0 %v1516
        %2112 = vmatpush.bf16.msra.mxu0 %v1504
        %2113 = vmatpush.bf16.msra.mxu0 %v1492
        %2114 = vmatmul.bf16.gmra.mxu0 %v308
        %v2115 = vpop.f32.mrf.mxu0
        %v2116 = vadd.f32 %v604, %v2115
        %v2117 = vpop.f32.mrf.mxu0
        %2118 = vdwg.mxu0
        %2119 = vmatpush.bf16.msra.mxu0 %v1672
        %2120 = vmatpush.bf16.msra.mxu0 %v1660
        %2121 = vmatpush.bf16.msra.mxu0 %v1648
        %2122 = vmatpush.bf16.msra.mxu0 %v1636
        %2123 = vmatpush.bf16.msra.mxu0 %v1624
        %2124 = vmatpush.bf16.msra.mxu0 %v1612
        %2125 = vmatpush.bf16.msra.mxu0 %v1600
        %2126 = vmatpush.bf16.msra.mxu0 %v1588
        %2127 = vmatmul.bf16.gmra.mxu0 %v309
        %v2128 = vpop.f32.mrf.mxu0
        %v2129 = vadd.f32 %v2116, %v2128
        %v2130 = vpop.f32.mrf.mxu0
        %2131 = vdwg.mxu0
        %2132 = vmatpush.bf16.msra.mxu0 %v1768
        %2133 = vmatpush.bf16.msra.mxu0 %v1756
        %2134 = vmatpush.bf16.msra.mxu0 %v1744
        %2135 = vmatpush.bf16.msra.mxu0 %v1732
        %2136 = vmatpush.bf16.msra.mxu0 %v1720
        %2137 = vmatpush.bf16.msra.mxu0 %v1708
        %2138 = vmatpush.bf16.msra.mxu0 %v1696
        %2139 = vmatpush.bf16.msra.mxu0 %v1684
        %2140 = vmatmul.bf16.gmra.mxu0 %v310
        %v2141 = vpop.f32.mrf.mxu0
        %v2142 = vadd.f32 %v2129, %v2141
        %v2143 = vpop.f32.mrf.mxu0
        %2144 = vdwg.mxu0
        %2145 = vmatpush.bf16.msra.mxu0 %v1577
        %2146 = vmatpush.bf16.msra.mxu0 %v1565
        %2147 = vmatpush.bf16.msra.mxu0 %v1553
        %2148 = vmatpush.bf16.msra.mxu0 %v1541
        %2149 = vmatpush.bf16.msra.mxu0 %v1529
        %2150 = vmatpush.bf16.msra.mxu0 %v1517
        %2151 = vmatpush.bf16.msra.mxu0 %v1505
        %2152 = vmatpush.bf16.msra.mxu0 %v1493
        %2153 = vmatmul.bf16.gmra.mxu0 %v308
        %v2154 = vpop.f32.mrf.mxu0
        %v2155 = vadd.f32 %v605, %v2154
        %v2156 = vpop.f32.mrf.mxu0
        %2157 = vdwg.mxu0
        %2158 = vmatpush.bf16.msra.mxu0 %v1673
        %2159 = vmatpush.bf16.msra.mxu0 %v1661
        %2160 = vmatpush.bf16.msra.mxu0 %v1649
        %2161 = vmatpush.bf16.msra.mxu0 %v1637
        %2162 = vmatpush.bf16.msra.mxu0 %v1625
        %2163 = vmatpush.bf16.msra.mxu0 %v1613
        %2164 = vmatpush.bf16.msra.mxu0 %v1601
        %2165 = vmatpush.bf16.msra.mxu0 %v1589
        %2166 = vmatmul.bf16.gmra.mxu0 %v309
        %v2167 = vpop.f32.mrf.mxu0
        %v2168 = vadd.f32 %v2155, %v2167
        %v2169 = vpop.f32.mrf.mxu0
        %2170 = vdwg.mxu0
        %2171 = vmatpush.bf16.msra.mxu0 %v1769
        %2172 = vmatpush.bf16.msra.mxu0 %v1757
        %2173 = vmatpush.bf16.msra.mxu0 %v1745
        %2174 = vmatpush.bf16.msra.mxu0 %v1733
        %2175 = vmatpush.bf16.msra.mxu0 %v1721
        %2176 = vmatpush.bf16.msra.mxu0 %v1709
        %2177 = vmatpush.bf16.msra.mxu0 %v1697
        %2178 = vmatpush.bf16.msra.mxu0 %v1685
        %2179 = vmatmul.bf16.gmra.mxu0 %v310
        %v2180 = vpop.f32.mrf.mxu0
        %v2181 = vadd.f32 %v2168, %v2180
        %v2182 = vpop.f32.mrf.mxu0
        %2183 = vdwg.mxu0
        %2184 = vmatpush.bf16.msra.mxu0 %v1578
        %2185 = vmatpush.bf16.msra.mxu0 %v1566
        %2186 = vmatpush.bf16.msra.mxu0 %v1554
        %2187 = vmatpush.bf16.msra.mxu0 %v1542
        %2188 = vmatpush.bf16.msra.mxu0 %v1530
        %2189 = vmatpush.bf16.msra.mxu0 %v1518
        %2190 = vmatpush.bf16.msra.mxu0 %v1506
        %2191 = vmatpush.bf16.msra.mxu0 %v1494
        %2192 = vmatmul.bf16.gmra.mxu0 %v308
        %v2193 = vpop.f32.mrf.mxu0
        %v2194 = vadd.f32 %v606, %v2193
        %v2195 = vpop.f32.mrf.mxu0
        %2196 = vdwg.mxu0
        %2197 = vmatpush.bf16.msra.mxu0 %v1674
        %2198 = vmatpush.bf16.msra.mxu0 %v1662
        %2199 = vmatpush.bf16.msra.mxu0 %v1650
        %2200 = vmatpush.bf16.msra.mxu0 %v1638
        %2201 = vmatpush.bf16.msra.mxu0 %v1626
        %2202 = vmatpush.bf16.msra.mxu0 %v1614
        %2203 = vmatpush.bf16.msra.mxu0 %v1602
        %2204 = vmatpush.bf16.msra.mxu0 %v1590
        %2205 = vmatmul.bf16.gmra.mxu0 %v309
        %v2206 = vpop.f32.mrf.mxu0
        %v2207 = vadd.f32 %v2194, %v2206
        %v2208 = vpop.f32.mrf.mxu0
        %2209 = vdwg.mxu0
        %2210 = vmatpush.bf16.msra.mxu0 %v1770
        %2211 = vmatpush.bf16.msra.mxu0 %v1758
        %2212 = vmatpush.bf16.msra.mxu0 %v1746
        %2213 = vmatpush.bf16.msra.mxu0 %v1734
        %2214 = vmatpush.bf16.msra.mxu0 %v1722
        %2215 = vmatpush.bf16.msra.mxu0 %v1710
        %2216 = vmatpush.bf16.msra.mxu0 %v1698
        %2217 = vmatpush.bf16.msra.mxu0 %v1686
        %2218 = vmatmul.bf16.gmra.mxu0 %v310
        %v2219 = vpop.f32.mrf.mxu0
        %v2220 = vadd.f32 %v2207, %v2219
        %v2221 = vpop.f32.mrf.mxu0
        %2222 = vdwg.mxu0
        %2223 = vmatpush.bf16.msra.mxu0 %v1579
        %2224 = vmatpush.bf16.msra.mxu0 %v1567
        %2225 = vmatpush.bf16.msra.mxu0 %v1555
        %2226 = vmatpush.bf16.msra.mxu0 %v1543
        %2227 = vmatpush.bf16.msra.mxu0 %v1531
        %2228 = vmatpush.bf16.msra.mxu0 %v1519
        %2229 = vmatpush.bf16.msra.mxu0 %v1507
        %2230 = vmatpush.bf16.msra.mxu0 %v1495
        %2231 = vmatmul.bf16.gmra.mxu0 %v308
        %v2232 = vpop.f32.mrf.mxu0
        %v2233 = vadd.f32 %v607, %v2232
        %v2234 = vpop.f32.mrf.mxu0
        %2235 = vdwg.mxu0
        %2236 = vmatpush.bf16.msra.mxu0 %v1675
        %2237 = vmatpush.bf16.msra.mxu0 %v1663
        %2238 = vmatpush.bf16.msra.mxu0 %v1651
        %2239 = vmatpush.bf16.msra.mxu0 %v1639
        %2240 = vmatpush.bf16.msra.mxu0 %v1627
        %2241 = vmatpush.bf16.msra.mxu0 %v1615
        %2242 = vmatpush.bf16.msra.mxu0 %v1603
        %2243 = vmatpush.bf16.msra.mxu0 %v1591
        %2244 = vmatmul.bf16.gmra.mxu0 %v309
        %v2245 = vpop.f32.mrf.mxu0
        %v2246 = vadd.f32 %v2233, %v2245
        %v2247 = vpop.f32.mrf.mxu0
        %2248 = vdwg.mxu0
        %2249 = vmatpush.bf16.msra.mxu0 %v1771
        %2250 = vmatpush.bf16.msra.mxu0 %v1759
        %2251 = vmatpush.bf16.msra.mxu0 %v1747
        %2252 = vmatpush.bf16.msra.mxu0 %v1735
        %2253 = vmatpush.bf16.msra.mxu0 %v1723
        %2254 = vmatpush.bf16.msra.mxu0 %v1711
        %2255 = vmatpush.bf16.msra.mxu0 %v1699
        %2256 = vmatpush.bf16.msra.mxu0 %v1687
        %2257 = vmatmul.bf16.gmra.mxu0 %v310
        %v2258 = vpop.f32.mrf.mxu0
        %v2259 = vadd.f32 %v2246, %v2258
        %v2260 = vpop.f32.mrf.mxu0
        %2261 = vdwg.mxu0
        %2262 = vmatpush.bf16.msra.mxu0 %v1580
        %2263 = vmatpush.bf16.msra.mxu0 %v1568
        %2264 = vmatpush.bf16.msra.mxu0 %v1556
        %2265 = vmatpush.bf16.msra.mxu0 %v1544
        %2266 = vmatpush.bf16.msra.mxu0 %v1532
        %2267 = vmatpush.bf16.msra.mxu0 %v1520
        %2268 = vmatpush.bf16.msra.mxu0 %v1508
        %2269 = vmatpush.bf16.msra.mxu0 %v1496
        %2270 = vmatmul.bf16.gmra.mxu0 %v308
        %v2271 = vpop.f32.mrf.mxu0
        %v2272 = vadd.f32 %v608, %v2271
        %v2273 = vpop.f32.mrf.mxu0
        %2274 = vdwg.mxu0
        %2275 = vmatpush.bf16.msra.mxu0 %v1676
        %2276 = vmatpush.bf16.msra.mxu0 %v1664
        %2277 = vmatpush.bf16.msra.mxu0 %v1652
        %2278 = vmatpush.bf16.msra.mxu0 %v1640
        %2279 = vmatpush.bf16.msra.mxu0 %v1628
        %2280 = vmatpush.bf16.msra.mxu0 %v1616
        %2281 = vmatpush.bf16.msra.mxu0 %v1604
        %2282 = vmatpush.bf16.msra.mxu0 %v1592
        %2283 = vmatmul.bf16.gmra.mxu0 %v309
        %v2284 = vpop.f32.mrf.mxu0
        %v2285 = vadd.f32 %v2272, %v2284
        %v2286 = vpop.f32.mrf.mxu0
        %2287 = vdwg.mxu0
        %2288 = vmatpush.bf16.msra.mxu0 %v1772
        %2289 = vmatpush.bf16.msra.mxu0 %v1760
        %2290 = vmatpush.bf16.msra.mxu0 %v1748
        %2291 = vmatpush.bf16.msra.mxu0 %v1736
        %2292 = vmatpush.bf16.msra.mxu0 %v1724
        %2293 = vmatpush.bf16.msra.mxu0 %v1712
        %2294 = vmatpush.bf16.msra.mxu0 %v1700
        %2295 = vmatpush.bf16.msra.mxu0 %v1688
        %2296 = vmatmul.bf16.gmra.mxu0 %v310
        %v2297 = vpop.f32.mrf.mxu0
        %v2298 = vadd.f32 %v2285, %v2297
        %v2299 = vpop.f32.mrf.mxu0
        %2300 = vdwg.mxu0
        %2301 = vmatpush.bf16.msra.mxu0 %v1581
        %2302 = vmatpush.bf16.msra.mxu0 %v1569
        %2303 = vmatpush.bf16.msra.mxu0 %v1557
        %2304 = vmatpush.bf16.msra.mxu0 %v1545
        %2305 = vmatpush.bf16.msra.mxu0 %v1533
        %2306 = vmatpush.bf16.msra.mxu0 %v1521
        %2307 = vmatpush.bf16.msra.mxu0 %v1509
        %2308 = vmatpush.bf16.msra.mxu0 %v1497
        %2309 = vmatmul.bf16.gmra.mxu0 %v308
        %v2310 = vpop.f32.mrf.mxu0
        %v2311 = vadd.f32 %v609, %v2310
        %v2312 = vpop.f32.mrf.mxu0
        %2313 = vdwg.mxu0
        %2314 = vmatpush.bf16.msra.mxu0 %v1677
        %2315 = vmatpush.bf16.msra.mxu0 %v1665
        %2316 = vmatpush.bf16.msra.mxu0 %v1653
        %2317 = vmatpush.bf16.msra.mxu0 %v1641
        %2318 = vmatpush.bf16.msra.mxu0 %v1629
        %2319 = vmatpush.bf16.msra.mxu0 %v1617
        %2320 = vmatpush.bf16.msra.mxu0 %v1605
        %2321 = vmatpush.bf16.msra.mxu0 %v1593
        %2322 = vmatmul.bf16.gmra.mxu0 %v309
        %v2323 = vpop.f32.mrf.mxu0
        %v2324 = vadd.f32 %v2311, %v2323
        %v2325 = vpop.f32.mrf.mxu0
        %2326 = vdwg.mxu0
        %2327 = vmatpush.bf16.msra.mxu0 %v1773
        %2328 = vmatpush.bf16.msra.mxu0 %v1761
        %2329 = vmatpush.bf16.msra.mxu0 %v1749
        %2330 = vmatpush.bf16.msra.mxu0 %v1737
        %2331 = vmatpush.bf16.msra.mxu0 %v1725
        %2332 = vmatpush.bf16.msra.mxu0 %v1713
        %2333 = vmatpush.bf16.msra.mxu0 %v1701
        %2334 = vmatpush.bf16.msra.mxu0 %v1689
        %2335 = vmatmul.bf16.gmra.mxu0 %v310
        %v2336 = vpop.f32.mrf.mxu0
        %v2337 = vadd.f32 %v2324, %v2336
        %v2338 = vpop.f32.mrf.mxu0
        %2339 = vdwg.mxu0
        %2340 = vmatpush.bf16.msra.mxu0 %v1582
        %2341 = vmatpush.bf16.msra.mxu0 %v1570
        %2342 = vmatpush.bf16.msra.mxu0 %v1558
        %2343 = vmatpush.bf16.msra.mxu0 %v1546
        %2344 = vmatpush.bf16.msra.mxu0 %v1534
        %2345 = vmatpush.bf16.msra.mxu0 %v1522
        %2346 = vmatpush.bf16.msra.mxu0 %v1510
        %2347 = vmatpush.bf16.msra.mxu0 %v1498
        %2348 = vmatmul.bf16.gmra.mxu0 %v308
        %v2349 = vpop.f32.mrf.mxu0
        %v2350 = vadd.f32 %v610, %v2349
        %v2351 = vpop.f32.mrf.mxu0
        %2352 = vdwg.mxu0
        %2353 = vmatpush.bf16.msra.mxu0 %v1678
        %2354 = vmatpush.bf16.msra.mxu0 %v1666
        %2355 = vmatpush.bf16.msra.mxu0 %v1654
        %2356 = vmatpush.bf16.msra.mxu0 %v1642
        %2357 = vmatpush.bf16.msra.mxu0 %v1630
        %2358 = vmatpush.bf16.msra.mxu0 %v1618
        %2359 = vmatpush.bf16.msra.mxu0 %v1606
        %2360 = vmatpush.bf16.msra.mxu0 %v1594
        %2361 = vmatmul.bf16.gmra.mxu0 %v309
        %v2362 = vpop.f32.mrf.mxu0
        %v2363 = vadd.f32 %v2350, %v2362
        %v2364 = vpop.f32.mrf.mxu0
        %2365 = vdwg.mxu0
        %2366 = vmatpush.bf16.msra.mxu0 %v1774
        %2367 = vmatpush.bf16.msra.mxu0 %v1762
        %2368 = vmatpush.bf16.msra.mxu0 %v1750
        %2369 = vmatpush.bf16.msra.mxu0 %v1738
        %2370 = vmatpush.bf16.msra.mxu0 %v1726
        %2371 = vmatpush.bf16.msra.mxu0 %v1714
        %2372 = vmatpush.bf16.msra.mxu0 %v1702
        %2373 = vmatpush.bf16.msra.mxu0 %v1690
        %2374 = vmatmul.bf16.gmra.mxu0 %v310
        %v2375 = vpop.f32.mrf.mxu0
        %v2376 = vadd.f32 %v2363, %v2375
        %v2377 = vpop.f32.mrf.mxu0
        %2378 = vdwg.mxu0
        %2379 = vmatpush.bf16.msra.mxu0 %v1583
        %2380 = vmatpush.bf16.msra.mxu0 %v1571
        %2381 = vmatpush.bf16.msra.mxu0 %v1559
        %2382 = vmatpush.bf16.msra.mxu0 %v1547
        %2383 = vmatpush.bf16.msra.mxu0 %v1535
        %2384 = vmatpush.bf16.msra.mxu0 %v1523
        %2385 = vmatpush.bf16.msra.mxu0 %v1511
        %2386 = vmatpush.bf16.msra.mxu0 %v1499
        %2387 = vmatmul.bf16.gmra.mxu0 %v308
        %v2388 = vpop.f32.mrf.mxu0
        %v2389 = vadd.f32 %v611, %v2388
        %v2390 = vpop.f32.mrf.mxu0
        %2391 = vdwg.mxu0
        %2392 = vmatpush.bf16.msra.mxu0 %v1679
        %2393 = vmatpush.bf16.msra.mxu0 %v1667
        %2394 = vmatpush.bf16.msra.mxu0 %v1655
        %2395 = vmatpush.bf16.msra.mxu0 %v1643
        %2396 = vmatpush.bf16.msra.mxu0 %v1631
        %2397 = vmatpush.bf16.msra.mxu0 %v1619
        %2398 = vmatpush.bf16.msra.mxu0 %v1607
        %2399 = vmatpush.bf16.msra.mxu0 %v1595
        %2400 = vmatmul.bf16.gmra.mxu0 %v309
        %v2401 = vpop.f32.mrf.mxu0
        %v2402 = vadd.f32 %v2389, %v2401
        %v2403 = vpop.f32.mrf.mxu0
        %2404 = vdwg.mxu0
        %2405 = vmatpush.bf16.msra.mxu0 %v1775
        %2406 = vmatpush.bf16.msra.mxu0 %v1763
        %2407 = vmatpush.bf16.msra.mxu0 %v1751
        %2408 = vmatpush.bf16.msra.mxu0 %v1739
        %2409 = vmatpush.bf16.msra.mxu0 %v1727
        %2410 = vmatpush.bf16.msra.mxu0 %v1715
        %2411 = vmatpush.bf16.msra.mxu0 %v1703
        %2412 = vmatpush.bf16.msra.mxu0 %v1691
        %2413 = vmatmul.bf16.gmra.mxu0 %v310
        %v2414 = vpop.f32.mrf.mxu0
        %v2415 = vadd.f32 %v2402, %v2414
        %v2416 = vpop.f32.mrf.mxu0
        %2417 = vdwg.mxu0
        %2418 = vmatpush.bf16.msra.mxu0 %v1584
        %2419 = vmatpush.bf16.msra.mxu0 %v1572
        %2420 = vmatpush.bf16.msra.mxu0 %v1560
        %2421 = vmatpush.bf16.msra.mxu0 %v1548
        %2422 = vmatpush.bf16.msra.mxu0 %v1536
        %2423 = vmatpush.bf16.msra.mxu0 %v1524
        %2424 = vmatpush.bf16.msra.mxu0 %v1512
        %2425 = vmatpush.bf16.msra.mxu0 %v1500
        %2426 = vmatmul.bf16.gmra.mxu0 %v308
        %v2427 = vpop.f32.mrf.mxu0
        %v2428 = vadd.f32 %v612, %v2427
        %v2429 = vpop.f32.mrf.mxu0
        %2430 = vdwg.mxu0
        %2431 = vmatpush.bf16.msra.mxu0 %v1680
        %2432 = vmatpush.bf16.msra.mxu0 %v1668
        %2433 = vmatpush.bf16.msra.mxu0 %v1656
        %2434 = vmatpush.bf16.msra.mxu0 %v1644
        %2435 = vmatpush.bf16.msra.mxu0 %v1632
        %2436 = vmatpush.bf16.msra.mxu0 %v1620
        %2437 = vmatpush.bf16.msra.mxu0 %v1608
        %2438 = vmatpush.bf16.msra.mxu0 %v1596
        %2439 = vmatmul.bf16.gmra.mxu0 %v309
        %v2440 = vpop.f32.mrf.mxu0
        %v2441 = vadd.f32 %v2428, %v2440
        %v2442 = vpop.f32.mrf.mxu0
        %2443 = vdwg.mxu0
        %2444 = vmatpush.bf16.msra.mxu0 %v1776
        %2445 = vmatpush.bf16.msra.mxu0 %v1764
        %2446 = vmatpush.bf16.msra.mxu0 %v1752
        %2447 = vmatpush.bf16.msra.mxu0 %v1740
        %2448 = vmatpush.bf16.msra.mxu0 %v1728
        %2449 = vmatpush.bf16.msra.mxu0 %v1716
        %2450 = vmatpush.bf16.msra.mxu0 %v1704
        %2451 = vmatpush.bf16.msra.mxu0 %v1692
        %2452 = vmatmul.bf16.gmra.mxu0 %v310
        %v2453 = vpop.f32.mrf.mxu0
        %v2454 = vadd.f32 %v2441, %v2453
        %v2455 = vpop.f32.mrf.mxu0
        %2456 = vdwg.mxu0
        %2457 = vmatpush.bf16.msra.mxu0 %v1585
        %2458 = vmatpush.bf16.msra.mxu0 %v1573
        %2459 = vmatpush.bf16.msra.mxu0 %v1561
        %2460 = vmatpush.bf16.msra.mxu0 %v1549
        %2461 = vmatpush.bf16.msra.mxu0 %v1537
        %2462 = vmatpush.bf16.msra.mxu0 %v1525
        %2463 = vmatpush.bf16.msra.mxu0 %v1513
        %2464 = vmatpush.bf16.msra.mxu0 %v1501
        %2465 = vmatmul.bf16.gmra.mxu0 %v308
        %v2466 = vpop.f32.mrf.mxu0
        %v2467 = vadd.f32 %v613, %v2466
        %v2468 = vpop.f32.mrf.mxu0
        %2469 = vdwg.mxu0
        %2470 = vmatpush.bf16.msra.mxu0 %v1681
        %2471 = vmatpush.bf16.msra.mxu0 %v1669
        %2472 = vmatpush.bf16.msra.mxu0 %v1657
        %2473 = vmatpush.bf16.msra.mxu0 %v1645
        %2474 = vmatpush.bf16.msra.mxu0 %v1633
        %2475 = vmatpush.bf16.msra.mxu0 %v1621
        %2476 = vmatpush.bf16.msra.mxu0 %v1609
        %2477 = vmatpush.bf16.msra.mxu0 %v1597
        %2478 = vmatmul.bf16.gmra.mxu0 %v309
        %v2479 = vpop.f32.mrf.mxu0
        %v2480 = vadd.f32 %v2467, %v2479
        %v2481 = vpop.f32.mrf.mxu0
        %2482 = vdwg.mxu0
        %2483 = vmatpush.bf16.msra.mxu0 %v1777
        %2484 = vmatpush.bf16.msra.mxu0 %v1765
        %2485 = vmatpush.bf16.msra.mxu0 %v1753
        %2486 = vmatpush.bf16.msra.mxu0 %v1741
        %2487 = vmatpush.bf16.msra.mxu0 %v1729
        %2488 = vmatpush.bf16.msra.mxu0 %v1717
        %2489 = vmatpush.bf16.msra.mxu0 %v1705
        %2490 = vmatpush.bf16.msra.mxu0 %v1693
        %2491 = vmatmul.bf16.gmra.mxu0 %v310
        %v2492 = vpop.f32.mrf.mxu0
        %v2493 = vadd.f32 %v2480, %v2492
        %v2494 = vpop.f32.mrf.mxu0
        %2495 = vdwg.mxu0
        %2496 = vmatpush.bf16.msra.mxu0 %v1586
        %2497 = vmatpush.bf16.msra.mxu0 %v1574
        %2498 = vmatpush.bf16.msra.mxu0 %v1562
        %2499 = vmatpush.bf16.msra.mxu0 %v1550
        %2500 = vmatpush.bf16.msra.mxu0 %v1538
        %2501 = vmatpush.bf16.msra.mxu0 %v1526
        %2502 = vmatpush.bf16.msra.mxu0 %v1514
        %2503 = vmatpush.bf16.msra.mxu0 %v1502
        %2504 = vmatmul.bf16.gmra.mxu0 %v308
        %v2505 = vpop.f32.mrf.mxu0
        %v2506 = vadd.f32 %v614, %v2505
        %v2507 = vpop.f32.mrf.mxu0
        %2508 = vdwg.mxu0
        %2509 = vmatpush.bf16.msra.mxu0 %v1682
        %2510 = vmatpush.bf16.msra.mxu0 %v1670
        %2511 = vmatpush.bf16.msra.mxu0 %v1658
        %2512 = vmatpush.bf16.msra.mxu0 %v1646
        %2513 = vmatpush.bf16.msra.mxu0 %v1634
        %2514 = vmatpush.bf16.msra.mxu0 %v1622
        %2515 = vmatpush.bf16.msra.mxu0 %v1610
        %2516 = vmatpush.bf16.msra.mxu0 %v1598
        %2517 = vmatmul.bf16.gmra.mxu0 %v309
        %v2518 = vpop.f32.mrf.mxu0
        %v2519 = vadd.f32 %v2506, %v2518
        %v2520 = vpop.f32.mrf.mxu0
        %2521 = vdwg.mxu0
        %2522 = vmatpush.bf16.msra.mxu0 %v1778
        %2523 = vmatpush.bf16.msra.mxu0 %v1766
        %2524 = vmatpush.bf16.msra.mxu0 %v1754
        %2525 = vmatpush.bf16.msra.mxu0 %v1742
        %2526 = vmatpush.bf16.msra.mxu0 %v1730
        %2527 = vmatpush.bf16.msra.mxu0 %v1718
        %2528 = vmatpush.bf16.msra.mxu0 %v1706
        %2529 = vmatpush.bf16.msra.mxu0 %v1694
        %2530 = vmatmul.bf16.gmra.mxu0 %v310
        %v2531 = vpop.f32.mrf.mxu0
        %v2532 = vadd.f32 %v2519, %v2531
        %v2533 = vpop.f32.mrf.mxu0
        %2534 = vdwg.mxu0
        %v2535 = vmax.f32 %v2103, 0.0
        %v2536 = vmax.f32 %v2142, 0.0
        %v2537 = vmax.f32 %v2181, 0.0
        %v2538 = vmax.f32 %v2220, 0.0
        %v2539 = vmax.f32 %v2259, 0.0
        %v2540 = vmax.f32 %v2298, 0.0
        %v2541 = vmax.f32 %v2337, 0.0
        %v2542 = vmax.f32 %v2376, 0.0
        %v2543 = vmax.f32 %v2415, 0.0
        %v2544 = vmax.f32 %v2454, 0.0
        %v2545 = vmax.f32 %v2493, 0.0
        %v2546 = vmax.f32 %v2532, 0.0
        %v2547 = vpack.c.bf16 %v2535, %v2535
        %v2548 = vpack.c.bf16 %v2536, %v2536
        %v2549 = vpack.c.bf16 %v2537, %v2537
        %v2550 = vpack.c.bf16 %v2538, %v2538
        %v2551 = vpack.c.bf16 %v2539, %v2539
        %v2552 = vpack.c.bf16 %v2540, %v2540
        %v2553 = vpack.c.bf16 %v2541, %v2541
        %v2554 = vpack.c.bf16 %v2542, %v2542
        %v2555 = vpack.c.bf16 %v2543, %v2543
        %v2556 = vpack.c.bf16 %v2544, %v2544
        %v2557 = vpack.c.bf16 %v2545, %v2545
        %v2558 = vpack.c.bf16 %v2546, %v2546
        %v2559 = vld [vmem:[#allocation8] sm:$0xff]
        %v2560 = vld [vmem:[#allocation8 + $0x8] sm:$0xf]
        %v2561 = vld [vmem:[#allocation8 + $0xc] sm:$0xff]
        %v2562 = vld [vmem:[#allocation8 + $0x14] sm:$0xf]
        %v2563 = vld [vmem:[#allocation8 + $0x18] sm:$0xff]
        %v2564 = vld [vmem:[#allocation8 + $0x20] sm:$0xf]
        %v2565 = vld [vmem:[#allocation8 + $0x24] sm:$0xff]
        %v2566 = vld [vmem:[#allocation8 + $0x2c] sm:$0xf]
        %v2567 = vld [vmem:[#allocation8 + $0x30] sm:$0xff]
        %v2568 = vld [vmem:[#allocation8 + $0x38] sm:$0xf]
        %v2569 = vld [vmem:[#allocation8 + $0x3c] sm:$0xff]
        %v2570 = vld [vmem:[#allocation8 + $0x44] sm:$0xf]
        %v2571 = vld [vmem:[#allocation8 + $0x48] sm:$0xff]
        %v2572 = vld [vmem:[#allocation8 + $0x50] sm:$0xf]
        %v2573 = vld [vmem:[#allocation8 + $0x54] sm:$0xff]
        %v2574 = vld [vmem:[#allocation8 + $0x5c] sm:$0xf]
        %v2575 = vld [vmem:[#allocation8 + $0x60] sm:$0xff]
        %v2576 = vld [vmem:[#allocation8 + $0x68] sm:$0xf]
        %v2577 = vld [vmem:[#allocation8 + $0x6c] sm:$0xff]
        %v2578 = vld [vmem:[#allocation8 + $0x74] sm:$0xf]
        %v2579 = vld [vmem:[#allocation8 + $0x78] sm:$0xff]
        %v2580 = vld [vmem:[#allocation8 + $0x80] sm:$0xf]
        %v2581 = vld [vmem:[#allocation8 + $0x84] sm:$0xff]
        %v2582 = vld [vmem:[#allocation8 + $0x8c] sm:$0xf]
        %v2583 = vld [vmem:[#allocation8 + $0x90] sm:$0xff]
        %v2584 = vld [vmem:[#allocation8 + $0x98] sm:$0xf]
        %v2585 = vld [vmem:[#allocation8 + $0x9c] sm:$0xff]
        %v2586 = vld [vmem:[#allocation8 + $0xa4] sm:$0xf]
        %v2587 = vld [vmem:[#allocation8 + $0xa8] sm:$0xff]
        %v2588 = vld [vmem:[#allocation8 + $0xb0] sm:$0xf]
        %v2589 = vld [vmem:[#allocation8 + $0xb4] sm:$0xff]
        %v2590 = vld [vmem:[#allocation8 + $0xbc] sm:$0xf]
        %v2591 = vld [vmem:[#allocation8 + $0xc0] sm:$0xff]
        %v2592 = vld [vmem:[#allocation8 + $0xc8] sm:$0xf]
        %v2593 = vld [vmem:[#allocation8 + $0xcc] sm:$0xff]
        %v2594 = vld [vmem:[#allocation8 + $0xd4] sm:$0xf]
        %v2595 = vld [vmem:[#allocation8 + $0xd8] sm:$0xff]
        %v2596 = vld [vmem:[#allocation8 + $0xe0] sm:$0xf]
        %v2597 = vld [vmem:[#allocation8 + $0xe4] sm:$0xff]
        %v2598 = vld [vmem:[#allocation8 + $0xec] sm:$0xf]
        %v2599 = vld [vmem:[#allocation8 + $0xf0] sm:$0xff]
        %v2600 = vld [vmem:[#allocation8 + $0xf8] sm:$0xf]
        %v2601 = vld [vmem:[#allocation8 + $0xfc] sm:$0xff]
        %v2602 = vld [vmem:[#allocation8 + $0x104] sm:$0xf]
        %v2603 = vld [vmem:[#allocation8 + $0x108] sm:$0xff]
        %v2604 = vld [vmem:[#allocation8 + $0x110] sm:$0xf]
        %v2605 = vld [vmem:[#allocation8 + $0x114] sm:$0xff]
        %v2606 = vld [vmem:[#allocation8 + $0x11c] sm:$0xf]
        %v2607 = vld [vmem:[#allocation8 + $0x120] sm:$0xff]
        %v2608 = vld [vmem:[#allocation8 + $0x128] sm:$0xf]
        %v2609 = vld [vmem:[#allocation8 + $0x12c] sm:$0xff]
        %v2610 = vld [vmem:[#allocation8 + $0x134] sm:$0xf]
        %v2611 = vld [vmem:[#allocation8 + $0x138] sm:$0xff]
        %v2612 = vld [vmem:[#allocation8 + $0x140] sm:$0xf]
        %v2613 = vld [vmem:[#allocation8 + $0x144] sm:$0xff]
        %v2614 = vld [vmem:[#allocation8 + $0x14c] sm:$0xf]
        %v2615 = vld [vmem:[#allocation8 + $0x150] sm:$0xff]
        %v2616 = vld [vmem:[#allocation8 + $0x158] sm:$0xf]
        %v2617 = vld [vmem:[#allocation8 + $0x15c] sm:$0xff]
        %v2618 = vld [vmem:[#allocation8 + $0x164] sm:$0xf]
        %v2619 = vld [vmem:[#allocation8 + $0x168] sm:$0xff]
        %v2620 = vld [vmem:[#allocation8 + $0x170] sm:$0xf]
        %v2621 = vld [vmem:[#allocation8 + $0x174] sm:$0xff]
        %v2622 = vld [vmem:[#allocation8 + $0x17c] sm:$0xf]
        %v2623 = vld [vmem:[#allocation8 + $0x180] sm:$0xff]
        %v2624 = vld [vmem:[#allocation8 + $0x188] sm:$0xf]
        %v2625 = vld [vmem:[#allocation8 + $0x18c] sm:$0xff]
        %v2626 = vld [vmem:[#allocation8 + $0x194] sm:$0xf]
        %v2627 = vld [vmem:[#allocation8 + $0x198] sm:$0xff]
        %v2628 = vld [vmem:[#allocation8 + $0x1a0] sm:$0xf]
        %v2629 = vld [vmem:[#allocation8 + $0x1a4] sm:$0xff]
        %v2630 = vld [vmem:[#allocation8 + $0x1ac] sm:$0xf]
        %v2631 = vld [vmem:[#allocation8 + $0x1b0] sm:$0xff]
        %v2632 = vld [vmem:[#allocation8 + $0x1b8] sm:$0xf]
        %v2633 = vld [vmem:[#allocation8 + $0x1bc] sm:$0xff]
        %v2634 = vld [vmem:[#allocation8 + $0x1c4] sm:$0xf]
        %v2635 = vld [vmem:[#allocation8 + $0x1c8] sm:$0xff]
        %v2636 = vld [vmem:[#allocation8 + $0x1d0] sm:$0xf]
        %v2637 = vld [vmem:[#allocation8 + $0x1d4] sm:$0xff]
        %v2638 = vld [vmem:[#allocation8 + $0x1dc] sm:$0xf]
        %v2639 = vld [vmem:[#allocation8 + $0x1e0] sm:$0xff]
        %v2640 = vld [vmem:[#allocation8 + $0x1e8] sm:$0xf]
        %v2641 = vld [vmem:[#allocation8 + $0x1ec] sm:$0xff]
        %v2642 = vld [vmem:[#allocation8 + $0x1f4] sm:$0xf]
        %v2643 = vld [vmem:[#allocation8 + $0x1f8] sm:$0xff]
        %v2644 = vld [vmem:[#allocation8 + $0x200] sm:$0xf]
        %v2645 = vld [vmem:[#allocation8 + $0x204] sm:$0xff]
        %v2646 = vld [vmem:[#allocation8 + $0x20c] sm:$0xf]
        %v2647 = vld [vmem:[#allocation8 + $0x210] sm:$0xff]
        %v2648 = vld [vmem:[#allocation8 + $0x218] sm:$0xf]
        %v2649 = vld [vmem:[#allocation8 + $0x21c] sm:$0xff]
        %v2650 = vld [vmem:[#allocation8 + $0x224] sm:$0xf]
        %v2651 = vld [vmem:[#allocation8 + $0x228] sm:$0xff]
        %v2652 = vld [vmem:[#allocation8 + $0x230] sm:$0xf]
        %v2653 = vld [vmem:[#allocation8 + $0x234] sm:$0xff]
        %v2654 = vld [vmem:[#allocation8 + $0x23c] sm:$0xf]
        %v2655 = vld [vmem:[#allocation8 + $0x240] sm:$0xff]
        %v2656 = vld [vmem:[#allocation8 + $0x248] sm:$0xf]
        %v2657 = vld [vmem:[#allocation8 + $0x24c] sm:$0xff]
        %v2658 = vld [vmem:[#allocation8 + $0x254] sm:$0xf]
        %v2659 = vld [vmem:[#allocation8 + $0x258] sm:$0xff]
        %v2660 = vld [vmem:[#allocation8 + $0x260] sm:$0xf]
        %v2661 = vld [vmem:[#allocation8 + $0x264] sm:$0xff]
        %v2662 = vld [vmem:[#allocation8 + $0x26c] sm:$0xf]
        %v2663 = vld [vmem:[#allocation8 + $0x270] sm:$0xff]
        %v2664 = vld [vmem:[#allocation8 + $0x278] sm:$0xf]
        %v2665 = vld [vmem:[#allocation8 + $0x27c] sm:$0xff]
        %v2666 = vld [vmem:[#allocation8 + $0x284] sm:$0xf]
        %v2667 = vld [vmem:[#allocation8 + $0x288] sm:$0xff]
        %v2668 = vld [vmem:[#allocation8 + $0x290] sm:$0xf]
        %v2669 = vld [vmem:[#allocation8 + $0x294] sm:$0xff]
        %v2670 = vld [vmem:[#allocation8 + $0x29c] sm:$0xf]
        %v2671 = vld [vmem:[#allocation8 + $0x2a0] sm:$0xff]
        %v2672 = vld [vmem:[#allocation8 + $0x2a8] sm:$0xf]
        %v2673 = vld [vmem:[#allocation8 + $0x2ac] sm:$0xff]
        %v2674 = vld [vmem:[#allocation8 + $0x2b4] sm:$0xf]
        %v2675 = vld [vmem:[#allocation8 + $0x2b8] sm:$0xff]
        %v2676 = vld [vmem:[#allocation8 + $0x2c0] sm:$0xf]
        %v2677 = vld [vmem:[#allocation8 + $0x2c4] sm:$0xff]
        %v2678 = vld [vmem:[#allocation8 + $0x2cc] sm:$0xf]
        %v2679 = vld [vmem:[#allocation8 + $0x2d0] sm:$0xff]
        %v2680 = vld [vmem:[#allocation8 + $0x2d8] sm:$0xf]
        %v2681 = vld [vmem:[#allocation8 + $0x2dc] sm:$0xff]
        %v2682 = vld [vmem:[#allocation8 + $0x2e4] sm:$0xf]
        %v2683 = vld [vmem:[#allocation8 + $0x2e8] sm:$0xff]
        %v2684 = vld [vmem:[#allocation8 + $0x2f0] sm:$0xf]
        %v2685 = vld [vmem:[#allocation8 + $0x2f4] sm:$0xff]
        %v2686 = vld [vmem:[#allocation8 + $0x2fc] sm:$0xf]
        %v2687 = vld [vmem:[#allocation8 + $0x300] sm:$0xff]
        %v2688 = vld [vmem:[#allocation8 + $0x308] sm:$0xf]
        %v2689 = vld [vmem:[#allocation8 + $0x30c] sm:$0xff]
        %v2690 = vld [vmem:[#allocation8 + $0x314] sm:$0xf]
        %v2691 = vld [vmem:[#allocation8 + $0x318] sm:$0xff]
        %v2692 = vld [vmem:[#allocation8 + $0x320] sm:$0xf]
        %v2693 = vld [vmem:[#allocation8 + $0x324] sm:$0xff]
        %v2694 = vld [vmem:[#allocation8 + $0x32c] sm:$0xf]
        %v2695 = vld [vmem:[#allocation8 + $0x330] sm:$0xff]
        %v2696 = vld [vmem:[#allocation8 + $0x338] sm:$0xf]
        %v2697 = vld [vmem:[#allocation8 + $0x33c] sm:$0xff]
        %v2698 = vld [vmem:[#allocation8 + $0x344] sm:$0xf]
        %v2699 = vld [vmem:[#allocation8 + $0x348] sm:$0xff]
        %v2700 = vld [vmem:[#allocation8 + $0x350] sm:$0xf]
        %v2701 = vld [vmem:[#allocation8 + $0x354] sm:$0xff]
        %v2702 = vld [vmem:[#allocation8 + $0x35c] sm:$0xf]
        %v2703 = vld [vmem:[#allocation8 + $0x360] sm:$0xff]
        %v2704 = vld [vmem:[#allocation8 + $0x368] sm:$0xf]
        %v2705 = vld [vmem:[#allocation8 + $0x36c] sm:$0xff]
        %v2706 = vld [vmem:[#allocation8 + $0x374] sm:$0xf]
        %v2707 = vld [vmem:[#allocation8 + $0x378] sm:$0xff]
        %v2708 = vld [vmem:[#allocation8 + $0x380] sm:$0xf]
        %v2709 = vld [vmem:[#allocation8 + $0x384] sm:$0xff]
        %v2710 = vld [vmem:[#allocation8 + $0x38c] sm:$0xf]
        %v2711 = vld [vmem:[#allocation8 + $0x390] sm:$0xff]
        %v2712 = vld [vmem:[#allocation8 + $0x398] sm:$0xf]
        %v2713 = vld [vmem:[#allocation8 + $0x39c] sm:$0xff]
        %v2714 = vld [vmem:[#allocation8 + $0x3a4] sm:$0xf]
        %v2715 = vld [vmem:[#allocation8 + $0x3a8] sm:$0xff]
        %v2716 = vld [vmem:[#allocation8 + $0x3b0] sm:$0xf]
        %v2717 = vld [vmem:[#allocation8 + $0x3b4] sm:$0xff]
        %v2718 = vld [vmem:[#allocation8 + $0x3bc] sm:$0xf]
        %v2719 = vld [vmem:[#allocation8 + $0x3c0] sm:$0xff]
        %v2720 = vld [vmem:[#allocation8 + $0x3c8] sm:$0xf]
        %v2721 = vld [vmem:[#allocation8 + $0x3cc] sm:$0xff]
        %v2722 = vld [vmem:[#allocation8 + $0x3d4] sm:$0xf]
        %v2723 = vld [vmem:[#allocation8 + $0x3d8] sm:$0xff]
        %v2724 = vld [vmem:[#allocation8 + $0x3e0] sm:$0xf]
        %v2725 = vld [vmem:[#allocation8 + $0x3e4] sm:$0xff]
        %v2726 = vld [vmem:[#allocation8 + $0x3ec] sm:$0xf]
        %v2727 = vld [vmem:[#allocation8 + $0x3f0] sm:$0xff]
        %v2728 = vld [vmem:[#allocation8 + $0x3f8] sm:$0xf]
        %v2729 = vld [vmem:[#allocation8 + $0x3fc] sm:$0xff]
        %v2730 = vld [vmem:[#allocation8 + $0x404] sm:$0xf]
        %v2731 = vld [vmem:[#allocation8 + $0x408] sm:$0xff]
        %v2732 = vld [vmem:[#allocation8 + $0x410] sm:$0xf]
        %v2733 = vld [vmem:[#allocation8 + $0x414] sm:$0xff]
        %v2734 = vld [vmem:[#allocation8 + $0x41c] sm:$0xf]
        %v2735 = vld [vmem:[#allocation8 + $0x420] sm:$0xff]
        %v2736 = vld [vmem:[#allocation8 + $0x428] sm:$0xf]
        %v2737 = vld [vmem:[#allocation8 + $0x42c] sm:$0xff]
        %v2738 = vld [vmem:[#allocation8 + $0x434] sm:$0xf]
        %v2739 = vld [vmem:[#allocation8 + $0x438] sm:$0xff]
        %v2740 = vld [vmem:[#allocation8 + $0x440] sm:$0xf]
        %v2741 = vld [vmem:[#allocation8 + $0x444] sm:$0xff]
        %v2742 = vld [vmem:[#allocation8 + $0x44c] sm:$0xf]
        %v2743 = vld [vmem:[#allocation8 + $0x450] sm:$0xff]
        %v2744 = vld [vmem:[#allocation8 + $0x458] sm:$0xf]
        %v2745 = vld [vmem:[#allocation8 + $0x45c] sm:$0xff]
        %v2746 = vld [vmem:[#allocation8 + $0x464] sm:$0xf]
        %v2747 = vld [vmem:[#allocation8 + $0x468] sm:$0xff]
        %v2748 = vld [vmem:[#allocation8 + $0x470] sm:$0xf]
        %v2749 = vld [vmem:[#allocation8 + $0x474] sm:$0xff]
        %v2750 = vld [vmem:[#allocation8 + $0x47c] sm:$0xf]
        %v2751 = vld [vmem:[#allocation8 + $0x480] sm:$0xff]
        %v2752 = vld [vmem:[#allocation8 + $0x488] sm:$0xf]
        %v2753 = vld [vmem:[#allocation8 + $0x48c] sm:$0xff]
        %v2754 = vld [vmem:[#allocation8 + $0x494] sm:$0xf]
        %v2755 = vld [vmem:[#allocation8 + $0x498] sm:$0xff]
        %v2756 = vld [vmem:[#allocation8 + $0x4a0] sm:$0xf]
        %v2757 = vld [vmem:[#allocation8 + $0x4a4] sm:$0xff]
        %v2758 = vld [vmem:[#allocation8 + $0x4ac] sm:$0xf]
        %v2759 = vld [vmem:[#allocation8 + $0x4b0] sm:$0xff]
        %v2760 = vld [vmem:[#allocation8 + $0x4b8] sm:$0xf]
        %v2761 = vld [vmem:[#allocation8 + $0x4bc] sm:$0xff]
        %v2762 = vld [vmem:[#allocation8 + $0x4c4] sm:$0xf]
        %v2763 = vld [vmem:[#allocation8 + $0x4c8] sm:$0xff]
        %v2764 = vld [vmem:[#allocation8 + $0x4d0] sm:$0xf]
        %v2765 = vld [vmem:[#allocation8 + $0x4d4] sm:$0xff]
        %v2766 = vld [vmem:[#allocation8 + $0x4dc] sm:$0xf]
        %v2767 = vld [vmem:[#allocation8 + $0x4e0] sm:$0xff]
        %v2768 = vld [vmem:[#allocation8 + $0x4e8] sm:$0xf]
        %v2769 = vld [vmem:[#allocation8 + $0x4ec] sm:$0xff]
        %v2770 = vld [vmem:[#allocation8 + $0x4f4] sm:$0xf]
        %v2771 = vld [vmem:[#allocation8 + $0x4f8] sm:$0xff]
        %v2772 = vld [vmem:[#allocation8 + $0x500] sm:$0xf]
        %v2773 = vld [vmem:[#allocation8 + $0x504] sm:$0xff]
        %v2774 = vld [vmem:[#allocation8 + $0x50c] sm:$0xf]
        %v2775 = vld [vmem:[#allocation8 + $0x510] sm:$0xff]
        %v2776 = vld [vmem:[#allocation8 + $0x518] sm:$0xf]
        %v2777 = vld [vmem:[#allocation8 + $0x51c] sm:$0xff]
        %v2778 = vld [vmem:[#allocation8 + $0x524] sm:$0xf]
        %v2779 = vld [vmem:[#allocation8 + $0x528] sm:$0xff]
        %v2780 = vld [vmem:[#allocation8 + $0x530] sm:$0xf]
        %v2781 = vld [vmem:[#allocation8 + $0x534] sm:$0xff]
        %v2782 = vld [vmem:[#allocation8 + $0x53c] sm:$0xf]
        %v2783 = vld [vmem:[#allocation8 + $0x540] sm:$0xff]
        %v2784 = vld [vmem:[#allocation8 + $0x548] sm:$0xf]
        %v2785 = vld [vmem:[#allocation8 + $0x54c] sm:$0xff]
        %v2786 = vld [vmem:[#allocation8 + $0x554] sm:$0xf]
        %v2787 = vld [vmem:[#allocation8 + $0x558] sm:$0xff]
        %v2788 = vld [vmem:[#allocation8 + $0x560] sm:$0xf]
        %v2789 = vld [vmem:[#allocation8 + $0x564] sm:$0xff]
        %v2790 = vld [vmem:[#allocation8 + $0x56c] sm:$0xf]
        %v2791 = vld [vmem:[#allocation8 + $0x570] sm:$0xff]
        %v2792 = vld [vmem:[#allocation8 + $0x578] sm:$0xf]
        %v2793 = vld [vmem:[#allocation8 + $0x57c] sm:$0xff]
        %v2794 = vld [vmem:[#allocation8 + $0x584] sm:$0xf]
        %v2795 = vld [vmem:[#allocation8 + $0x588] sm:$0xff]
        %v2796 = vld [vmem:[#allocation8 + $0x590] sm:$0xf]
        %v2797 = vld [vmem:[#allocation8 + $0x594] sm:$0xff]
        %v2798 = vld [vmem:[#allocation8 + $0x59c] sm:$0xf]
        %v2799 = vld [vmem:[#allocation8 + $0x5a0] sm:$0xff]
        %v2800 = vld [vmem:[#allocation8 + $0x5a8] sm:$0xf]
        %v2801 = vld [vmem:[#allocation8 + $0x5ac] sm:$0xff]
        %v2802 = vld [vmem:[#allocation8 + $0x5b4] sm:$0xf]
        %v2803 = vld [vmem:[#allocation8 + $0x5b8] sm:$0xff]
        %v2804 = vld [vmem:[#allocation8 + $0x5c0] sm:$0xf]
        %v2805 = vld [vmem:[#allocation8 + $0x5c4] sm:$0xff]
        %v2806 = vld [vmem:[#allocation8 + $0x5cc] sm:$0xf]
        %v2807 = vld [vmem:[#allocation8 + $0x5d0] sm:$0xff]
        %v2808 = vld [vmem:[#allocation8 + $0x5d8] sm:$0xf]
        %v2809 = vld [vmem:[#allocation8 + $0x5dc] sm:$0xff]
        %v2810 = vld [vmem:[#allocation8 + $0x5e4] sm:$0xf]
        %v2811 = vld [vmem:[#allocation8 + $0x5e8] sm:$0xff]
        %v2812 = vld [vmem:[#allocation8 + $0x5f0] sm:$0xf]
        %v2813 = vld [vmem:[#allocation8 + $0x5f4] sm:$0xff]
        %v2814 = vld [vmem:[#allocation8 + $0x5fc] sm:$0xf]
        %v2815 = vld [vmem:[#allocation8 + $0x600] sm:$0xff]
        %v2816 = vld [vmem:[#allocation8 + $0x608] sm:$0xf]
        %v2817 = vld [vmem:[#allocation8 + $0x60c] sm:$0xff]
        %v2818 = vld [vmem:[#allocation8 + $0x614] sm:$0xf]
        %v2819 = vld [vmem:[#allocation8 + $0x618] sm:$0xff]
        %v2820 = vld [vmem:[#allocation8 + $0x620] sm:$0xf]
        %v2821 = vld [vmem:[#allocation8 + $0x624] sm:$0xff]
        %v2822 = vld [vmem:[#allocation8 + $0x62c] sm:$0xf]
        %v2823 = vld [vmem:[#allocation8 + $0x630] sm:$0xff]
        %v2824 = vld [vmem:[#allocation8 + $0x638] sm:$0xf]
        %v2825 = vld [vmem:[#allocation8 + $0x63c] sm:$0xff]
        %v2826 = vld [vmem:[#allocation8 + $0x644] sm:$0xf]
        %v2827 = vld [vmem:[#allocation8 + $0x648] sm:$0xff]
        %v2828 = vld [vmem:[#allocation8 + $0x650] sm:$0xf]
        %v2829 = vld [vmem:[#allocation8 + $0x654] sm:$0xff]
        %v2830 = vld [vmem:[#allocation8 + $0x65c] sm:$0xf]
        %v2831 = vld [vmem:[#allocation8 + $0x660] sm:$0xff]
        %v2832 = vld [vmem:[#allocation8 + $0x668] sm:$0xf]
        %v2833 = vld [vmem:[#allocation8 + $0x66c] sm:$0xff]
        %v2834 = vld [vmem:[#allocation8 + $0x674] sm:$0xf]
        %v2835 = vld [vmem:[#allocation8 + $0x678] sm:$0xff]
        %v2836 = vld [vmem:[#allocation8 + $0x680] sm:$0xf]
        %v2837 = vld [vmem:[#allocation8 + $0x684] sm:$0xff]
        %v2838 = vld [vmem:[#allocation8 + $0x68c] sm:$0xf]
        %v2839 = vld [vmem:[#allocation8 + $0x690] sm:$0xff]
        %v2840 = vld [vmem:[#allocation8 + $0x698] sm:$0xf]
        %v2841 = vld [vmem:[#allocation8 + $0x69c] sm:$0xff]
        %v2842 = vld [vmem:[#allocation8 + $0x6a4] sm:$0xf]
        %v2843 = vld [vmem:[#allocation8 + $0x6a8] sm:$0xff]
        %v2844 = vld [vmem:[#allocation8 + $0x6b0] sm:$0xf]
        %v2845 = vld [vmem:[#allocation8 + $0x6b4] sm:$0xff]
        %v2846 = vld [vmem:[#allocation8 + $0x6bc] sm:$0xf]
        %v2847 = vld [vmem:[#allocation8 + $0x6c0] sm:$0xff]
        %v2848 = vld [vmem:[#allocation8 + $0x6c8] sm:$0xf]
        %v2849 = vld [vmem:[#allocation8 + $0x6cc] sm:$0xff]
        %v2850 = vld [vmem:[#allocation8 + $0x6d4] sm:$0xf]
        %v2851 = vld [vmem:[#allocation8 + $0x6d8] sm:$0xff]
        %v2852 = vld [vmem:[#allocation8 + $0x6e0] sm:$0xf]
        %v2853 = vld [vmem:[#allocation8 + $0x6e4] sm:$0xff]
        %v2854 = vld [vmem:[#allocation8 + $0x6ec] sm:$0xf]
        %v2855 = vld [vmem:[#allocation8 + $0x6f0] sm:$0xff]
        %v2856 = vld [vmem:[#allocation8 + $0x6f8] sm:$0xf]
        %v2857 = vld [vmem:[#allocation8 + $0x6fc] sm:$0xff]
        %v2858 = vld [vmem:[#allocation8 + $0x704] sm:$0xf]
        %v2859 = vld [vmem:[#allocation8 + $0x708] sm:$0xff]
        %v2860 = vld [vmem:[#allocation8 + $0x710] sm:$0xf]
        %v2861 = vld [vmem:[#allocation8 + $0x714] sm:$0xff]
        %v2862 = vld [vmem:[#allocation8 + $0x71c] sm:$0xf]
        %v2863 = vld [vmem:[#allocation8 + $0x720] sm:$0xff]
        %v2864 = vld [vmem:[#allocation8 + $0x728] sm:$0xf]
        %v2865 = vld [vmem:[#allocation8 + $0x72c] sm:$0xff]
        %v2866 = vld [vmem:[#allocation8 + $0x734] sm:$0xf]
        %v2867 = vld [vmem:[#allocation8 + $0x738] sm:$0xff]
        %v2868 = vld [vmem:[#allocation8 + $0x740] sm:$0xf]
        %v2869 = vld [vmem:[#allocation8 + $0x744] sm:$0xff]
        %v2870 = vld [vmem:[#allocation8 + $0x74c] sm:$0xf]
        %v2871 = vld [vmem:[#allocation8 + $0x750] sm:$0xff]
        %v2872 = vld [vmem:[#allocation8 + $0x758] sm:$0xf]
        %v2873 = vld [vmem:[#allocation8 + $0x75c] sm:$0xff]
        %v2874 = vld [vmem:[#allocation8 + $0x764] sm:$0xf]
        %v2875 = vld [vmem:[#allocation8 + $0x768] sm:$0xff]
        %v2876 = vld [vmem:[#allocation8 + $0x770] sm:$0xf]
        %v2877 = vld [vmem:[#allocation8 + $0x774] sm:$0xff]
        %v2878 = vld [vmem:[#allocation8 + $0x77c] sm:$0xf]
        %v2879 = vld [vmem:[#allocation8 + $0x780] sm:$0xff]
        %v2880 = vld [vmem:[#allocation8 + $0x788] sm:$0xf]
        %v2881 = vld [vmem:[#allocation8 + $0x78c] sm:$0xff]
        %v2882 = vld [vmem:[#allocation8 + $0x794] sm:$0xf]
        %v2883 = vld [vmem:[#allocation8 + $0x798] sm:$0xff]
        %v2884 = vld [vmem:[#allocation8 + $0x7a0] sm:$0xf]
        %v2885 = vld [vmem:[#allocation8 + $0x7a4] sm:$0xff]
        %v2886 = vld [vmem:[#allocation8 + $0x7ac] sm:$0xf]
        %v2887 = vld [vmem:[#allocation8 + $0x7b0] sm:$0xff]
        %v2888 = vld [vmem:[#allocation8 + $0x7b8] sm:$0xf]
        %v2889 = vld [vmem:[#allocation8 + $0x7bc] sm:$0xff]
        %v2890 = vld [vmem:[#allocation8 + $0x7c4] sm:$0xf]
        %v2891 = vld [vmem:[#allocation8 + $0x7c8] sm:$0xff]
        %v2892 = vld [vmem:[#allocation8 + $0x7d0] sm:$0xf]
        %v2893 = vld [vmem:[#allocation8 + $0x7d4] sm:$0xff]
        %v2894 = vld [vmem:[#allocation8 + $0x7dc] sm:$0xf]
        %v2895 = vld [vmem:[#allocation8 + $0x7e0] sm:$0xff]
        %v2896 = vld [vmem:[#allocation8 + $0x7e8] sm:$0xf]
        %v2897 = vld [vmem:[#allocation8 + $0x7ec] sm:$0xff]
        %v2898 = vld [vmem:[#allocation8 + $0x7f4] sm:$0xf]
        %v2899 = vld [vmem:[#allocation8 + $0x7f8] sm:$0xff]
        %v2900 = vld [vmem:[#allocation8 + $0x800] sm:$0xf]
        %v2901 = vld [vmem:[#allocation8 + $0x804] sm:$0xff]
        %v2902 = vld [vmem:[#allocation8 + $0x80c] sm:$0xf]
        %v2903 = vld [vmem:[#allocation8 + $0x810] sm:$0xff]
        %v2904 = vld [vmem:[#allocation8 + $0x818] sm:$0xf]
        %v2905 = vld [vmem:[#allocation8 + $0x81c] sm:$0xff]
        %v2906 = vld [vmem:[#allocation8 + $0x824] sm:$0xf]
        %v2907 = vld [vmem:[#allocation8 + $0x828] sm:$0xff]
        %v2908 = vld [vmem:[#allocation8 + $0x830] sm:$0xf]
        %v2909 = vld [vmem:[#allocation8 + $0x834] sm:$0xff]
        %v2910 = vld [vmem:[#allocation8 + $0x83c] sm:$0xf]
        %v2911 = vld [vmem:[#allocation8 + $0x840] sm:$0xff]
        %v2912 = vld [vmem:[#allocation8 + $0x848] sm:$0xf]
        %v2913 = vld [vmem:[#allocation8 + $0x84c] sm:$0xff]
        %v2914 = vld [vmem:[#allocation8 + $0x854] sm:$0xf]
        %v2915 = vld [vmem:[#allocation8 + $0x858] sm:$0xff]
        %v2916 = vld [vmem:[#allocation8 + $0x860] sm:$0xf]
        %v2917 = vld [vmem:[#allocation8 + $0x864] sm:$0xff]
        %v2918 = vld [vmem:[#allocation8 + $0x86c] sm:$0xf]
        %v2919 = vld [vmem:[#allocation8 + $0x870] sm:$0xff]
        %v2920 = vld [vmem:[#allocation8 + $0x878] sm:$0xf]
        %v2921 = vld [vmem:[#allocation8 + $0x87c] sm:$0xff]
        %v2922 = vld [vmem:[#allocation8 + $0x884] sm:$0xf]
        %v2923 = vld [vmem:[#allocation8 + $0x888] sm:$0xff]
        %v2924 = vld [vmem:[#allocation8 + $0x890] sm:$0xf]
        %v2925 = vld [vmem:[#allocation8 + $0x894] sm:$0xff]
        %v2926 = vld [vmem:[#allocation8 + $0x89c] sm:$0xf]
        %v2927 = vld [vmem:[#allocation8 + $0x8a0] sm:$0xff]
        %v2928 = vld [vmem:[#allocation8 + $0x8a8] sm:$0xf]
        %v2929 = vld [vmem:[#allocation8 + $0x8ac] sm:$0xff]
        %v2930 = vld [vmem:[#allocation8 + $0x8b4] sm:$0xf]
        %v2931 = vld [vmem:[#allocation8 + $0x8b8] sm:$0xff]
        %v2932 = vld [vmem:[#allocation8 + $0x8c0] sm:$0xf]
        %v2933 = vld [vmem:[#allocation8 + $0x8c4] sm:$0xff]
        %v2934 = vld [vmem:[#allocation8 + $0x8cc] sm:$0xf]
        %v2935 = vld [vmem:[#allocation8 + $0x8d0] sm:$0xff]
        %v2936 = vld [vmem:[#allocation8 + $0x8d8] sm:$0xf]
        %v2937 = vld [vmem:[#allocation8 + $0x8dc] sm:$0xff]
        %v2938 = vld [vmem:[#allocation8 + $0x8e4] sm:$0xf]
        %v2939 = vld [vmem:[#allocation8 + $0x8e8] sm:$0xff]
        %v2940 = vld [vmem:[#allocation8 + $0x8f0] sm:$0xf]
        %v2941 = vld [vmem:[#allocation8 + $0x8f4] sm:$0xff]
        %v2942 = vld [vmem:[#allocation8 + $0x8fc] sm:$0xf]
        %v2943 = vld [vmem:[#allocation10] sm:$0x7]
        %v2945 = vperm.slane %v2943, 0
        %v2946 = vperm.slane %v2943, 1
        %v2947 = vperm.slane %v2943, 2
        %v3335 = vunpack.c.l.b16 %v2559
        %v3336 = vunpack.c.h.b16 %v2559
        %v3337 = vunpack.c.l.b16 %v2560
        %v3338 = vunpack.c.l.b16 %v2561
        %v3339 = vunpack.c.h.b16 %v2561
        %v3340 = vunpack.c.l.b16 %v2562
        %v3341 = vunpack.c.l.b16 %v2563
        %v3342 = vunpack.c.h.b16 %v2563
        %v3343 = vunpack.c.l.b16 %v2564
        %v3344 = vunpack.c.l.b16 %v2565
        %v3345 = vunpack.c.h.b16 %v2565
        %v3346 = vunpack.c.l.b16 %v2566
        %v3347 = vunpack.c.l.b16 %v2567
        %v3348 = vunpack.c.h.b16 %v2567
        %v3349 = vunpack.c.l.b16 %v2568
        %v3350 = vunpack.c.l.b16 %v2569
        %v3351 = vunpack.c.h.b16 %v2569
        %v3352 = vunpack.c.l.b16 %v2570
        %v3353 = vunpack.c.l.b16 %v2571
        %v3354 = vunpack.c.h.b16 %v2571
        %v3355 = vunpack.c.l.b16 %v2572
        %v3356 = vunpack.c.l.b16 %v2573
        %v3357 = vunpack.c.h.b16 %v2573
        %v3358 = vunpack.c.l.b16 %v2574
        %v3359 = vunpack.c.l.b16 %v2575
        %v3360 = vunpack.c.h.b16 %v2575
        %v3361 = vunpack.c.l.b16 %v2576
        %v3362 = vunpack.c.l.b16 %v2577
        %v3363 = vunpack.c.h.b16 %v2577
        %v3364 = vunpack.c.l.b16 %v2578
        %v3365 = vunpack.c.l.b16 %v2579
        %v3366 = vunpack.c.h.b16 %v2579
        %v3367 = vunpack.c.l.b16 %v2580
        %v3368 = vunpack.c.l.b16 %v2581
        %v3369 = vunpack.c.h.b16 %v2581
        %v3370 = vunpack.c.l.b16 %v2582
        %v3371 = vunpack.c.l.b16 %v2583
        %v3372 = vunpack.c.h.b16 %v2583
        %v3373 = vunpack.c.l.b16 %v2584
        %v3374 = vunpack.c.l.b16 %v2585
        %v3375 = vunpack.c.h.b16 %v2585
        %v3376 = vunpack.c.l.b16 %v2586
        %v3377 = vunpack.c.l.b16 %v2587
        %v3378 = vunpack.c.h.b16 %v2587
        %v3379 = vunpack.c.l.b16 %v2588
        %v3380 = vunpack.c.l.b16 %v2589
        %v3381 = vunpack.c.h.b16 %v2589
        %v3382 = vunpack.c.l.b16 %v2590
        %v3383 = vunpack.c.l.b16 %v2591
        %v3384 = vunpack.c.h.b16 %v2591
        %v3385 = vunpack.c.l.b16 %v2592
        %v3386 = vunpack.c.l.b16 %v2593
        %v3387 = vunpack.c.h.b16 %v2593
        %v3388 = vunpack.c.l.b16 %v2594
        %v3389 = vunpack.c.l.b16 %v2595
        %v3390 = vunpack.c.h.b16 %v2595
        %v3391 = vunpack.c.l.b16 %v2596
        %v3392 = vunpack.c.l.b16 %v2597
        %v3393 = vunpack.c.h.b16 %v2597
        %v3394 = vunpack.c.l.b16 %v2598
        %v3395 = vunpack.c.l.b16 %v2599
        %v3396 = vunpack.c.h.b16 %v2599
        %v3397 = vunpack.c.l.b16 %v2600
        %v3398 = vunpack.c.l.b16 %v2601
        %v3399 = vunpack.c.h.b16 %v2601
        %v3400 = vunpack.c.l.b16 %v2602
        %v3401 = vunpack.c.l.b16 %v2603
        %v3402 = vunpack.c.h.b16 %v2603
        %v3403 = vunpack.c.l.b16 %v2604
        %v3404 = vunpack.c.l.b16 %v2605
        %v3405 = vunpack.c.h.b16 %v2605
        %v3406 = vunpack.c.l.b16 %v2606
        %v3407 = vunpack.c.l.b16 %v2607
        %v3408 = vunpack.c.h.b16 %v2607
        %v3409 = vunpack.c.l.b16 %v2608
        %v3410 = vunpack.c.l.b16 %v2609
        %v3411 = vunpack.c.h.b16 %v2609
        %v3412 = vunpack.c.l.b16 %v2610
        %v3413 = vunpack.c.l.b16 %v2611
        %v3414 = vunpack.c.h.b16 %v2611
        %v3415 = vunpack.c.l.b16 %v2612
        %v3416 = vunpack.c.l.b16 %v2613
        %v3417 = vunpack.c.h.b16 %v2613
        %v3418 = vunpack.c.l.b16 %v2614
        %v3419 = vunpack.c.l.b16 %v2615
        %v3420 = vunpack.c.h.b16 %v2615
        %v3421 = vunpack.c.l.b16 %v2616
        %v3422 = vunpack.c.l.b16 %v2617
        %v3423 = vunpack.c.h.b16 %v2617
        %v3424 = vunpack.c.l.b16 %v2618
        %v3425 = vunpack.c.l.b16 %v2619
        %v3426 = vunpack.c.h.b16 %v2619
        %v3427 = vunpack.c.l.b16 %v2620
        %v3428 = vunpack.c.l.b16 %v2621
        %v3429 = vunpack.c.h.b16 %v2621
        %v3430 = vunpack.c.l.b16 %v2622
        %v3431 = vunpack.c.l.b16 %v2623
        %v3432 = vunpack.c.h.b16 %v2623
        %v3433 = vunpack.c.l.b16 %v2624
        %v3434 = vunpack.c.l.b16 %v2625
        %v3435 = vunpack.c.h.b16 %v2625
        %v3436 = vunpack.c.l.b16 %v2626
        %v3437 = vunpack.c.l.b16 %v2627
        %v3438 = vunpack.c.h.b16 %v2627
        %v3439 = vunpack.c.l.b16 %v2628
        %v3440 = vunpack.c.l.b16 %v2629
        %v3441 = vunpack.c.h.b16 %v2629
        %v3442 = vunpack.c.l.b16 %v2630
        %v3443 = vunpack.c.l.b16 %v2631
        %v3444 = vunpack.c.h.b16 %v2631
        %v3445 = vunpack.c.l.b16 %v2632
        %v3446 = vunpack.c.l.b16 %v2633
        %v3447 = vunpack.c.h.b16 %v2633
        %v3448 = vunpack.c.l.b16 %v2634
        %v3449 = vunpack.c.l.b16 %v2635
        %v3450 = vunpack.c.h.b16 %v2635
        %v3451 = vunpack.c.l.b16 %v2636
        %v3452 = vunpack.c.l.b16 %v2637
        %v3453 = vunpack.c.h.b16 %v2637
        %v3454 = vunpack.c.l.b16 %v2638
        %v3455 = vunpack.c.l.b16 %v2639
        %v3456 = vunpack.c.h.b16 %v2639
        %v3457 = vunpack.c.l.b16 %v2640
        %v3458 = vunpack.c.l.b16 %v2641
        %v3459 = vunpack.c.h.b16 %v2641
        %v3460 = vunpack.c.l.b16 %v2642
        %v3461 = vunpack.c.l.b16 %v2643
        %v3462 = vunpack.c.h.b16 %v2643
        %v3463 = vunpack.c.l.b16 %v2644
        %v3464 = vunpack.c.l.b16 %v2645
        %v3465 = vunpack.c.h.b16 %v2645
        %v3466 = vunpack.c.l.b16 %v2646
        %v3467 = vunpack.c.l.b16 %v2647
        %v3468 = vunpack.c.h.b16 %v2647
        %v3469 = vunpack.c.l.b16 %v2648
        %v3470 = vunpack.c.l.b16 %v2649
        %v3471 = vunpack.c.h.b16 %v2649
        %v3472 = vunpack.c.l.b16 %v2650
        %v3473 = vunpack.c.l.b16 %v2651
        %v3474 = vunpack.c.h.b16 %v2651
        %v3475 = vunpack.c.l.b16 %v2652
        %v3476 = vunpack.c.l.b16 %v2653
        %v3477 = vunpack.c.h.b16 %v2653
        %v3478 = vunpack.c.l.b16 %v2654
        %v3479 = vunpack.c.l.b16 %v2655
        %v3480 = vunpack.c.h.b16 %v2655
        %v3481 = vunpack.c.l.b16 %v2656
        %v3482 = vunpack.c.l.b16 %v2657
        %v3483 = vunpack.c.h.b16 %v2657
        %v3484 = vunpack.c.l.b16 %v2658
        %v3485 = vunpack.c.l.b16 %v2659
        %v3486 = vunpack.c.h.b16 %v2659
        %v3487 = vunpack.c.l.b16 %v2660
        %v3488 = vunpack.c.l.b16 %v2661
        %v3489 = vunpack.c.h.b16 %v2661
        %v3490 = vunpack.c.l.b16 %v2662
        %v3491 = vunpack.c.l.b16 %v2663
        %v3492 = vunpack.c.h.b16 %v2663
        %v3493 = vunpack.c.l.b16 %v2664
        %v3494 = vunpack.c.l.b16 %v2665
        %v3495 = vunpack.c.h.b16 %v2665
        %v3496 = vunpack.c.l.b16 %v2666
        %v3497 = vunpack.c.l.b16 %v2667
        %v3498 = vunpack.c.h.b16 %v2667
        %v3499 = vunpack.c.l.b16 %v2668
        %v3500 = vunpack.c.l.b16 %v2669
        %v3501 = vunpack.c.h.b16 %v2669
        %v3502 = vunpack.c.l.b16 %v2670
        %v3503 = vunpack.c.l.b16 %v2671
        %v3504 = vunpack.c.h.b16 %v2671
        %v3505 = vunpack.c.l.b16 %v2672
        %v3506 = vunpack.c.l.b16 %v2673
        %v3507 = vunpack.c.h.b16 %v2673
        %v3508 = vunpack.c.l.b16 %v2674
        %v3509 = vunpack.c.l.b16 %v2675
        %v3510 = vunpack.c.h.b16 %v2675
        %v3511 = vunpack.c.l.b16 %v2676
        %v3512 = vunpack.c.l.b16 %v2677
        %v3513 = vunpack.c.h.b16 %v2677
        %v3514 = vunpack.c.l.b16 %v2678
        %v3515 = vunpack.c.l.b16 %v2679
        %v3516 = vunpack.c.h.b16 %v2679
        %v3517 = vunpack.c.l.b16 %v2680
        %v3518 = vunpack.c.l.b16 %v2681
        %v3519 = vunpack.c.h.b16 %v2681
        %v3520 = vunpack.c.l.b16 %v2682
        %v3521 = vunpack.c.l.b16 %v2683
        %v3522 = vunpack.c.h.b16 %v2683
        %v3523 = vunpack.c.l.b16 %v2684
        %v3524 = vunpack.c.l.b16 %v2685
        %v3525 = vunpack.c.h.b16 %v2685
        %v3526 = vunpack.c.l.b16 %v2686
        %v3527 = vunpack.c.l.b16 %v2687
        %v3528 = vunpack.c.h.b16 %v2687
        %v3529 = vunpack.c.l.b16 %v2688
        %v3530 = vunpack.c.l.b16 %v2689
        %v3531 = vunpack.c.h.b16 %v2689
        %v3532 = vunpack.c.l.b16 %v2690
        %v3533 = vunpack.c.l.b16 %v2691
        %v3534 = vunpack.c.h.b16 %v2691
        %v3535 = vunpack.c.l.b16 %v2692
        %v3536 = vunpack.c.l.b16 %v2693
        %v3537 = vunpack.c.h.b16 %v2693
        %v3538 = vunpack.c.l.b16 %v2694
        %v3539 = vunpack.c.l.b16 %v2695
        %v3540 = vunpack.c.h.b16 %v2695
        %v3541 = vunpack.c.l.b16 %v2696
        %v3542 = vunpack.c.l.b16 %v2697
        %v3543 = vunpack.c.h.b16 %v2697
        %v3544 = vunpack.c.l.b16 %v2698
        %v3545 = vunpack.c.l.b16 %v2699
        %v3546 = vunpack.c.h.b16 %v2699
        %v3547 = vunpack.c.l.b16 %v2700
        %v3548 = vunpack.c.l.b16 %v2701
        %v3549 = vunpack.c.h.b16 %v2701
        %v3550 = vunpack.c.l.b16 %v2702
        %v3551 = vunpack.c.l.b16 %v2703
        %v3552 = vunpack.c.h.b16 %v2703
        %v3553 = vunpack.c.l.b16 %v2704
        %v3554 = vunpack.c.l.b16 %v2705
        %v3555 = vunpack.c.h.b16 %v2705
        %v3556 = vunpack.c.l.b16 %v2706
        %v3557 = vunpack.c.l.b16 %v2707
        %v3558 = vunpack.c.h.b16 %v2707
        %v3559 = vunpack.c.l.b16 %v2708
        %v3560 = vunpack.c.l.b16 %v2709
        %v3561 = vunpack.c.h.b16 %v2709
        %v3562 = vunpack.c.l.b16 %v2710
        %v3563 = vunpack.c.l.b16 %v2711
        %v3564 = vunpack.c.h.b16 %v2711
        %v3565 = vunpack.c.l.b16 %v2712
        %v3566 = vunpack.c.l.b16 %v2713
        %v3567 = vunpack.c.h.b16 %v2713
        %v3568 = vunpack.c.l.b16 %v2714
        %v3569 = vunpack.c.l.b16 %v2715
        %v3570 = vunpack.c.h.b16 %v2715
        %v3571 = vunpack.c.l.b16 %v2716
        %v3572 = vunpack.c.l.b16 %v2717
        %v3573 = vunpack.c.h.b16 %v2717
        %v3574 = vunpack.c.l.b16 %v2718
        %v3575 = vunpack.c.l.b16 %v2719
        %v3576 = vunpack.c.h.b16 %v2719
        %v3577 = vunpack.c.l.b16 %v2720
        %v3578 = vunpack.c.l.b16 %v2721
        %v3579 = vunpack.c.h.b16 %v2721
        %v3580 = vunpack.c.l.b16 %v2722
        %v3581 = vunpack.c.l.b16 %v2723
        %v3582 = vunpack.c.h.b16 %v2723
        %v3583 = vunpack.c.l.b16 %v2724
        %v3584 = vunpack.c.l.b16 %v2725
        %v3585 = vunpack.c.h.b16 %v2725
        %v3586 = vunpack.c.l.b16 %v2726
        %v3587 = vunpack.c.l.b16 %v2727
        %v3588 = vunpack.c.h.b16 %v2727
        %v3589 = vunpack.c.l.b16 %v2728
        %v3590 = vunpack.c.l.b16 %v2729
        %v3591 = vunpack.c.h.b16 %v2729
        %v3592 = vunpack.c.l.b16 %v2730
        %v3593 = vunpack.c.l.b16 %v2731
        %v3594 = vunpack.c.h.b16 %v2731
        %v3595 = vunpack.c.l.b16 %v2732
        %v3596 = vunpack.c.l.b16 %v2733
        %v3597 = vunpack.c.h.b16 %v2733
        %v3598 = vunpack.c.l.b16 %v2734
        %v3599 = vunpack.c.l.b16 %v2735
        %v3600 = vunpack.c.h.b16 %v2735
        %v3601 = vunpack.c.l.b16 %v2736
        %v3602 = vunpack.c.l.b16 %v2737
        %v3603 = vunpack.c.h.b16 %v2737
        %v3604 = vunpack.c.l.b16 %v2738
        %v3605 = vunpack.c.l.b16 %v2739
        %v3606 = vunpack.c.h.b16 %v2739
        %v3607 = vunpack.c.l.b16 %v2740
        %v3608 = vunpack.c.l.b16 %v2741
        %v3609 = vunpack.c.h.b16 %v2741
        %v3610 = vunpack.c.l.b16 %v2742
        %v3611 = vunpack.c.l.b16 %v2743
        %v3612 = vunpack.c.h.b16 %v2743
        %v3613 = vunpack.c.l.b16 %v2744
        %v3614 = vunpack.c.l.b16 %v2745
        %v3615 = vunpack.c.h.b16 %v2745
        %v3616 = vunpack.c.l.b16 %v2746
        %v3617 = vunpack.c.l.b16 %v2747
        %v3618 = vunpack.c.h.b16 %v2747
        %v3619 = vunpack.c.l.b16 %v2748
        %v3620 = vunpack.c.l.b16 %v2749
        %v3621 = vunpack.c.h.b16 %v2749
        %v3622 = vunpack.c.l.b16 %v2750
        %v3623 = vunpack.c.l.b16 %v2751
        %v3624 = vunpack.c.h.b16 %v2751
        %v3625 = vunpack.c.l.b16 %v2752
        %v3626 = vunpack.c.l.b16 %v2753
        %v3627 = vunpack.c.h.b16 %v2753
        %v3628 = vunpack.c.l.b16 %v2754
        %v3629 = vunpack.c.l.b16 %v2755
        %v3630 = vunpack.c.h.b16 %v2755
        %v3631 = vunpack.c.l.b16 %v2756
        %v3632 = vunpack.c.l.b16 %v2757
        %v3633 = vunpack.c.h.b16 %v2757
        %v3634 = vunpack.c.l.b16 %v2758
        %v3635 = vunpack.c.l.b16 %v2759
        %v3636 = vunpack.c.h.b16 %v2759
        %v3637 = vunpack.c.l.b16 %v2760
        %v3638 = vunpack.c.l.b16 %v2761
        %v3639 = vunpack.c.h.b16 %v2761
        %v3640 = vunpack.c.l.b16 %v2762
        %v3641 = vunpack.c.l.b16 %v2763
        %v3642 = vunpack.c.h.b16 %v2763
        %v3643 = vunpack.c.l.b16 %v2764
        %v3644 = vunpack.c.l.b16 %v2765
        %v3645 = vunpack.c.h.b16 %v2765
        %v3646 = vunpack.c.l.b16 %v2766
        %v3647 = vunpack.c.l.b16 %v2767
        %v3648 = vunpack.c.h.b16 %v2767
        %v3649 = vunpack.c.l.b16 %v2768
        %v3650 = vunpack.c.l.b16 %v2769
        %v3651 = vunpack.c.h.b16 %v2769
        %v3652 = vunpack.c.l.b16 %v2770
        %v3653 = vunpack.c.l.b16 %v2771
        %v3654 = vunpack.c.h.b16 %v2771
        %v3655 = vunpack.c.l.b16 %v2772
        %v3656 = vunpack.c.l.b16 %v2773
        %v3657 = vunpack.c.h.b16 %v2773
        %v3658 = vunpack.c.l.b16 %v2774
        %v3659 = vunpack.c.l.b16 %v2775
        %v3660 = vunpack.c.h.b16 %v2775
        %v3661 = vunpack.c.l.b16 %v2776
        %v3662 = vunpack.c.l.b16 %v2777
        %v3663 = vunpack.c.h.b16 %v2777
        %v3664 = vunpack.c.l.b16 %v2778
        %v3665 = vunpack.c.l.b16 %v2779
        %v3666 = vunpack.c.h.b16 %v2779
        %v3667 = vunpack.c.l.b16 %v2780
        %v3668 = vunpack.c.l.b16 %v2781
        %v3669 = vunpack.c.h.b16 %v2781
        %v3670 = vunpack.c.l.b16 %v2782
        %v3671 = vunpack.c.l.b16 %v2783
        %v3672 = vunpack.c.h.b16 %v2783
        %v3673 = vunpack.c.l.b16 %v2784
        %v3674 = vunpack.c.l.b16 %v2785
        %v3675 = vunpack.c.h.b16 %v2785
        %v3676 = vunpack.c.l.b16 %v2786
        %v3677 = vunpack.c.l.b16 %v2787
        %v3678 = vunpack.c.h.b16 %v2787
        %v3679 = vunpack.c.l.b16 %v2788
        %v3680 = vunpack.c.l.b16 %v2789
        %v3681 = vunpack.c.h.b16 %v2789
        %v3682 = vunpack.c.l.b16 %v2790
        %v3683 = vunpack.c.l.b16 %v2791
        %v3684 = vunpack.c.h.b16 %v2791
        %v3685 = vunpack.c.l.b16 %v2792
        %v3686 = vunpack.c.l.b16 %v2793
        %v3687 = vunpack.c.h.b16 %v2793
        %v3688 = vunpack.c.l.b16 %v2794
        %v3689 = vunpack.c.l.b16 %v2795
        %v3690 = vunpack.c.h.b16 %v2795
        %v3691 = vunpack.c.l.b16 %v2796
        %v3692 = vunpack.c.l.b16 %v2797
        %v3693 = vunpack.c.h.b16 %v2797
        %v3694 = vunpack.c.l.b16 %v2798
        %v3695 = vunpack.c.l.b16 %v2799
        %v3696 = vunpack.c.h.b16 %v2799
        %v3697 = vunpack.c.l.b16 %v2800
        %v3698 = vunpack.c.l.b16 %v2801
        %v3699 = vunpack.c.h.b16 %v2801
        %v3700 = vunpack.c.l.b16 %v2802
        %v3701 = vunpack.c.l.b16 %v2803
        %v3702 = vunpack.c.h.b16 %v2803
        %v3703 = vunpack.c.l.b16 %v2804
        %v3704 = vunpack.c.l.b16 %v2805
        %v3705 = vunpack.c.h.b16 %v2805
        %v3706 = vunpack.c.l.b16 %v2806
        %v3707 = vunpack.c.l.b16 %v2807
        %v3708 = vunpack.c.h.b16 %v2807
        %v3709 = vunpack.c.l.b16 %v2808
        %v3710 = vunpack.c.l.b16 %v2809
        %v3711 = vunpack.c.h.b16 %v2809
        %v3712 = vunpack.c.l.b16 %v2810
        %v3713 = vunpack.c.l.b16 %v2811
        %v3714 = vunpack.c.h.b16 %v2811
        %v3715 = vunpack.c.l.b16 %v2812
        %v3716 = vunpack.c.l.b16 %v2813
        %v3717 = vunpack.c.h.b16 %v2813
        %v3718 = vunpack.c.l.b16 %v2814
        %v3719 = vunpack.c.l.b16 %v2815
        %v3720 = vunpack.c.h.b16 %v2815
        %v3721 = vunpack.c.l.b16 %v2816
        %v3722 = vunpack.c.l.b16 %v2817
        %v3723 = vunpack.c.h.b16 %v2817
        %v3724 = vunpack.c.l.b16 %v2818
        %v3725 = vunpack.c.l.b16 %v2819
        %v3726 = vunpack.c.h.b16 %v2819
        %v3727 = vunpack.c.l.b16 %v2820
        %v3728 = vunpack.c.l.b16 %v2821
        %v3729 = vunpack.c.h.b16 %v2821
        %v3730 = vunpack.c.l.b16 %v2822
        %v3731 = vunpack.c.l.b16 %v2823
        %v3732 = vunpack.c.h.b16 %v2823
        %v3733 = vunpack.c.l.b16 %v2824
        %v3734 = vunpack.c.l.b16 %v2825
        %v3735 = vunpack.c.h.b16 %v2825
        %v3736 = vunpack.c.l.b16 %v2826
        %v3737 = vunpack.c.l.b16 %v2827
        %v3738 = vunpack.c.h.b16 %v2827
        %v3739 = vunpack.c.l.b16 %v2828
        %v3740 = vunpack.c.l.b16 %v2829
        %v3741 = vunpack.c.h.b16 %v2829
        %v3742 = vunpack.c.l.b16 %v2830
        %v3743 = vunpack.c.l.b16 %v2831
        %v3744 = vunpack.c.h.b16 %v2831
        %v3745 = vunpack.c.l.b16 %v2832
        %v3746 = vunpack.c.l.b16 %v2833
        %v3747 = vunpack.c.h.b16 %v2833
        %v3748 = vunpack.c.l.b16 %v2834
        %v3749 = vunpack.c.l.b16 %v2835
        %v3750 = vunpack.c.h.b16 %v2835
        %v3751 = vunpack.c.l.b16 %v2836
        %v3752 = vunpack.c.l.b16 %v2837
        %v3753 = vunpack.c.h.b16 %v2837
        %v3754 = vunpack.c.l.b16 %v2838
        %v3755 = vunpack.c.l.b16 %v2839
        %v3756 = vunpack.c.h.b16 %v2839
        %v3757 = vunpack.c.l.b16 %v2840
        %v3758 = vunpack.c.l.b16 %v2841
        %v3759 = vunpack.c.h.b16 %v2841
        %v3760 = vunpack.c.l.b16 %v2842
        %v3761 = vunpack.c.l.b16 %v2843
        %v3762 = vunpack.c.h.b16 %v2843
        %v3763 = vunpack.c.l.b16 %v2844
        %v3764 = vunpack.c.l.b16 %v2845
        %v3765 = vunpack.c.h.b16 %v2845
        %v3766 = vunpack.c.l.b16 %v2846
        %v3767 = vunpack.c.l.b16 %v2847
        %v3768 = vunpack.c.h.b16 %v2847
        %v3769 = vunpack.c.l.b16 %v2848
        %v3770 = vunpack.c.l.b16 %v2849
        %v3771 = vunpack.c.h.b16 %v2849
        %v3772 = vunpack.c.l.b16 %v2850
        %v3773 = vunpack.c.l.b16 %v2851
        %v3774 = vunpack.c.h.b16 %v2851
        %v3775 = vunpack.c.l.b16 %v2852
        %v3776 = vunpack.c.l.b16 %v2853
        %v3777 = vunpack.c.h.b16 %v2853
        %v3778 = vunpack.c.l.b16 %v2854
        %v3779 = vunpack.c.l.b16 %v2855
        %v3780 = vunpack.c.h.b16 %v2855
        %v3781 = vunpack.c.l.b16 %v2856
        %v3782 = vunpack.c.l.b16 %v2857
        %v3783 = vunpack.c.h.b16 %v2857
        %v3784 = vunpack.c.l.b16 %v2858
        %v3785 = vunpack.c.l.b16 %v2859
        %v3786 = vunpack.c.h.b16 %v2859
        %v3787 = vunpack.c.l.b16 %v2860
        %v3788 = vunpack.c.l.b16 %v2861
        %v3789 = vunpack.c.h.b16 %v2861
        %v3790 = vunpack.c.l.b16 %v2862
        %v3791 = vunpack.c.l.b16 %v2863
        %v3792 = vunpack.c.h.b16 %v2863
        %v3793 = vunpack.c.l.b16 %v2864
        %v3794 = vunpack.c.l.b16 %v2865
        %v3795 = vunpack.c.h.b16 %v2865
        %v3796 = vunpack.c.l.b16 %v2866
        %v3797 = vunpack.c.l.b16 %v2867
        %v3798 = vunpack.c.h.b16 %v2867
        %v3799 = vunpack.c.l.b16 %v2868
        %v3800 = vunpack.c.l.b16 %v2869
        %v3801 = vunpack.c.h.b16 %v2869
        %v3802 = vunpack.c.l.b16 %v2870
        %v3803 = vunpack.c.l.b16 %v2871
        %v3804 = vunpack.c.h.b16 %v2871
        %v3805 = vunpack.c.l.b16 %v2872
        %v3806 = vunpack.c.l.b16 %v2873
        %v3807 = vunpack.c.h.b16 %v2873
        %v3808 = vunpack.c.l.b16 %v2874
        %v3809 = vunpack.c.l.b16 %v2875
        %v3810 = vunpack.c.h.b16 %v2875
        %v3811 = vunpack.c.l.b16 %v2876
        %v3812 = vunpack.c.l.b16 %v2877
        %v3813 = vunpack.c.h.b16 %v2877
        %v3814 = vunpack.c.l.b16 %v2878
        %v3815 = vunpack.c.l.b16 %v2879
        %v3816 = vunpack.c.h.b16 %v2879
        %v3817 = vunpack.c.l.b16 %v2880
        %v3818 = vunpack.c.l.b16 %v2881
        %v3819 = vunpack.c.h.b16 %v2881
        %v3820 = vunpack.c.l.b16 %v2882
        %v3821 = vunpack.c.l.b16 %v2883
        %v3822 = vunpack.c.h.b16 %v2883
        %v3823 = vunpack.c.l.b16 %v2884
        %v3824 = vunpack.c.l.b16 %v2885
        %v3825 = vunpack.c.h.b16 %v2885
        %v3826 = vunpack.c.l.b16 %v2886
        %v3827 = vunpack.c.l.b16 %v2887
        %v3828 = vunpack.c.h.b16 %v2887
        %v3829 = vunpack.c.l.b16 %v2888
        %v3830 = vunpack.c.l.b16 %v2889
        %v3831 = vunpack.c.h.b16 %v2889
        %v3832 = vunpack.c.l.b16 %v2890
        %v3833 = vunpack.c.l.b16 %v2891
        %v3834 = vunpack.c.h.b16 %v2891
        %v3835 = vunpack.c.l.b16 %v2892
        %v3836 = vunpack.c.l.b16 %v2893
        %v3837 = vunpack.c.h.b16 %v2893
        %v3838 = vunpack.c.l.b16 %v2894
        %v3839 = vunpack.c.l.b16 %v2895
        %v3840 = vunpack.c.h.b16 %v2895
        %v3841 = vunpack.c.l.b16 %v2896
        %v3842 = vunpack.c.l.b16 %v2897
        %v3843 = vunpack.c.h.b16 %v2897
        %v3844 = vunpack.c.l.b16 %v2898
        %v3845 = vunpack.c.l.b16 %v2899
        %v3846 = vunpack.c.h.b16 %v2899
        %v3847 = vunpack.c.l.b16 %v2900
        %v3848 = vunpack.c.l.b16 %v2901
        %v3849 = vunpack.c.h.b16 %v2901
        %v3850 = vunpack.c.l.b16 %v2902
        %v3851 = vunpack.c.l.b16 %v2903
        %v3852 = vunpack.c.h.b16 %v2903
        %v3853 = vunpack.c.l.b16 %v2904
        %v3854 = vunpack.c.l.b16 %v2905
        %v3855 = vunpack.c.h.b16 %v2905
        %v3856 = vunpack.c.l.b16 %v2906
        %v3857 = vunpack.c.l.b16 %v2907
        %v3858 = vunpack.c.h.b16 %v2907
        %v3859 = vunpack.c.l.b16 %v2908
        %v3860 = vunpack.c.l.b16 %v2909
        %v3861 = vunpack.c.h.b16 %v2909
        %v3862 = vunpack.c.l.b16 %v2910
        %v3863 = vunpack.c.l.b16 %v2911
        %v3864 = vunpack.c.h.b16 %v2911
        %v3865 = vunpack.c.l.b16 %v2912
        %v3866 = vunpack.c.l.b16 %v2913
        %v3867 = vunpack.c.h.b16 %v2913
        %v3868 = vunpack.c.l.b16 %v2914
        %v3869 = vunpack.c.l.b16 %v2915
        %v3870 = vunpack.c.h.b16 %v2915
        %v3871 = vunpack.c.l.b16 %v2916
        %v3872 = vunpack.c.l.b16 %v2917
        %v3873 = vunpack.c.h.b16 %v2917
        %v3874 = vunpack.c.l.b16 %v2918
        %v3875 = vunpack.c.l.b16 %v2919
        %v3876 = vunpack.c.h.b16 %v2919
        %v3877 = vunpack.c.l.b16 %v2920
        %v3878 = vunpack.c.l.b16 %v2921
        %v3879 = vunpack.c.h.b16 %v2921
        %v3880 = vunpack.c.l.b16 %v2922
        %v3881 = vunpack.c.l.b16 %v2923
        %v3882 = vunpack.c.h.b16 %v2923
        %v3883 = vunpack.c.l.b16 %v2924
        %v3884 = vunpack.c.l.b16 %v2925
        %v3885 = vunpack.c.h.b16 %v2925
        %v3886 = vunpack.c.l.b16 %v2926
        %v3887 = vunpack.c.l.b16 %v2927
        %v3888 = vunpack.c.h.b16 %v2927
        %v3889 = vunpack.c.l.b16 %v2928
        %v3890 = vunpack.c.l.b16 %v2929
        %v3891 = vunpack.c.h.b16 %v2929
        %v3892 = vunpack.c.l.b16 %v2930
        %v3893 = vunpack.c.l.b16 %v2931
        %v3894 = vunpack.c.h.b16 %v2931
        %v3895 = vunpack.c.l.b16 %v2932
        %v3896 = vunpack.c.l.b16 %v2933
        %v3897 = vunpack.c.h.b16 %v2933
        %v3898 = vunpack.c.l.b16 %v2934
        %v3899 = vunpack.c.l.b16 %v2935
        %v3900 = vunpack.c.h.b16 %v2935
        %v3901 = vunpack.c.l.b16 %v2936
        %v3902 = vunpack.c.l.b16 %v2937
        %v3903 = vunpack.c.h.b16 %v2937
        %v3904 = vunpack.c.l.b16 %v2938
        %v3905 = vunpack.c.l.b16 %v2939
        %v3906 = vunpack.c.h.b16 %v2939
        %v3907 = vunpack.c.l.b16 %v2940
        %v3908 = vunpack.c.l.b16 %v2941
        %v3909 = vunpack.c.h.b16 %v2941
        %v3910 = vunpack.c.l.b16 %v2942
        %v3911 = vpack.c.b16 %v3338, %v3335
        %v3912 = vpack.c.b16 %v3339, %v3336
        %v3913 = vpack.c.b16 %v3340, %v3337
        %v3914 = vpack.c.b16 %v3344, %v3341
        %v3915 = vpack.c.b16 %v3345, %v3342
        %v3916 = vpack.c.b16 %v3346, %v3343
        %v3917 = vpack.c.b16 %v3350, %v3347
        %v3918 = vpack.c.b16 %v3351, %v3348
        %v3919 = vpack.c.b16 %v3352, %v3349
        %v3920 = vpack.c.b16 %v3356, %v3353
        %v3921 = vpack.c.b16 %v3357, %v3354
        %v3922 = vpack.c.b16 %v3358, %v3355
        %v3923 = vpack.c.b16 %v3362, %v3359
        %v3924 = vpack.c.b16 %v3363, %v3360
        %v3925 = vpack.c.b16 %v3364, %v3361
        %v3926 = vpack.c.b16 %v3368, %v3365
        %v3927 = vpack.c.b16 %v3369, %v3366
        %v3928 = vpack.c.b16 %v3370, %v3367
        %v3929 = vpack.c.b16 %v3374, %v3371
        %v3930 = vpack.c.b16 %v3375, %v3372
        %v3931 = vpack.c.b16 %v3376, %v3373
        %v3932 = vpack.c.b16 %v3380, %v3377
        %v3933 = vpack.c.b16 %v3381, %v3378
        %v3934 = vpack.c.b16 %v3382, %v3379
        %v3935 = vpack.c.b16 %v3386, %v3383
        %v3936 = vpack.c.b16 %v3387, %v3384
        %v3937 = vpack.c.b16 %v3388, %v3385
        %v3938 = vpack.c.b16 %v3392, %v3389
        %v3939 = vpack.c.b16 %v3393, %v3390
        %v3940 = vpack.c.b16 %v3394, %v3391
        %v3941 = vpack.c.b16 %v3398, %v3395
        %v3942 = vpack.c.b16 %v3399, %v3396
        %v3943 = vpack.c.b16 %v3400, %v3397
        %v3944 = vpack.c.b16 %v3404, %v3401
        %v3945 = vpack.c.b16 %v3405, %v3402
        %v3946 = vpack.c.b16 %v3406, %v3403
        %v3947 = vpack.c.b16 %v3410, %v3407
        %v3948 = vpack.c.b16 %v3411, %v3408
        %v3949 = vpack.c.b16 %v3412, %v3409
        %v3950 = vpack.c.b16 %v3416, %v3413
        %v3951 = vpack.c.b16 %v3417, %v3414
        %v3952 = vpack.c.b16 %v3418, %v3415
        %v3953 = vpack.c.b16 %v3422, %v3419
        %v3954 = vpack.c.b16 %v3423, %v3420
        %v3955 = vpack.c.b16 %v3424, %v3421
        %v3956 = vpack.c.b16 %v3428, %v3425
        %v3957 = vpack.c.b16 %v3429, %v3426
        %v3958 = vpack.c.b16 %v3430, %v3427
        %v3959 = vpack.c.b16 %v3434, %v3431
        %v3960 = vpack.c.b16 %v3435, %v3432
        %v3961 = vpack.c.b16 %v3436, %v3433
        %v3962 = vpack.c.b16 %v3440, %v3437
        %v3963 = vpack.c.b16 %v3441, %v3438
        %v3964 = vpack.c.b16 %v3442, %v3439
        %v3965 = vpack.c.b16 %v3446, %v3443
        %v3966 = vpack.c.b16 %v3447, %v3444
        %v3967 = vpack.c.b16 %v3448, %v3445
        %v3968 = vpack.c.b16 %v3452, %v3449
        %v3969 = vpack.c.b16 %v3453, %v3450
        %v3970 = vpack.c.b16 %v3454, %v3451
        %v3971 = vpack.c.b16 %v3458, %v3455
        %v3972 = vpack.c.b16 %v3459, %v3456
        %v3973 = vpack.c.b16 %v3460, %v3457
        %v3974 = vpack.c.b16 %v3464, %v3461
        %v3975 = vpack.c.b16 %v3465, %v3462
        %v3976 = vpack.c.b16 %v3466, %v3463
        %v3977 = vpack.c.b16 %v3470, %v3467
        %v3978 = vpack.c.b16 %v3471, %v3468
        %v3979 = vpack.c.b16 %v3472, %v3469
        %v3980 = vpack.c.b16 %v3476, %v3473
        %v3981 = vpack.c.b16 %v3477, %v3474
        %v3982 = vpack.c.b16 %v3478, %v3475
        %v3983 = vpack.c.b16 %v3482, %v3479
        %v3984 = vpack.c.b16 %v3483, %v3480
        %v3985 = vpack.c.b16 %v3484, %v3481
        %v3986 = vpack.c.b16 %v3488, %v3485
        %v3987 = vpack.c.b16 %v3489, %v3486
        %v3988 = vpack.c.b16 %v3490, %v3487
        %v3989 = vpack.c.b16 %v3494, %v3491
        %v3990 = vpack.c.b16 %v3495, %v3492
        %v3991 = vpack.c.b16 %v3496, %v3493
        %v3992 = vpack.c.b16 %v3500, %v3497
        %v3993 = vpack.c.b16 %v3501, %v3498
        %v3994 = vpack.c.b16 %v3502, %v3499
        %v3995 = vpack.c.b16 %v3506, %v3503
        %v3996 = vpack.c.b16 %v3507, %v3504
        %v3997 = vpack.c.b16 %v3508, %v3505
        %v3998 = vpack.c.b16 %v3512, %v3509
        %v3999 = vpack.c.b16 %v3513, %v3510
        %v4000 = vpack.c.b16 %v3514, %v3511
        %v4001 = vpack.c.b16 %v3518, %v3515
        %v4002 = vpack.c.b16 %v3519, %v3516
        %v4003 = vpack.c.b16 %v3520, %v3517
        %v4004 = vpack.c.b16 %v3524, %v3521
        %v4005 = vpack.c.b16 %v3525, %v3522
        %v4006 = vpack.c.b16 %v3526, %v3523
        %v4007 = vpack.c.b16 %v3530, %v3527
        %v4008 = vpack.c.b16 %v3531, %v3528
        %v4009 = vpack.c.b16 %v3532, %v3529
        %v4010 = vpack.c.b16 %v3536, %v3533
        %v4011 = vpack.c.b16 %v3537, %v3534
        %v4012 = vpack.c.b16 %v3538, %v3535
        %v4013 = vpack.c.b16 %v3542, %v3539
        %v4014 = vpack.c.b16 %v3543, %v3540
        %v4015 = vpack.c.b16 %v3544, %v3541
        %v4016 = vpack.c.b16 %v3548, %v3545
        %v4017 = vpack.c.b16 %v3549, %v3546
        %v4018 = vpack.c.b16 %v3550, %v3547
        %v4019 = vpack.c.b16 %v3554, %v3551
        %v4020 = vpack.c.b16 %v3555, %v3552
        %v4021 = vpack.c.b16 %v3556, %v3553
        %v4022 = vpack.c.b16 %v3560, %v3557
        %v4023 = vpack.c.b16 %v3561, %v3558
        %v4024 = vpack.c.b16 %v3562, %v3559
        %v4025 = vpack.c.b16 %v3566, %v3563
        %v4026 = vpack.c.b16 %v3567, %v3564
        %v4027 = vpack.c.b16 %v3568, %v3565
        %v4028 = vpack.c.b16 %v3572, %v3569
        %v4029 = vpack.c.b16 %v3573, %v3570
        %v4030 = vpack.c.b16 %v3574, %v3571
        %v4031 = vpack.c.b16 %v3578, %v3575
        %v4032 = vpack.c.b16 %v3579, %v3576
        %v4033 = vpack.c.b16 %v3580, %v3577
        %v4034 = vpack.c.b16 %v3584, %v3581
        %v4035 = vpack.c.b16 %v3585, %v3582
        %v4036 = vpack.c.b16 %v3586, %v3583
        %v4037 = vpack.c.b16 %v3590, %v3587
        %v4038 = vpack.c.b16 %v3591, %v3588
        %v4039 = vpack.c.b16 %v3592, %v3589
        %v4040 = vpack.c.b16 %v3596, %v3593
        %v4041 = vpack.c.b16 %v3597, %v3594
        %v4042 = vpack.c.b16 %v3598, %v3595
        %v4043 = vpack.c.b16 %v3602, %v3599
        %v4044 = vpack.c.b16 %v3603, %v3600
        %v4045 = vpack.c.b16 %v3604, %v3601
        %v4046 = vpack.c.b16 %v3608, %v3605
        %v4047 = vpack.c.b16 %v3609, %v3606
        %v4048 = vpack.c.b16 %v3610, %v3607
        %v4049 = vpack.c.b16 %v3614, %v3611
        %v4050 = vpack.c.b16 %v3615, %v3612
        %v4051 = vpack.c.b16 %v3616, %v3613
        %v4052 = vpack.c.b16 %v3620, %v3617
        %v4053 = vpack.c.b16 %v3621, %v3618
        %v4054 = vpack.c.b16 %v3622, %v3619
        %v4055 = vpack.c.b16 %v3626, %v3623
        %v4056 = vpack.c.b16 %v3627, %v3624
        %v4057 = vpack.c.b16 %v3628, %v3625
        %v4058 = vpack.c.b16 %v3632, %v3629
        %v4059 = vpack.c.b16 %v3633, %v3630
        %v4060 = vpack.c.b16 %v3634, %v3631
        %v4061 = vpack.c.b16 %v3638, %v3635
        %v4062 = vpack.c.b16 %v3639, %v3636
        %v4063 = vpack.c.b16 %v3640, %v3637
        %v4064 = vpack.c.b16 %v3644, %v3641
        %v4065 = vpack.c.b16 %v3645, %v3642
        %v4066 = vpack.c.b16 %v3646, %v3643
        %v4067 = vpack.c.b16 %v3650, %v3647
        %v4068 = vpack.c.b16 %v3651, %v3648
        %v4069 = vpack.c.b16 %v3652, %v3649
        %v4070 = vpack.c.b16 %v3656, %v3653
        %v4071 = vpack.c.b16 %v3657, %v3654
        %v4072 = vpack.c.b16 %v3658, %v3655
        %v4073 = vpack.c.b16 %v3662, %v3659
        %v4074 = vpack.c.b16 %v3663, %v3660
        %v4075 = vpack.c.b16 %v3664, %v3661
        %v4076 = vpack.c.b16 %v3668, %v3665
        %v4077 = vpack.c.b16 %v3669, %v3666
        %v4078 = vpack.c.b16 %v3670, %v3667
        %v4079 = vpack.c.b16 %v3674, %v3671
        %v4080 = vpack.c.b16 %v3675, %v3672
        %v4081 = vpack.c.b16 %v3676, %v3673
        %v4082 = vpack.c.b16 %v3680, %v3677
        %v4083 = vpack.c.b16 %v3681, %v3678
        %v4084 = vpack.c.b16 %v3682, %v3679
        %v4085 = vpack.c.b16 %v3686, %v3683
        %v4086 = vpack.c.b16 %v3687, %v3684
        %v4087 = vpack.c.b16 %v3688, %v3685
        %v4088 = vpack.c.b16 %v3692, %v3689
        %v4089 = vpack.c.b16 %v3693, %v3690
        %v4090 = vpack.c.b16 %v3694, %v3691
        %v4091 = vpack.c.b16 %v3698, %v3695
        %v4092 = vpack.c.b16 %v3699, %v3696
        %v4093 = vpack.c.b16 %v3700, %v3697
        %v4094 = vpack.c.b16 %v3704, %v3701
        %v4095 = vpack.c.b16 %v3705, %v3702
        %v4096 = vpack.c.b16 %v3706, %v3703
        %v4097 = vpack.c.b16 %v3710, %v3707
        %v4098 = vpack.c.b16 %v3711, %v3708
        %v4099 = vpack.c.b16 %v3712, %v3709
        %v4100 = vpack.c.b16 %v3716, %v3713
        %v4101 = vpack.c.b16 %v3717, %v3714
        %v4102 = vpack.c.b16 %v3718, %v3715
        %v4103 = vpack.c.b16 %v3722, %v3719
        %v4104 = vpack.c.b16 %v3723, %v3720
        %v4105 = vpack.c.b16 %v3724, %v3721
        %v4106 = vpack.c.b16 %v3728, %v3725
        %v4107 = vpack.c.b16 %v3729, %v3726
        %v4108 = vpack.c.b16 %v3730, %v3727
        %v4109 = vpack.c.b16 %v3734, %v3731
        %v4110 = vpack.c.b16 %v3735, %v3732
        %v4111 = vpack.c.b16 %v3736, %v3733
        %v4112 = vpack.c.b16 %v3740, %v3737
        %v4113 = vpack.c.b16 %v3741, %v3738
        %v4114 = vpack.c.b16 %v3742, %v3739
        %v4115 = vpack.c.b16 %v3746, %v3743
        %v4116 = vpack.c.b16 %v3747, %v3744
        %v4117 = vpack.c.b16 %v3748, %v3745
        %v4118 = vpack.c.b16 %v3752, %v3749
        %v4119 = vpack.c.b16 %v3753, %v3750
        %v4120 = vpack.c.b16 %v3754, %v3751
        %v4121 = vpack.c.b16 %v3758, %v3755
        %v4122 = vpack.c.b16 %v3759, %v3756
        %v4123 = vpack.c.b16 %v3760, %v3757
        %v4124 = vpack.c.b16 %v3764, %v3761
        %v4125 = vpack.c.b16 %v3765, %v3762
        %v4126 = vpack.c.b16 %v3766, %v3763
        %v4127 = vpack.c.b16 %v3770, %v3767
        %v4128 = vpack.c.b16 %v3771, %v3768
        %v4129 = vpack.c.b16 %v3772, %v3769
        %v4130 = vpack.c.b16 %v3776, %v3773
        %v4131 = vpack.c.b16 %v3777, %v3774
        %v4132 = vpack.c.b16 %v3778, %v3775
        %v4133 = vpack.c.b16 %v3782, %v3779
        %v4134 = vpack.c.b16 %v3783, %v3780
        %v4135 = vpack.c.b16 %v3784, %v3781
        %v4136 = vpack.c.b16 %v3788, %v3785
        %v4137 = vpack.c.b16 %v3789, %v3786
        %v4138 = vpack.c.b16 %v3790, %v3787
        %v4139 = vpack.c.b16 %v3794, %v3791
        %v4140 = vpack.c.b16 %v3795, %v3792
        %v4141 = vpack.c.b16 %v3796, %v3793
        %v4142 = vpack.c.b16 %v3800, %v3797
        %v4143 = vpack.c.b16 %v3801, %v3798
        %v4144 = vpack.c.b16 %v3802, %v3799
        %v4145 = vpack.c.b16 %v3806, %v3803
        %v4146 = vpack.c.b16 %v3807, %v3804
        %v4147 = vpack.c.b16 %v3808, %v3805
        %v4148 = vpack.c.b16 %v3812, %v3809
        %v4149 = vpack.c.b16 %v3813, %v3810
        %v4150 = vpack.c.b16 %v3814, %v3811
        %v4151 = vpack.c.b16 %v3818, %v3815
        %v4152 = vpack.c.b16 %v3819, %v3816
        %v4153 = vpack.c.b16 %v3820, %v3817
        %v4154 = vpack.c.b16 %v3824, %v3821
        %v4155 = vpack.c.b16 %v3825, %v3822
        %v4156 = vpack.c.b16 %v3826, %v3823
        %v4157 = vpack.c.b16 %v3830, %v3827
        %v4158 = vpack.c.b16 %v3831, %v3828
        %v4159 = vpack.c.b16 %v3832, %v3829
        %v4160 = vpack.c.b16 %v3836, %v3833
        %v4161 = vpack.c.b16 %v3837, %v3834
        %v4162 = vpack.c.b16 %v3838, %v3835
        %v4163 = vpack.c.b16 %v3842, %v3839
        %v4164 = vpack.c.b16 %v3843, %v3840
        %v4165 = vpack.c.b16 %v3844, %v3841
        %v4166 = vpack.c.b16 %v3848, %v3845
        %v4167 = vpack.c.b16 %v3849, %v3846
        %v4168 = vpack.c.b16 %v3850, %v3847
        %v4169 = vpack.c.b16 %v3854, %v3851
        %v4170 = vpack.c.b16 %v3855, %v3852
        %v4171 = vpack.c.b16 %v3856, %v3853
        %v4172 = vpack.c.b16 %v3860, %v3857
        %v4173 = vpack.c.b16 %v3861, %v3858
        %v4174 = vpack.c.b16 %v3862, %v3859
        %v4175 = vpack.c.b16 %v3866, %v3863
        %v4176 = vpack.c.b16 %v3867, %v3864
        %v4177 = vpack.c.b16 %v3868, %v3865
        %v4178 = vpack.c.b16 %v3872, %v3869
        %v4179 = vpack.c.b16 %v3873, %v3870
        %v4180 = vpack.c.b16 %v3874, %v3871
        %v4181 = vpack.c.b16 %v3878, %v3875
        %v4182 = vpack.c.b16 %v3879, %v3876
        %v4183 = vpack.c.b16 %v3880, %v3877
        %v4184 = vpack.c.b16 %v3884, %v3881
        %v4185 = vpack.c.b16 %v3885, %v3882
        %v4186 = vpack.c.b16 %v3886, %v3883
        %v4187 = vpack.c.b16 %v3890, %v3887
        %v4188 = vpack.c.b16 %v3891, %v3888
        %v4189 = vpack.c.b16 %v3892, %v3889
        %v4190 = vpack.c.b16 %v3896, %v3893
        %v4191 = vpack.c.b16 %v3897, %v3894
        %v4192 = vpack.c.b16 %v3898, %v3895
        %v4193 = vpack.c.b16 %v3902, %v3899
        %v4194 = vpack.c.b16 %v3903, %v3900
        %v4195 = vpack.c.b16 %v3904, %v3901
        %v4196 = vpack.c.b16 %v3908, %v3905
        %v4197 = vpack.c.b16 %v3909, %v3906
        %v4198 = vpack.c.b16 %v3910, %v3907
        %4487 = vmatpush.bf16.msra.mxu0 %v3932
        %4488 = vmatpush.bf16.msra.mxu0 %v3929
        %4489 = vmatpush.bf16.msra.mxu0 %v3926
        %4490 = vmatpush.bf16.msra.mxu0 %v3923
        %4491 = vmatpush.bf16.msra.mxu0 %v3920
        %4492 = vmatpush.bf16.msra.mxu0 %v3917
        %4493 = vmatpush.bf16.msra.mxu0 %v3914
        %4494 = vmatpush.bf16.msra.mxu0 %v3911
        %4495 = vmatmul.bf16.gmra.mxu0 %v2547
        %v4496 = vpop.f32.mrf.mxu0
        %v4497 = vadd.f32 %v2945, %v4496
        %v4498 = vpop.f32.mrf.mxu0
        %4499 = vdwg.mxu0
        %4500 = vmatpush.bf16.msra.mxu0 %v3956
        %4501 = vmatpush.bf16.msra.mxu0 %v3953
        %4502 = vmatpush.bf16.msra.mxu0 %v3950
        %4503 = vmatpush.bf16.msra.mxu0 %v3947
        %4504 = vmatpush.bf16.msra.mxu0 %v3944
        %4505 = vmatpush.bf16.msra.mxu0 %v3941
        %4506 = vmatpush.bf16.msra.mxu0 %v3938
        %4507 = vmatpush.bf16.msra.mxu0 %v3935
        %4508 = vmatmul.bf16.gmra.mxu0 %v2548
        %v4509 = vpop.f32.mrf.mxu0
        %v4510 = vadd.f32 %v4497, %v4509
        %v4511 = vpop.f32.mrf.mxu0
        %4512 = vdwg.mxu0
        %4513 = vmatpush.bf16.msra.mxu0 %v3980
        %4514 = vmatpush.bf16.msra.mxu0 %v3977
        %4515 = vmatpush.bf16.msra.mxu0 %v3974
        %4516 = vmatpush.bf16.msra.mxu0 %v3971
        %4517 = vmatpush.bf16.msra.mxu0 %v3968
        %4518 = vmatpush.bf16.msra.mxu0 %v3965
        %4519 = vmatpush.bf16.msra.mxu0 %v3962
        %4520 = vmatpush.bf16.msra.mxu0 %v3959
        %4521 = vmatmul.bf16.gmra.mxu0 %v2549
        %v4522 = vpop.f32.mrf.mxu0
        %v4523 = vadd.f32 %v4510, %v4522
        %v4524 = vpop.f32.mrf.mxu0
        %4525 = vdwg.mxu0
        %4526 = vmatpush.bf16.msra.mxu0 %v4004
        %4527 = vmatpush.bf16.msra.mxu0 %v4001
        %4528 = vmatpush.bf16.msra.mxu0 %v3998
        %4529 = vmatpush.bf16.msra.mxu0 %v3995
        %4530 = vmatpush.bf16.msra.mxu0 %v3992
        %4531 = vmatpush.bf16.msra.mxu0 %v3989
        %4532 = vmatpush.bf16.msra.mxu0 %v3986
        %4533 = vmatpush.bf16.msra.mxu0 %v3983
        %4534 = vmatmul.bf16.gmra.mxu0 %v2550
        %v4535 = vpop.f32.mrf.mxu0
        %v4536 = vadd.f32 %v4523, %v4535
        %v4537 = vpop.f32.mrf.mxu0
        %4538 = vdwg.mxu0
        %4539 = vmatpush.bf16.msra.mxu0 %v4028
        %4540 = vmatpush.bf16.msra.mxu0 %v4025
        %4541 = vmatpush.bf16.msra.mxu0 %v4022
        %4542 = vmatpush.bf16.msra.mxu0 %v4019
        %4543 = vmatpush.bf16.msra.mxu0 %v4016
        %4544 = vmatpush.bf16.msra.mxu0 %v4013
        %4545 = vmatpush.bf16.msra.mxu0 %v4010
        %4546 = vmatpush.bf16.msra.mxu0 %v4007
        %4547 = vmatmul.bf16.gmra.mxu0 %v2551
        %v4548 = vpop.f32.mrf.mxu0
        %v4549 = vadd.f32 %v4536, %v4548
        %v4550 = vpop.f32.mrf.mxu0
        %4551 = vdwg.mxu0
        %4552 = vmatpush.bf16.msra.mxu0 %v4052
        %4553 = vmatpush.bf16.msra.mxu0 %v4049
        %4554 = vmatpush.bf16.msra.mxu0 %v4046
        %4555 = vmatpush.bf16.msra.mxu0 %v4043
        %4556 = vmatpush.bf16.msra.mxu0 %v4040
        %4557 = vmatpush.bf16.msra.mxu0 %v4037
        %4558 = vmatpush.bf16.msra.mxu0 %v4034
        %4559 = vmatpush.bf16.msra.mxu0 %v4031
        %4560 = vmatmul.bf16.gmra.mxu0 %v2552
        %v4561 = vpop.f32.mrf.mxu0
        %v4562 = vadd.f32 %v4549, %v4561
        %v4563 = vpop.f32.mrf.mxu0
        %4564 = vdwg.mxu0
        %4565 = vmatpush.bf16.msra.mxu0 %v4076
        %4566 = vmatpush.bf16.msra.mxu0 %v4073
        %4567 = vmatpush.bf16.msra.mxu0 %v4070
        %4568 = vmatpush.bf16.msra.mxu0 %v4067
        %4569 = vmatpush.bf16.msra.mxu0 %v4064
        %4570 = vmatpush.bf16.msra.mxu0 %v4061
        %4571 = vmatpush.bf16.msra.mxu0 %v4058
        %4572 = vmatpush.bf16.msra.mxu0 %v4055
        %4573 = vmatmul.bf16.gmra.mxu0 %v2553
        %v4574 = vpop.f32.mrf.mxu0
        %v4575 = vadd.f32 %v4562, %v4574
        %v4576 = vpop.f32.mrf.mxu0
        %4577 = vdwg.mxu0
        %4578 = vmatpush.bf16.msra.mxu0 %v4100
        %4579 = vmatpush.bf16.msra.mxu0 %v4097
        %4580 = vmatpush.bf16.msra.mxu0 %v4094
        %4581 = vmatpush.bf16.msra.mxu0 %v4091
        %4582 = vmatpush.bf16.msra.mxu0 %v4088
        %4583 = vmatpush.bf16.msra.mxu0 %v4085
        %4584 = vmatpush.bf16.msra.mxu0 %v4082
        %4585 = vmatpush.bf16.msra.mxu0 %v4079
        %4586 = vmatmul.bf16.gmra.mxu0 %v2554
        %v4587 = vpop.f32.mrf.mxu0
        %v4588 = vadd.f32 %v4575, %v4587
        %v4589 = vpop.f32.mrf.mxu0
        %4590 = vdwg.mxu0
        %4591 = vmatpush.bf16.msra.mxu0 %v4124
        %4592 = vmatpush.bf16.msra.mxu0 %v4121
        %4593 = vmatpush.bf16.msra.mxu0 %v4118
        %4594 = vmatpush.bf16.msra.mxu0 %v4115
        %4595 = vmatpush.bf16.msra.mxu0 %v4112
        %4596 = vmatpush.bf16.msra.mxu0 %v4109
        %4597 = vmatpush.bf16.msra.mxu0 %v4106
        %4598 = vmatpush.bf16.msra.mxu0 %v4103
        %4599 = vmatmul.bf16.gmra.mxu0 %v2555
        %v4600 = vpop.f32.mrf.mxu0
        %v4601 = vadd.f32 %v4588, %v4600
        %v4602 = vpop.f32.mrf.mxu0
        %4603 = vdwg.mxu0
        %4604 = vmatpush.bf16.msra.mxu0 %v4148
        %4605 = vmatpush.bf16.msra.mxu0 %v4145
        %4606 = vmatpush.bf16.msra.mxu0 %v4142
        %4607 = vmatpush.bf16.msra.mxu0 %v4139
        %4608 = vmatpush.bf16.msra.mxu0 %v4136
        %4609 = vmatpush.bf16.msra.mxu0 %v4133
        %4610 = vmatpush.bf16.msra.mxu0 %v4130
        %4611 = vmatpush.bf16.msra.mxu0 %v4127
        %4612 = vmatmul.bf16.gmra.mxu0 %v2556
        %v4613 = vpop.f32.mrf.mxu0
        %v4614 = vadd.f32 %v4601, %v4613
        %v4615 = vpop.f32.mrf.mxu0
        %4616 = vdwg.mxu0
        %4617 = vmatpush.bf16.msra.mxu0 %v4172
        %4618 = vmatpush.bf16.msra.mxu0 %v4169
        %4619 = vmatpush.bf16.msra.mxu0 %v4166
        %4620 = vmatpush.bf16.msra.mxu0 %v4163
        %4621 = vmatpush.bf16.msra.mxu0 %v4160
        %4622 = vmatpush.bf16.msra.mxu0 %v4157
        %4623 = vmatpush.bf16.msra.mxu0 %v4154
        %4624 = vmatpush.bf16.msra.mxu0 %v4151
        %4625 = vmatmul.bf16.gmra.mxu0 %v2557
        %v4626 = vpop.f32.mrf.mxu0
        %v4627 = vadd.f32 %v4614, %v4626
        %v4628 = vpop.f32.mrf.mxu0
        %4629 = vdwg.mxu0
        %4630 = vmatpush.bf16.msra.mxu0 %v4196
        %4631 = vmatpush.bf16.msra.mxu0 %v4193
        %4632 = vmatpush.bf16.msra.mxu0 %v4190
        %4633 = vmatpush.bf16.msra.mxu0 %v4187
        %4634 = vmatpush.bf16.msra.mxu0 %v4184
        %4635 = vmatpush.bf16.msra.mxu0 %v4181
        %4636 = vmatpush.bf16.msra.mxu0 %v4178
        %4637 = vmatpush.bf16.msra.mxu0 %v4175
        %4638 = vmatmul.bf16.gmra.mxu0 %v2558
        %v4639 = vpop.f32.mrf.mxu0
        %v4640 = vadd.f32 %v4627, %v4639
        %v4641 = vpop.f32.mrf.mxu0
        %4642 = vdwg.mxu0
        %4643 = vmatpush.bf16.msra.mxu0 %v3933
        %4644 = vmatpush.bf16.msra.mxu0 %v3930
        %4645 = vmatpush.bf16.msra.mxu0 %v3927
        %4646 = vmatpush.bf16.msra.mxu0 %v3924
        %4647 = vmatpush.bf16.msra.mxu0 %v3921
        %4648 = vmatpush.bf16.msra.mxu0 %v3918
        %4649 = vmatpush.bf16.msra.mxu0 %v3915
        %4650 = vmatpush.bf16.msra.mxu0 %v3912
        %4651 = vmatmul.bf16.gmra.mxu0 %v2547
        %v4652 = vpop.f32.mrf.mxu0
        %v4653 = vadd.f32 %v2946, %v4652
        %v4654 = vpop.f32.mrf.mxu0
        %4655 = vdwg.mxu0
        %4656 = vmatpush.bf16.msra.mxu0 %v3957
        %4657 = vmatpush.bf16.msra.mxu0 %v3954
        %4658 = vmatpush.bf16.msra.mxu0 %v3951
        %4659 = vmatpush.bf16.msra.mxu0 %v3948
        %4660 = vmatpush.bf16.msra.mxu0 %v3945
        %4661 = vmatpush.bf16.msra.mxu0 %v3942
        %4662 = vmatpush.bf16.msra.mxu0 %v3939
        %4663 = vmatpush.bf16.msra.mxu0 %v3936
        %4664 = vmatmul.bf16.gmra.mxu0 %v2548
        %v4665 = vpop.f32.mrf.mxu0
        %v4666 = vadd.f32 %v4653, %v4665
        %v4667 = vpop.f32.mrf.mxu0
        %4668 = vdwg.mxu0
        %4669 = vmatpush.bf16.msra.mxu0 %v3981
        %4670 = vmatpush.bf16.msra.mxu0 %v3978
        %4671 = vmatpush.bf16.msra.mxu0 %v3975
        %4672 = vmatpush.bf16.msra.mxu0 %v3972
        %4673 = vmatpush.bf16.msra.mxu0 %v3969
        %4674 = vmatpush.bf16.msra.mxu0 %v3966
        %4675 = vmatpush.bf16.msra.mxu0 %v3963
        %4676 = vmatpush.bf16.msra.mxu0 %v3960
        %4677 = vmatmul.bf16.gmra.mxu0 %v2549
        %v4678 = vpop.f32.mrf.mxu0
        %v4679 = vadd.f32 %v4666, %v4678
        %v4680 = vpop.f32.mrf.mxu0
        %4681 = vdwg.mxu0
        %4682 = vmatpush.bf16.msra.mxu0 %v4005
        %4683 = vmatpush.bf16.msra.mxu0 %v4002
        %4684 = vmatpush.bf16.msra.mxu0 %v3999
        %4685 = vmatpush.bf16.msra.mxu0 %v3996
        %4686 = vmatpush.bf16.msra.mxu0 %v3993
        %4687 = vmatpush.bf16.msra.mxu0 %v3990
        %4688 = vmatpush.bf16.msra.mxu0 %v3987
        %4689 = vmatpush.bf16.msra.mxu0 %v3984
        %4690 = vmatmul.bf16.gmra.mxu0 %v2550
        %v4691 = vpop.f32.mrf.mxu0
        %v4692 = vadd.f32 %v4679, %v4691
        %v4693 = vpop.f32.mrf.mxu0
        %4694 = vdwg.mxu0
        %4695 = vmatpush.bf16.msra.mxu0 %v4029
        %4696 = vmatpush.bf16.msra.mxu0 %v4026
        %4697 = vmatpush.bf16.msra.mxu0 %v4023
        %4698 = vmatpush.bf16.msra.mxu0 %v4020
        %4699 = vmatpush.bf16.msra.mxu0 %v4017
        %4700 = vmatpush.bf16.msra.mxu0 %v4014
        %4701 = vmatpush.bf16.msra.mxu0 %v4011
        %4702 = vmatpush.bf16.msra.mxu0 %v4008
        %4703 = vmatmul.bf16.gmra.mxu0 %v2551
        %v4704 = vpop.f32.mrf.mxu0
        %v4705 = vadd.f32 %v4692, %v4704
        %v4706 = vpop.f32.mrf.mxu0
        %4707 = vdwg.mxu0
        %4708 = vmatpush.bf16.msra.mxu0 %v4053
        %4709 = vmatpush.bf16.msra.mxu0 %v4050
        %4710 = vmatpush.bf16.msra.mxu0 %v4047
        %4711 = vmatpush.bf16.msra.mxu0 %v4044
        %4712 = vmatpush.bf16.msra.mxu0 %v4041
        %4713 = vmatpush.bf16.msra.mxu0 %v4038
        %4714 = vmatpush.bf16.msra.mxu0 %v4035
        %4715 = vmatpush.bf16.msra.mxu0 %v4032
        %4716 = vmatmul.bf16.gmra.mxu0 %v2552
        %v4717 = vpop.f32.mrf.mxu0
        %v4718 = vadd.f32 %v4705, %v4717
        %v4719 = vpop.f32.mrf.mxu0
        %4720 = vdwg.mxu0
        %4721 = vmatpush.bf16.msra.mxu0 %v4077
        %4722 = vmatpush.bf16.msra.mxu0 %v4074
        %4723 = vmatpush.bf16.msra.mxu0 %v4071
        %4724 = vmatpush.bf16.msra.mxu0 %v4068
        %4725 = vmatpush.bf16.msra.mxu0 %v4065
        %4726 = vmatpush.bf16.msra.mxu0 %v4062
        %4727 = vmatpush.bf16.msra.mxu0 %v4059
        %4728 = vmatpush.bf16.msra.mxu0 %v4056
        %4729 = vmatmul.bf16.gmra.mxu0 %v2553
        %v4730 = vpop.f32.mrf.mxu0
        %v4731 = vadd.f32 %v4718, %v4730
        %v4732 = vpop.f32.mrf.mxu0
        %4733 = vdwg.mxu0
        %4734 = vmatpush.bf16.msra.mxu0 %v4101
        %4735 = vmatpush.bf16.msra.mxu0 %v4098
        %4736 = vmatpush.bf16.msra.mxu0 %v4095
        %4737 = vmatpush.bf16.msra.mxu0 %v4092
        %4738 = vmatpush.bf16.msra.mxu0 %v4089
        %4739 = vmatpush.bf16.msra.mxu0 %v4086
        %4740 = vmatpush.bf16.msra.mxu0 %v4083
        %4741 = vmatpush.bf16.msra.mxu0 %v4080
        %4742 = vmatmul.bf16.gmra.mxu0 %v2554
        %v4743 = vpop.f32.mrf.mxu0
        %v4744 = vadd.f32 %v4731, %v4743
        %v4745 = vpop.f32.mrf.mxu0
        %4746 = vdwg.mxu0
        %4747 = vmatpush.bf16.msra.mxu0 %v4125
        %4748 = vmatpush.bf16.msra.mxu0 %v4122
        %4749 = vmatpush.bf16.msra.mxu0 %v4119
        %4750 = vmatpush.bf16.msra.mxu0 %v4116
        %4751 = vmatpush.bf16.msra.mxu0 %v4113
        %4752 = vmatpush.bf16.msra.mxu0 %v4110
        %4753 = vmatpush.bf16.msra.mxu0 %v4107
        %4754 = vmatpush.bf16.msra.mxu0 %v4104
        %4755 = vmatmul.bf16.gmra.mxu0 %v2555
        %v4756 = vpop.f32.mrf.mxu0
        %v4757 = vadd.f32 %v4744, %v4756
        %v4758 = vpop.f32.mrf.mxu0
        %4759 = vdwg.mxu0
        %4760 = vmatpush.bf16.msra.mxu0 %v4149
        %4761 = vmatpush.bf16.msra.mxu0 %v4146
        %4762 = vmatpush.bf16.msra.mxu0 %v4143
        %4763 = vmatpush.bf16.msra.mxu0 %v4140
        %4764 = vmatpush.bf16.msra.mxu0 %v4137
        %4765 = vmatpush.bf16.msra.mxu0 %v4134
        %4766 = vmatpush.bf16.msra.mxu0 %v4131
        %4767 = vmatpush.bf16.msra.mxu0 %v4128
        %4768 = vmatmul.bf16.gmra.mxu0 %v2556
        %v4769 = vpop.f32.mrf.mxu0
        %v4770 = vadd.f32 %v4757, %v4769
        %v4771 = vpop.f32.mrf.mxu0
        %4772 = vdwg.mxu0
        %4773 = vmatpush.bf16.msra.mxu0 %v4173
        %4774 = vmatpush.bf16.msra.mxu0 %v4170
        %4775 = vmatpush.bf16.msra.mxu0 %v4167
        %4776 = vmatpush.bf16.msra.mxu0 %v4164
        %4777 = vmatpush.bf16.msra.mxu0 %v4161
        %4778 = vmatpush.bf16.msra.mxu0 %v4158
        %4779 = vmatpush.bf16.msra.mxu0 %v4155
        %4780 = vmatpush.bf16.msra.mxu0 %v4152
        %4781 = vmatmul.bf16.gmra.mxu0 %v2557
        %v4782 = vpop.f32.mrf.mxu0
        %v4783 = vadd.f32 %v4770, %v4782
        %v4784 = vpop.f32.mrf.mxu0
        %4785 = vdwg.mxu0
        %4786 = vmatpush.bf16.msra.mxu0 %v4197
        %4787 = vmatpush.bf16.msra.mxu0 %v4194
        %4788 = vmatpush.bf16.msra.mxu0 %v4191
        %4789 = vmatpush.bf16.msra.mxu0 %v4188
        %4790 = vmatpush.bf16.msra.mxu0 %v4185
        %4791 = vmatpush.bf16.msra.mxu0 %v4182
        %4792 = vmatpush.bf16.msra.mxu0 %v4179
        %4793 = vmatpush.bf16.msra.mxu0 %v4176
        %4794 = vmatmul.bf16.gmra.mxu0 %v2558
        %v4795 = vpop.f32.mrf.mxu0
        %v4796 = vadd.f32 %v4783, %v4795
        %v4797 = vpop.f32.mrf.mxu0
        %4798 = vdwg.mxu0
        %4799 = vmatpush.bf16.msra.mxu0 %v3934
        %4800 = vmatpush.bf16.msra.mxu0 %v3931
        %4801 = vmatpush.bf16.msra.mxu0 %v3928
        %4802 = vmatpush.bf16.msra.mxu0 %v3925
        %4803 = vmatpush.bf16.msra.mxu0 %v3922
        %4804 = vmatpush.bf16.msra.mxu0 %v3919
        %4805 = vmatpush.bf16.msra.mxu0 %v3916
        %4806 = vmatpush.bf16.msra.mxu0 %v3913
        %4807 = vmatmul.bf16.gmra.mxu0 %v2547
        %v4808 = vpop.f32.mrf.mxu0
        %v4809 = vadd.f32 %v2947, %v4808
        %v4810 = vpop.f32.mrf.mxu0
        %4811 = vdwg.mxu0
        %4812 = vmatpush.bf16.msra.mxu0 %v3958
        %4813 = vmatpush.bf16.msra.mxu0 %v3955
        %4814 = vmatpush.bf16.msra.mxu0 %v3952
        %4815 = vmatpush.bf16.msra.mxu0 %v3949
        %4816 = vmatpush.bf16.msra.mxu0 %v3946
        %4817 = vmatpush.bf16.msra.mxu0 %v3943
        %4818 = vmatpush.bf16.msra.mxu0 %v3940
        %4819 = vmatpush.bf16.msra.mxu0 %v3937
        %4820 = vmatmul.bf16.gmra.mxu0 %v2548
        %v4821 = vpop.f32.mrf.mxu0
        %v4822 = vadd.f32 %v4809, %v4821
        %v4823 = vpop.f32.mrf.mxu0
        %4824 = vdwg.mxu0
        %4825 = vmatpush.bf16.msra.mxu0 %v3982
        %4826 = vmatpush.bf16.msra.mxu0 %v3979
        %4827 = vmatpush.bf16.msra.mxu0 %v3976
        %4828 = vmatpush.bf16.msra.mxu0 %v3973
        %4829 = vmatpush.bf16.msra.mxu0 %v3970
        %4830 = vmatpush.bf16.msra.mxu0 %v3967
        %4831 = vmatpush.bf16.msra.mxu0 %v3964
        %4832 = vmatpush.bf16.msra.mxu0 %v3961
        %4833 = vmatmul.bf16.gmra.mxu0 %v2549
        %v4834 = vpop.f32.mrf.mxu0
        %v4835 = vadd.f32 %v4822, %v4834
        %v4836 = vpop.f32.mrf.mxu0
        %4837 = vdwg.mxu0
        %4838 = vmatpush.bf16.msra.mxu0 %v4006
        %4839 = vmatpush.bf16.msra.mxu0 %v4003
        %4840 = vmatpush.bf16.msra.mxu0 %v4000
        %4841 = vmatpush.bf16.msra.mxu0 %v3997
        %4842 = vmatpush.bf16.msra.mxu0 %v3994
        %4843 = vmatpush.bf16.msra.mxu0 %v3991
        %4844 = vmatpush.bf16.msra.mxu0 %v3988
        %4845 = vmatpush.bf16.msra.mxu0 %v3985
        %4846 = vmatmul.bf16.gmra.mxu0 %v2550
        %v4847 = vpop.f32.mrf.mxu0
        %v4848 = vadd.f32 %v4835, %v4847
        %v4849 = vpop.f32.mrf.mxu0
        %4850 = vdwg.mxu0
        %4851 = vmatpush.bf16.msra.mxu0 %v4030
        %4852 = vmatpush.bf16.msra.mxu0 %v4027
        %4853 = vmatpush.bf16.msra.mxu0 %v4024
        %4854 = vmatpush.bf16.msra.mxu0 %v4021
        %4855 = vmatpush.bf16.msra.mxu0 %v4018
        %4856 = vmatpush.bf16.msra.mxu0 %v4015
        %4857 = vmatpush.bf16.msra.mxu0 %v4012
        %4858 = vmatpush.bf16.msra.mxu0 %v4009
        %4859 = vmatmul.bf16.gmra.mxu0 %v2551
        %v4860 = vpop.f32.mrf.mxu0
        %v4861 = vadd.f32 %v4848, %v4860
        %v4862 = vpop.f32.mrf.mxu0
        %4863 = vdwg.mxu0
        %4864 = vmatpush.bf16.msra.mxu0 %v4054
        %4865 = vmatpush.bf16.msra.mxu0 %v4051
        %4866 = vmatpush.bf16.msra.mxu0 %v4048
        %4867 = vmatpush.bf16.msra.mxu0 %v4045
        %4868 = vmatpush.bf16.msra.mxu0 %v4042
        %4869 = vmatpush.bf16.msra.mxu0 %v4039
        %4870 = vmatpush.bf16.msra.mxu0 %v4036
        %4871 = vmatpush.bf16.msra.mxu0 %v4033
        %4872 = vmatmul.bf16.gmra.mxu0 %v2552
        %v4873 = vpop.f32.mrf.mxu0
        %v4874 = vadd.f32 %v4861, %v4873
        %v4875 = vpop.f32.mrf.mxu0
        %4876 = vdwg.mxu0
        %4877 = vmatpush.bf16.msra.mxu0 %v4078
        %4878 = vmatpush.bf16.msra.mxu0 %v4075
        %4879 = vmatpush.bf16.msra.mxu0 %v4072
        %4880 = vmatpush.bf16.msra.mxu0 %v4069
        %4881 = vmatpush.bf16.msra.mxu0 %v4066
        %4882 = vmatpush.bf16.msra.mxu0 %v4063
        %4883 = vmatpush.bf16.msra.mxu0 %v4060
        %4884 = vmatpush.bf16.msra.mxu0 %v4057
        %4885 = vmatmul.bf16.gmra.mxu0 %v2553
        %v4886 = vpop.f32.mrf.mxu0
        %v4887 = vadd.f32 %v4874, %v4886
        %v4888 = vpop.f32.mrf.mxu0
        %4889 = vdwg.mxu0
        %4890 = vmatpush.bf16.msra.mxu0 %v4102
        %4891 = vmatpush.bf16.msra.mxu0 %v4099
        %4892 = vmatpush.bf16.msra.mxu0 %v4096
        %4893 = vmatpush.bf16.msra.mxu0 %v4093
        %4894 = vmatpush.bf16.msra.mxu0 %v4090
        %4895 = vmatpush.bf16.msra.mxu0 %v4087
        %4896 = vmatpush.bf16.msra.mxu0 %v4084
        %4897 = vmatpush.bf16.msra.mxu0 %v4081
        %4898 = vmatmul.bf16.gmra.mxu0 %v2554
        %v4899 = vpop.f32.mrf.mxu0
        %v4900 = vadd.f32 %v4887, %v4899
        %v4901 = vpop.f32.mrf.mxu0
        %4902 = vdwg.mxu0
        %4903 = vmatpush.bf16.msra.mxu0 %v4126
        %4904 = vmatpush.bf16.msra.mxu0 %v4123
        %4905 = vmatpush.bf16.msra.mxu0 %v4120
        %4906 = vmatpush.bf16.msra.mxu0 %v4117
        %4907 = vmatpush.bf16.msra.mxu0 %v4114
        %4908 = vmatpush.bf16.msra.mxu0 %v4111
        %4909 = vmatpush.bf16.msra.mxu0 %v4108
        %4910 = vmatpush.bf16.msra.mxu0 %v4105
        %4911 = vmatmul.bf16.gmra.mxu0 %v2555
        %v4912 = vpop.f32.mrf.mxu0
        %v4913 = vadd.f32 %v4900, %v4912
        %v4914 = vpop.f32.mrf.mxu0
        %4915 = vdwg.mxu0
        %4916 = vmatpush.bf16.msra.mxu0 %v4150
        %4917 = vmatpush.bf16.msra.mxu0 %v4147
        %4918 = vmatpush.bf16.msra.mxu0 %v4144
        %4919 = vmatpush.bf16.msra.mxu0 %v4141
        %4920 = vmatpush.bf16.msra.mxu0 %v4138
        %4921 = vmatpush.bf16.msra.mxu0 %v4135
        %4922 = vmatpush.bf16.msra.mxu0 %v4132
        %4923 = vmatpush.bf16.msra.mxu0 %v4129
        %4924 = vmatmul.bf16.gmra.mxu0 %v2556
        %v4925 = vpop.f32.mrf.mxu0
        %v4926 = vadd.f32 %v4913, %v4925
        %v4927 = vpop.f32.mrf.mxu0
        %4928 = vdwg.mxu0
        %4929 = vmatpush.bf16.msra.mxu0 %v4174
        %4930 = vmatpush.bf16.msra.mxu0 %v4171
        %4931 = vmatpush.bf16.msra.mxu0 %v4168
        %4932 = vmatpush.bf16.msra.mxu0 %v4165
        %4933 = vmatpush.bf16.msra.mxu0 %v4162
        %4934 = vmatpush.bf16.msra.mxu0 %v4159
        %4935 = vmatpush.bf16.msra.mxu0 %v4156
        %4936 = vmatpush.bf16.msra.mxu0 %v4153
        %4937 = vmatmul.bf16.gmra.mxu0 %v2557
        %v4938 = vpop.f32.mrf.mxu0
        %v4939 = vadd.f32 %v4926, %v4938
        %v4940 = vpop.f32.mrf.mxu0
        %4941 = vdwg.mxu0
        %4942 = vmatpush.bf16.msra.mxu0 %v4198
        %4943 = vmatpush.bf16.msra.mxu0 %v4195
        %4944 = vmatpush.bf16.msra.mxu0 %v4192
        %4945 = vmatpush.bf16.msra.mxu0 %v4189
        %4946 = vmatpush.bf16.msra.mxu0 %v4186
        %4947 = vmatpush.bf16.msra.mxu0 %v4183
        %4948 = vmatpush.bf16.msra.mxu0 %v4180
        %4949 = vmatpush.bf16.msra.mxu0 %v4177
        %4950 = vmatmul.bf16.gmra.mxu0 %v2558
        %v4951 = vpop.f32.mrf.mxu0
        %v4952 = vadd.f32 %v4939, %v4951
        %v4953 = vpop.f32.mrf.mxu0
        %4954 = vdwg.mxu0
        %4955 = vst [vmem:[%s304] sm:$0xff] %v4640
        %4956 = vst [vmem:[%s304 + $0x8] sm:$0xff] %v4796
        %4957 = vst [vmem:[%s304 + $0x10] sm:$0xff] %v4952
        %s4958 = sand.u32 %s142, 1
        %s4959 = scalar_lea.sflag [#allocation4], %s4958
        %s4960 = sand.u32 %s142, 1
        %s4961 = smul.addr %s4960, 24
        %s4962 = scalar_lea.vmem [#allocation11], %s4961
        // Predicated region
        $region61: #{tpu_custom_call.1} parent=39 // pred_check
          %p4963 = pneg %p152
        $region62: #{tpu_custom_call.1} parent=39 // pred_check_branch
          %4965 = sbr.rel (%p4963) target = $region64
        $region63: #{tpu_custom_call.1} parent=39 // pred_region
          %4967 = vsyncadd %s4959, 0
          %s4968 = smul.addr %s24, 3
          %s4969 = smul.addr %s4968, 8
          %s4970 = scalar_lea.hbm %s5, %s4969
          %s4972 = sshll.u32 %s4962, 4
          %s4973 = int_to_ptr.vmem [resolvable:$true] %s4972
          %s4974 = sshll.u32 %s4970, 4
          %s4975 = int_to_ptr.hbm [resolvable:$true] %s4974
          %4977 = dma.vmem_to_hbm [thread:$0]  %s4973, 384, %s4975, %s4959
        $region64: #{tpu_custom_call.1} parent=39 // pred_fallthru
          _
      $region40: #{tpu_custom_call.1} parent=5 // pred_fallthru
        _
      %p4978 = scmp.le.s32.totalorder 2, %s19
      // Predicated region
      $region65: #{tpu_custom_call.1} parent=5 // pred_check
        %p4979 = pneg %p4978
      $region66: #{tpu_custom_call.1} parent=5 // pred_check_branch
        %4981 = sbr.rel (%p4979) target = $region68
      $region67: #{tpu_custom_call.1} parent=5 // pred_region
        %s4982 = ssub.s32 %s19, 2
        // Predicated region
        $region69: #{tpu_custom_call.1} parent=67 // pred_check
          %p4983 = pneg %p158
        $region70: #{tpu_custom_call.1} parent=67 // pred_check_branch
          %4985 = sbr.rel (%p4983) target = $region72
        $region71: #{tpu_custom_call.1} parent=67 // pred_region
          %s4986 = sand.u32 %s143, 1
          %s4987 = scalar_lea.sflag [#allocation4], %s4986
          %s4988 = sand.u32 %s143, 1
          %s4989 = smul.addr %s4988, 24
          %s4990 = scalar_lea.vmem [#allocation11], %s4989
          %4992 = dma.done %s4987, 384
        $region72: #{tpu_custom_call.1} parent=67 // pred_fallthru
          _
      $region68: #{tpu_custom_call.1} parent=5 // pred_fallthru
        _
    $region6: #{tpu_custom_call.1} parent=1 // loop_footer
      %s23 = sadd.s32 1, %s19
    $region7: #{tpu_custom_call.1} parent=1 // loop_footer_branch
      %18 = sbr.rel target = $region3
    $region8: #{tpu_custom_call.1} parent=1 // loop_exit
      _
    %4993 = vsyncpa [#allocation3], 1
    %s4994 = scalar_lea.sflag [#allocation3], 1
    %4995 = vsyncpa %s4994, 1
    %4996 = vsyncpa [#allocation6], 1
    %4997 = vsyncpa [#allocation9], 1
    %4998 = vsyncpa [#allocation4], 1
    %s4999 = scalar_lea.sflag [#allocation4], 1
    %5000 = vsyncpa %s4999, 1

</llo_original>
